<compile_context>
chip_gen: v6e
topology: v6e:2x2x1
jax: 0.10.0
libtpu: 0.0.40
codegen_flags: <defaults>
</compile_context>

<pallas_src>
import functools

import jax
import jax.numpy as jnp
from jax import lax
from jax.experimental import pallas as pl
from jax.experimental.pallas import tpu as pltpu


# ----------------------------- helpers --------------------------------------


def _softplus(x):
    # numerically stable softplus = log(1 + exp(x))
    return jnp.maximum(x, 0.0) + jnp.log1p(jnp.exp(-jnp.abs(x)))


def _sigmoid(x):
    return 1.0 / (1.0 + jnp.exp(-x))


def _dot(a, w):
    return jnp.dot(a, w, preferred_element_type=jnp.float32)


def make_param_specs(x_dim, h_dim, h2_dim, z_dim, z2_dim, n_layers):
    """Ordered list of (name, shape) for every (fused) parameter of forward()."""
    specs = []

    def lin(name, din, dout):
        specs.append((name + "_W", (din, dout)))
        specs.append((name + "_b", (1, dout)))

    lin("phix_l0", x_dim, h_dim)
    lin("phix_l1", h_dim, h_dim)
    # fused h_{t-1} consumers: [enc_l0_h | prior | enc1_l0_h | dec1_l0_h | dec_l0_h]
    specs.append(("hcat_W", (h_dim, 3 * h_dim + 2 * h2_dim)))
    lin("enc_l0x", h_dim, h_dim)        # phi_x part of enc_l0 (+ enc_l0 bias)
    lin("enc_l1", h_dim, h_dim)
    lin("enc_ms", h_dim, 2 * z_dim)     # fused [enc_mean | enc_std]
    specs.append(("prior_b", (1, h_dim)))
    lin("prior_ms", h_dim, 2 * z_dim)   # fused [prior_mean | prior_std]
    lin("phiz", z_dim, h_dim)
    lin("prior2", h_dim, h_dim)
    lin("prior_ms2", h_dim, 2 * z2_dim)
    lin("enc1_l0z", h_dim, h2_dim)      # phi_z part of enc1_l0 (+ bias)
    lin("enc1_l1", h2_dim, h2_dim)
    lin("enc_ms1", h2_dim, 2 * z2_dim)
    lin("phiz1", z2_dim, h2_dim)
    lin("dec1_l0z", h2_dim, h2_dim)     # phi_z_t1 part of dec1_l0 (+ bias)
    lin("dec1_l1", h2_dim, h2_dim)
    lin("dec_l0d", h_dim, h_dim)        # dec_t1 part of dec_l0 (+ bias)
    lin("dec_l1", h_dim, h_dim)
    lin("dec_mean", h_dim, x_dim)       # logits head; sigmoid applied lazily
    # GRU (bias=False); per-gate weights to avoid lane-offset gate slicing.
    for layer in range(n_layers):
        din = 2 * h_dim if layer == 0 else h_dim
        for gate in ("r", "z", "n"):
            specs.append((f"gru{layer}_Wih_{gate}", (din, h_dim)))
            specs.append((f"gru{layer}_Whh_{gate}", (h_dim, h_dim)))
    return specs


def init_params(key, specs, stdv=0.1):
    params = {}
    for i, (name, shape) in enumerate(specs):
        k = jax.random.fold_in(key, i)
        params[name] = (stdv * jax.random.normal(k, shape)).astype(jnp.float32)
    return params


# ----------------------------- kernel ---------------------------------------


def vrnn_kernel(dims, n_layers, t_chunk, names, *refs):
    x_dim, h_dim, h2_dim, z_dim, z2_dim = dims
    x_ref, eps_ref, eps1_ref = refs[:3]
    n_p = len(names)
    p = dict(zip(names, refs[3:3 + n_p]))
    kld_ref, nll_ref, pred_ref = refs[3 + n_p:6 + n_p]
    h_ref = refs[6 + n_p]

    c = pl.program_id(0)

    @pl.when(c == 0)
    def _():
        h_ref[...] = jnp.zeros_like(h_ref)
        kld_ref[...] = jnp.zeros_like(kld_ref)
        nll_ref[...] = jnp.zeros_like(nll_ref)

    def lin(v, name):
        return _dot(v, p[name + "_W"][...]) + p[name + "_b"][...]

    def kld_gauss(m1, s1, m2, s2):
        # 0.5 * sum( log(s2^2/s1^2) + (s1^2 + (m1-m2)^2)/s2^2 - 1 )
        v1 = s1 * s1
        v2 = s2 * s2
        el = (jnp.log(v2 * pl.reciprocal(v1, approx=True))
              + (v1 + (m1 - m2) ** 2) * pl.reciprocal(v2, approx=True) - 1.0)
        return 0.5 * jnp.sum(el)

    nb = x_ref.shape[1]          # batch
    h1 = h_dim

    def step(i, carry):
        kld_acc, nll_acc, pred_acc, h_list = carry
        x_t = x_ref[i]           # (B, x_dim)
        eps_t = eps_ref[i]       # (B, z_dim)
        eps1_t = eps1_ref[i]     # (B, z2_dim)
        h_last = h_list[n_layers - 1]

        # phi_x
        phi_x_t = jnp.maximum(lin(x_t, "phix_l0"), 0.0)
        phi_x_t = jnp.maximum(lin(phi_x_t, "phix_l1"), 0.0)

        # one lane-dense matmul for every consumer of h_{t-1}
        H = _dot(h_last, p["hcat_W"][...])            # (B, 5*h)
        h_enc = H[:, 0 * h1:1 * h1]
        h_prior = H[:, 1 * h1:2 * h1]
        h_enc1 = H[:, 2 * h1:3 * h1]
        h_dec1 = H[:, 3 * h1:4 * h1]
        h_dec = H[:, 4 * h1:5 * h1]

        # encoder level 1
        enc_t = jnp.maximum(
            _dot(phi_x_t, p["enc_l0x_W"][...]) + h_enc + p["enc_l0x_b"][...], 0.0)
        enc_t = jnp.maximum(lin(enc_t, "enc_l1"), 0.0)
        enc_ms = lin(enc_t, "enc_ms")
        enc_mean_t = enc_ms[:, :z_dim]
        enc_std_t = _softplus(enc_ms[:, z_dim:])

        # prior level 1
        prior_t = jnp.maximum(h_prior + p["prior_b"][...], 0.0)
        prior_ms = lin(prior_t, "prior_ms")
        prior_mean_t = prior_ms[:, :z_dim]
        prior_std_t = _softplus(prior_ms[:, z_dim:])

        # reparameterized sample z_t
        z_t = eps_t * enc_std_t + enc_mean_t
        phi_z_t = jnp.maximum(lin(z_t, "phiz"), 0.0)

        # prior level 2
        prior_t2 = jnp.maximum(lin(phi_z_t, "prior2"), 0.0)
        prior_ms2 = lin(prior_t2, "prior_ms2")
        prior_mean_t2 = prior_ms2[:, :z2_dim]
        prior_std_t2 = _softplus(prior_ms2[:, z2_dim:])

        # encoder level 2
        enc_t1 = jnp.maximum(
            _dot(phi_z_t, p["enc1_l0z_W"][...]) + h_enc1 + p["enc1_l0z_b"][...], 0.0)
        enc_t1 = jnp.maximum(lin(enc_t1, "enc1_l1"), 0.0)
        enc_ms1 = lin(enc_t1, "enc_ms1")
        enc_mean_t1 = enc_ms1[:, :z2_dim]
        enc_std_t1 = _softplus(enc_ms1[:, z2_dim:])

        # reparameterized sample z_t1
        z_t1 = eps1_t * enc_std_t1 + enc_mean_t1
        phi_z_t1 = jnp.maximum(lin(z_t1, "phiz1"), 0.0)

        # decoders (logits head, no sigmoid here)
        dec_t1 = jnp.maximum(
            _dot(phi_z_t1, p["dec1_l0z_W"][...]) + h_dec1 + p["dec1_l0z_b"][...], 0.0)
        dec_t1 = jnp.maximum(lin(dec_t1, "dec1_l1"), 0.0)
        dec_t = jnp.maximum(
            _dot(dec_t1, p["dec_l0d_W"][...]) + h_dec + p["dec_l0d_b"][...], 0.0)
        dec_t = jnp.maximum(lin(dec_t, "dec_l1"), 0.0)
        dec_logits = lin(dec_t, "dec_mean")           # (B, x_dim), pre-sigmoid

        # GRU update (nn.GRU, bias=False); input = cat([phi_x_t, phi_z_t1], 1)
        new_h = []
        layer_in = None
        for layer in range(n_layers):
            h_l = h_list[layer]

            def gi(gate, _layer=layer, _lin=layer_in):
                w = p[f"gru{_layer}_Wih_{gate}"][...]
                if _layer == 0:
                    return _dot(phi_x_t, w[:h_dim]) + _dot(phi_z_t1, w[h_dim:])
                return _dot(_lin, w)

            def gh(gate, _layer=layer, _hl=h_l):
                return _dot(_hl, p[f"gru{_layer}_Whh_{gate}"][...])

            r = _sigmoid(gi("r") + gh("r"))
            zg = _sigmoid(gi("z") + gh("z"))
            ng = jnp.tanh(gi("n") + r * gh("n"))
            h_new = (1.0 - zg) * ng + zg * h_l
            new_h.append(h_new)
            layer_in = h_new

        # losses
        kld_t = (kld_gauss(enc_mean_t1, enc_std_t1, prior_mean_t2, prior_std_t2)
                 + kld_gauss(enc_mean_t, enc_std_t, prior_mean_t, prior_std_t))
        # Bernoulli NLL from logits: sum(softplus(a) - x * a)
        nll_t = jnp.sum(_softplus(dec_logits) - x_t * dec_logits)

        # pred row for this step: sigmoid on the last batch row only;
        # scatter into the (Tc, x_dim) chunk accumulator with an iota mask
        # (avoids per-step dynamic sublane stores).
        row = _sigmoid(dec_logits[nb - 1:nb, :])                 # (1, x_dim)
        sel = lax.broadcasted_iota(jnp.int32, (t_chunk, 1), 0) == i
        pred_acc = pred_acc + jnp.where(sel, row, 0.0)

        return kld_acc + kld_t, nll_acc + nll_t, pred_acc, tuple(new_h)

    h_init = tuple(h_ref[l] for l in range(n_layers))
    init = (jnp.zeros((1, 1), jnp.float32),
            jnp.zeros((1, 1), jnp.float32),
            jnp.zeros((t_chunk, x_dim), jnp.float32),
            h_init)
    kld_c, nll_c, pred_c, h_fin = lax.fori_loop(0, t_chunk, step, init)

    # single writeback per chunk
    for l in range(n_layers):
        h_ref[l] = h_fin[l]
    kld_ref[...] = kld_ref[...] + kld_c
    nll_ref[...] = nll_ref[...] + nll_c
    pred_ref[...] = pred_c


# ----------------------------- wrapper --------------------------------------


def vrnn_forward(x, eps, eps1, params, specs, dims, n_layers, t_chunk=8):
    x_dim, h_dim, h2_dim, z_dim, z2_dim = dims
    T, B, _ = x.shape
    assert T % t_chunk == 0, "T must be a multiple of the time chunk"
    assert t_chunk % 8 == 0 or t_chunk == T, "pred block needs sublane-aligned Tc"
    n_chunks = T // t_chunk

    names = tuple(name for name, _ in specs)
    param_list = [params[n] for n in names]

    kernel = functools.partial(vrnn_kernel, dims, n_layers, t_chunk, names)

    def const_idx(nd):
        return lambda c: (0,) * nd

    in_specs = [
        pl.BlockSpec((t_chunk, B, x_dim), lambda c: (c, 0, 0)),
        pl.BlockSpec((t_chunk, B, z_dim), lambda c: (c, 0, 0)),
        pl.BlockSpec((t_chunk, B, z2_dim), lambda c: (c, 0, 0)),
    ]
    for n in names:
        shp = params[n].shape
        in_specs.append(pl.BlockSpec(shp, const_idx(len(shp))))

    out_specs = [
        pl.BlockSpec((1, 1), lambda c: (0, 0)),            # kld accumulator
        pl.BlockSpec((1, 1), lambda c: (0, 0)),            # nll accumulator
        pl.BlockSpec((t_chunk, x_dim), lambda c: (c, 0)),  # pred, one chunk per step
    ]
    out_shape = [
        jax.ShapeDtypeStruct((1, 1), jnp.float32),
        jax.ShapeDtypeStruct((1, 1), jnp.float32),
        jax.ShapeDtypeStruct((T, x_dim), jnp.float32),
    ]

    kld, nll, pred = pl.pallas_call(
        kernel,
        out_shape=out_shape,
        grid_spec=pltpu.PrefetchScalarGridSpec(
            num_scalar_prefetch=0,
            grid=(n_chunks,),
            in_specs=in_specs,
            out_specs=out_specs,
            scratch_shapes=[pltpu.VMEM((n_layers, B, h_dim), jnp.float32)],
        ),
        compiler_params=pltpu.CompilerParams(
            dimension_semantics=("arbitrary",)),
    )(x, eps, eps1, *param_list)

    return kld[0, 0] / T, nll[0, 0] / T, pred


# ----------------------------- main -----------------------------------------

if __name__ == "__main__":
    # small shapes consistent with the module's forward pass
    x_dim, h_dim, h2_dim, z_dim, z2_dim = 16, 32, 32, 8, 8
    n_layers = 1
    T, B = 16, 2
    t_chunk = 8
    # forward() concatenates h_dim-sized h[-1] into h2-sized layers → requires:
    assert h_dim == h2_dim

    dims = (x_dim, h_dim, h2_dim, z_dim, z2_dim)
    specs = make_param_specs(*dims, n_layers)

    key = jax.random.PRNGKey(0)
    kp, kx, ke, ke1 = jax.random.split(key, 4)

    params = init_params(kp, specs, stdv=0.1)

    # input in (0,1) so the Bernoulli NLL is well-defined the usual way
    x = jax.random.uniform(kx, (T, B, x_dim), dtype=jnp.float32)
    # deterministic stand-ins for torch.FloatTensor(...).normal_() per step
    eps = jax.random.normal(ke, (T, B, z_dim), dtype=jnp.float32)
    eps1 = jax.random.normal(ke1, (T, B, z2_dim), dtype=jnp.float32)

    kld_loss, nll_loss, pred = vrnn_forward(
        x, eps, eps1, params, specs, dims, n_layers, t_chunk=t_chunk)
    jax.block_until_ready((kld_loss, nll_loss, pred))

    assert pred.shape == (T, x_dim)
    assert bool(jnp.isfinite(kld_loss)) and bool(jnp.isfinite(nll_loss))
    print("KERNEL_OK")
</pallas_src>

<mosaic_0001>
module attributes {stable_mosaic.version = 11 : i64} {
  func.func @vrnn_kernel(%arg0: i32, %arg1: memref<8x2x16xf32, #tpu.memory_space<vmem>>, %arg2: memref<8x2x8xf32, #tpu.memory_space<vmem>>, %arg3: memref<8x2x8xf32, #tpu.memory_space<vmem>>, %arg4: memref<16x32xf32, #tpu.memory_space<vmem>>, %arg5: memref<1x32xf32, #tpu.memory_space<vmem>>, %arg6: memref<32x32xf32, #tpu.memory_space<vmem>>, %arg7: memref<1x32xf32, #tpu.memory_space<vmem>>, %arg8: memref<32x160xf32, #tpu.memory_space<vmem>>, %arg9: memref<32x32xf32, #tpu.memory_space<vmem>>, %arg10: memref<1x32xf32, #tpu.memory_space<vmem>>, %arg11: memref<32x32xf32, #tpu.memory_space<vmem>>, %arg12: memref<1x32xf32, #tpu.memory_space<vmem>>, %arg13: memref<32x16xf32, #tpu.memory_space<vmem>>, %arg14: memref<1x16xf32, #tpu.memory_space<vmem>>, %arg15: memref<1x32xf32, #tpu.memory_space<vmem>>, %arg16: memref<32x16xf32, #tpu.memory_space<vmem>>, %arg17: memref<1x16xf32, #tpu.memory_space<vmem>>, %arg18: memref<8x32xf32, #tpu.memory_space<vmem>>, %arg19: memref<1x32xf32, #tpu.memory_space<vmem>>, %arg20: memref<32x32xf32, #tpu.memory_space<vmem>>, %arg21: memref<1x32xf32, #tpu.memory_space<vmem>>, %arg22: memref<32x16xf32, #tpu.memory_space<vmem>>, %arg23: memref<1x16xf32, #tpu.memory_space<vmem>>, %arg24: memref<32x32xf32, #tpu.memory_space<vmem>>, %arg25: memref<1x32xf32, #tpu.memory_space<vmem>>, %arg26: memref<32x32xf32, #tpu.memory_space<vmem>>, %arg27: memref<1x32xf32, #tpu.memory_space<vmem>>, %arg28: memref<32x16xf32, #tpu.memory_space<vmem>>, %arg29: memref<1x16xf32, #tpu.memory_space<vmem>>, %arg30: memref<8x32xf32, #tpu.memory_space<vmem>>, %arg31: memref<1x32xf32, #tpu.memory_space<vmem>>, %arg32: memref<32x32xf32, #tpu.memory_space<vmem>>, %arg33: memref<1x32xf32, #tpu.memory_space<vmem>>, %arg34: memref<32x32xf32, #tpu.memory_space<vmem>>, %arg35: memref<1x32xf32, #tpu.memory_space<vmem>>, %arg36: memref<32x32xf32, #tpu.memory_space<vmem>>, %arg37: memref<1x32xf32, #tpu.memory_space<vmem>>, %arg38: memref<32x32xf32, #tpu.memory_space<vmem>>, %arg39: memref<1x32xf32, #tpu.memory_space<vmem>>, %arg40: memref<32x16xf32, #tpu.memory_space<vmem>>, %arg41: memref<1x16xf32, #tpu.memory_space<vmem>>, %arg42: memref<64x32xf32, #tpu.memory_space<vmem>>, %arg43: memref<32x32xf32, #tpu.memory_space<vmem>>, %arg44: memref<64x32xf32, #tpu.memory_space<vmem>>, %arg45: memref<32x32xf32, #tpu.memory_space<vmem>>, %arg46: memref<64x32xf32, #tpu.memory_space<vmem>>, %arg47: memref<32x32xf32, #tpu.memory_space<vmem>>, %arg48: memref<1x1xf32, #tpu.memory_space<vmem>>, %arg49: memref<1x1xf32, #tpu.memory_space<vmem>>, %arg50: memref<8x16xf32, #tpu.memory_space<vmem>>, %arg51: memref<1x2x32xf32, #tpu.memory_space<vmem>>) attributes {dimension_semantics = [#tpu.dimension_semantics<arbitrary>], iteration_bounds = array<i64: 2>, scalar_prefetch = 0 : i64, scratch_operands = 1 : i64, tpu.core_type = #tpu.core_type<tc>, window_params = [{transform_indices = @transform_0, window_bounds = array<i64: 8, 2, 16>}, {transform_indices = @transform_1, window_bounds = array<i64: 8, 2, 8>}, {transform_indices = @transform_2, window_bounds = array<i64: 8, 2, 8>}, {pipeline_mode = #tpu.pipeline_mode<synchronous>, transform_indices = @transform_3, window_bounds = array<i64: 16, 32>}, {pipeline_mode = #tpu.pipeline_mode<synchronous>, transform_indices = @transform_4, window_bounds = array<i64: 1, 32>}, {pipeline_mode = #tpu.pipeline_mode<synchronous>, transform_indices = @transform_5, window_bounds = array<i64: 32, 32>}, {pipeline_mode = #tpu.pipeline_mode<synchronous>, transform_indices = @transform_6, window_bounds = array<i64: 1, 32>}, {pipeline_mode = #tpu.pipeline_mode<synchronous>, transform_indices = @transform_7, window_bounds = array<i64: 32, 160>}, {pipeline_mode = #tpu.pipeline_mode<synchronous>, transform_indices = @transform_8, window_bounds = array<i64: 32, 32>}, {pipeline_mode = #tpu.pipeline_mode<synchronous>, transform_indices = @transform_9, window_bounds = array<i64: 1, 32>}, {pipeline_mode = #tpu.pipeline_mode<synchronous>, transform_indices = @transform_10, window_bounds = array<i64: 32, 32>}, {pipeline_mode = #tpu.pipeline_mode<synchronous>, transform_indices = @transform_11, window_bounds = array<i64: 1, 32>}, {pipeline_mode = #tpu.pipeline_mode<synchronous>, transform_indices = @transform_12, window_bounds = array<i64: 32, 16>}, {pipeline_mode = #tpu.pipeline_mode<synchronous>, transform_indices = @transform_13, window_bounds = array<i64: 1, 16>}, {pipeline_mode = #tpu.pipeline_mode<synchronous>, transform_indices = @transform_14, window_bounds = array<i64: 1, 32>}, {pipeline_mode = #tpu.pipeline_mode<synchronous>, transform_indices = @transform_15, window_bounds = array<i64: 32, 16>}, {pipeline_mode = #tpu.pipeline_mode<synchronous>, transform_indices = @transform_16, window_bounds = array<i64: 1, 16>}, {pipeline_mode = #tpu.pipeline_mode<synchronous>, transform_indices = @transform_17, window_bounds = array<i64: 8, 32>}, {pipeline_mode = #tpu.pipeline_mode<synchronous>, transform_indices = @transform_18, window_bounds = array<i64: 1, 32>}, {pipeline_mode = #tpu.pipeline_mode<synchronous>, transform_indices = @transform_19, window_bounds = array<i64: 32, 32>}, {pipeline_mode = #tpu.pipeline_mode<synchronous>, transform_indices = @transform_20, window_bounds = array<i64: 1, 32>}, {pipeline_mode = #tpu.pipeline_mode<synchronous>, transform_indices = @transform_21, window_bounds = array<i64: 32, 16>}, {pipeline_mode = #tpu.pipeline_mode<synchronous>, transform_indices = @transform_22, window_bounds = array<i64: 1, 16>}, {pipeline_mode = #tpu.pipeline_mode<synchronous>, transform_indices = @transform_23, window_bounds = array<i64: 32, 32>}, {pipeline_mode = #tpu.pipeline_mode<synchronous>, transform_indices = @transform_24, window_bounds = array<i64: 1, 32>}, {pipeline_mode = #tpu.pipeline_mode<synchronous>, transform_indices = @transform_25, window_bounds = array<i64: 32, 32>}, {pipeline_mode = #tpu.pipeline_mode<synchronous>, transform_indices = @transform_26, window_bounds = array<i64: 1, 32>}, {pipeline_mode = #tpu.pipeline_mode<synchronous>, transform_indices = @transform_27, window_bounds = array<i64: 32, 16>}, {pipeline_mode = #tpu.pipeline_mode<synchronous>, transform_indices = @transform_28, window_bounds = array<i64: 1, 16>}, {pipeline_mode = #tpu.pipeline_mode<synchronous>, transform_indices = @transform_29, window_bounds = array<i64: 8, 32>}, {pipeline_mode = #tpu.pipeline_mode<synchronous>, transform_indices = @transform_30, window_bounds = array<i64: 1, 32>}, {pipeline_mode = #tpu.pipeline_mode<synchronous>, transform_indices = @transform_31, window_bounds = array<i64: 32, 32>}, {pipeline_mode = #tpu.pipeline_mode<synchronous>, transform_indices = @transform_32, window_bounds = array<i64: 1, 32>}, {pipeline_mode = #tpu.pipeline_mode<synchronous>, transform_indices = @transform_33, window_bounds = array<i64: 32, 32>}, {pipeline_mode = #tpu.pipeline_mode<synchronous>, transform_indices = @transform_34, window_bounds = array<i64: 1, 32>}, {pipeline_mode = #tpu.pipeline_mode<synchronous>, transform_indices = @transform_35, window_bounds = array<i64: 32, 32>}, {pipeline_mode = #tpu.pipeline_mode<synchronous>, transform_indices = @transform_36, window_bounds = array<i64: 1, 32>}, {pipeline_mode = #tpu.pipeline_mode<synchronous>, transform_indices = @transform_37, window_bounds = array<i64: 32, 32>}, {pipeline_mode = #tpu.pipeline_mode<synchronous>, transform_indices = @transform_38, window_bounds = array<i64: 1, 32>}, {pipeline_mode = #tpu.pipeline_mode<synchronous>, transform_indices = @transform_39, window_bounds = array<i64: 32, 16>}, {pipeline_mode = #tpu.pipeline_mode<synchronous>, transform_indices = @transform_40, window_bounds = array<i64: 1, 16>}, {pipeline_mode = #tpu.pipeline_mode<synchronous>, transform_indices = @transform_41, window_bounds = array<i64: 64, 32>}, {pipeline_mode = #tpu.pipeline_mode<synchronous>, transform_indices = @transform_42, window_bounds = array<i64: 32, 32>}, {pipeline_mode = #tpu.pipeline_mode<synchronous>, transform_indices = @transform_43, window_bounds = array<i64: 64, 32>}, {pipeline_mode = #tpu.pipeline_mode<synchronous>, transform_indices = @transform_44, window_bounds = array<i64: 32, 32>}, {pipeline_mode = #tpu.pipeline_mode<synchronous>, transform_indices = @transform_45, window_bounds = array<i64: 64, 32>}, {pipeline_mode = #tpu.pipeline_mode<synchronous>, transform_indices = @transform_46, window_bounds = array<i64: 32, 32>}, {pipeline_mode = #tpu.pipeline_mode<synchronous>, transform_indices = @transform_47, window_bounds = array<i64: 1, 1>}, {pipeline_mode = #tpu.pipeline_mode<synchronous>, transform_indices = @transform_48, window_bounds = array<i64: 1, 1>}, {transform_indices = @transform_49, window_bounds = array<i64: 8, 16>}]} {
    %c0_i32 = arith.constant 0 : i32
    %0 = arith.cmpi eq, %arg0, %c0_i32 : i32
    %1 = arith.extui %0 : i1 to i32
    %c0_i32_0 = arith.constant 0 : i32
    %2 = arith.cmpi ne, %1, %c0_i32_0 : i32
    scf.if %2 {
      %cst_20 = arith.constant 0.000000e+00 : f32
      %20 = vector.broadcast %cst_20 : f32 to vector<1x2x32xf32>
      %c0_21 = arith.constant 0 : index
      %c0_22 = arith.constant 0 : index
      %c0_23 = arith.constant 0 : index
      %21 = vector.load %arg51[%c0_21, %c0_22, %c0_23] : memref<1x2x32xf32, #tpu.memory_space<vmem>>, vector<1x2x32xf32>
      tpu.vector_store %arg51[%c0_21, %c0_22, %c0_23], %20 {strides = array<i32>} : memref<1x2x32xf32, #tpu.memory_space<vmem>>, vector<1x2x32xf32>,
      %cst_24 = arith.constant 0.000000e+00 : f32
      %22 = vector.broadcast %cst_24 : f32 to vector<1x1xf32>
      %c0_25 = arith.constant 0 : index
      %c0_26 = arith.constant 0 : index
      %23 = vector.load %arg48[%c0_25, %c0_26] : memref<1x1xf32, #tpu.memory_space<vmem>>, vector<1x1xf32>
      tpu.vector_store %arg48[%c0_25, %c0_26], %22 {strides = array<i32>} : memref<1x1xf32, #tpu.memory_space<vmem>>, vector<1x1xf32>,
      %cst_27 = arith.constant 0.000000e+00 : f32
      %24 = vector.broadcast %cst_27 : f32 to vector<1x1xf32>
      %c0_28 = arith.constant 0 : index
      %c0_29 = arith.constant 0 : index
      %25 = vector.load %arg49[%c0_28, %c0_29] : memref<1x1xf32, #tpu.memory_space<vmem>>, vector<1x1xf32>
      tpu.vector_store %arg49[%c0_28, %c0_29], %24 {strides = array<i32>} : memref<1x1xf32, #tpu.memory_space<vmem>>, vector<1x1xf32>,
    } else {
    }
    %c0 = arith.constant 0 : index
    %c0_1 = arith.constant 0 : index
    %c0_2 = arith.constant 0 : index
    %3 = vector.load %arg51[%c0, %c0_1, %c0_2] : memref<1x2x32xf32, #tpu.memory_space<vmem>>, vector<1x2x32xf32>
    %4 = vector.shape_cast %3 : vector<1x2x32xf32> to vector<2x32xf32>
    %cst = arith.constant 0.000000e+00 : f32
    %5 = vector.broadcast %cst : f32 to vector<1x1xf32>
    %cst_3 = arith.constant 0.000000e+00 : f32
    %6 = vector.broadcast %cst_3 : f32 to vector<1x1xf32>
    %cst_4 = arith.constant 0.000000e+00 : f32
    %7 = vector.broadcast %cst_4 : f32 to vector<8x16xf32>
    %c0_i32_5 = arith.constant 0 : i32
    %c8_i32 = arith.constant 8 : i32
    %8 = arith.addi %c0_i32_5, %c8_i32 : i32
    %c1_i32 = arith.constant 1 : i32
    %9:4 = scf.for %arg52 = %c0_i32_5 to %8 step %c1_i32 iter_args(%arg53 = %5, %arg54 = %6, %arg55 = %7, %arg56 = %4) -> (vector<1x1xf32>, vector<1x1xf32>, vector<8x16xf32>, vector<2x32xf32>)  : i32 {
      %20 = arith.index_cast %arg52 : i32 to index
      %c0_20 = arith.constant 0 : index
      %c0_21 = arith.constant 0 : index
      %21 = vector.load %arg1[%20, %c0_20, %c0_21] : memref<8x2x16xf32, #tpu.memory_space<vmem>>, vector<1x2x16xf32>
      %22 = vector.shape_cast %21 : vector<1x2x16xf32> to vector<2x16xf32>
      %23 = arith.index_cast %arg52 : i32 to index
      %c0_22 = arith.constant 0 : index
      %c0_23 = arith.constant 0 : index
      %24 = vector.load %arg2[%23, %c0_22, %c0_23] : memref<8x2x8xf32, #tpu.memory_space<vmem>>, vector<1x2x8xf32>
      %25 = vector.shape_cast %24 : vector<1x2x8xf32> to vector<2x8xf32>
      %26 = arith.index_cast %arg52 : i32 to index
      %c0_24 = arith.constant 0 : index
      %c0_25 = arith.constant 0 : index
      %27 = vector.load %arg3[%26, %c0_24, %c0_25] : memref<8x2x8xf32, #tpu.memory_space<vmem>>, vector<1x2x8xf32>
      %28 = vector.shape_cast %27 : vector<1x2x8xf32> to vector<2x8xf32>
      %c0_26 = arith.constant 0 : index
      %c0_27 = arith.constant 0 : index
      %29 = vector.load %arg4[%c0_26, %c0_27] : memref<16x32xf32, #tpu.memory_space<vmem>>, vector<16x32xf32>
      %cst_28 = arith.constant dense<0.000000e+00> : vector<2x32xf32>
      %30 = tpu.matmul %22, %29, %cst_28 {dimension_numbers = #tpu.dot_dimension_numbers<[1], [0], [0], [1], [0, 0, 1, 1], [], []>} : vector<2x16xf32>, vector<16x32xf32>, vector<2x32xf32> -> vector<2x32xf32>
      %c0_29 = arith.constant 0 : index
      %c0_30 = arith.constant 0 : index
      %31 = vector.load %arg5[%c0_29, %c0_30] : memref<1x32xf32, #tpu.memory_space<vmem>>, vector<1x32xf32>
      %32 = vector.broadcast %31 : vector<1x32xf32> to vector<2x32xf32>
      %33 = arith.addf %30, %32 : vector<2x32xf32>
      %cst_31 = arith.constant 0.000000e+00 : f32
      %34 = vector.broadcast %cst_31 : f32 to vector<2x32xf32>
      %35 = arith.maximumf %33, %34 : vector<2x32xf32>
      %c0_32 = arith.constant 0 : index
      %c0_33 = arith.constant 0 : index
      %36 = vector.load %arg6[%c0_32, %c0_33] : memref<32x32xf32, #tpu.memory_space<vmem>>, vector<32x32xf32>
      %cst_34 = arith.constant dense<0.000000e+00> : vector<2x32xf32>
      %37 = tpu.matmul %35, %36, %cst_34 {dimension_numbers = #tpu.dot_dimension_numbers<[1], [0], [0], [1], [0, 0, 1, 1], [], []>} : vector<2x32xf32>, vector<32x32xf32>, vector<2x32xf32> -> vector<2x32xf32>
      %c0_35 = arith.constant 0 : index
      %c0_36 = arith.constant 0 : index
      %38 = vector.load %arg7[%c0_35, %c0_36] : memref<1x32xf32, #tpu.memory_space<vmem>>, vector<1x32xf32>
      %39 = vector.broadcast %38 : vector<1x32xf32> to vector<2x32xf32>
      %40 = arith.addf %37, %39 : vector<2x32xf32>
      %cst_37 = arith.constant 0.000000e+00 : f32
      %41 = vector.broadcast %cst_37 : f32 to vector<2x32xf32>
      %42 = arith.maximumf %40, %41 : vector<2x32xf32>
      %c0_38 = arith.constant 0 : index
      %c0_39 = arith.constant 0 : index
      %43 = vector.load %arg8[%c0_38, %c0_39] : memref<32x160xf32, #tpu.memory_space<vmem>>, vector<32x160xf32>
      %cst_40 = arith.constant dense<0.000000e+00> : vector<2x160xf32>
      %44 = tpu.matmul %arg56, %43, %cst_40 {dimension_numbers = #tpu.dot_dimension_numbers<[1], [0], [0], [1], [0, 0, 1, 1], [], []>} : vector<2x32xf32>, vector<32x160xf32>, vector<2x160xf32> -> vector<2x160xf32>
      %45 = vector.extract_strided_slice %44 {offsets = [0, 0], sizes = [2, 32], strides = [1, 1]} : vector<2x160xf32> to vector<2x32xf32>
      %46 = vector.extract_strided_slice %44 {offsets = [0, 32], sizes = [2, 32], strides = [1, 1]} : vector<2x160xf32> to vector<2x32xf32>
      %47 = vector.extract_strided_slice %44 {offsets = [0, 64], sizes = [2, 32], strides = [1, 1]} : vector<2x160xf32> to vector<2x32xf32>
      %48 = vector.extract_strided_slice %44 {offsets = [0, 96], sizes = [2, 32], strides = [1, 1]} : vector<2x160xf32> to vector<2x32xf32>
      %49 = vector.extract_strided_slice %44 {offsets = [0, 128], sizes = [2, 32], strides = [1, 1]} : vector<2x160xf32> to vector<2x32xf32>
      %c0_41 = arith.constant 0 : index
      %c0_42 = arith.constant 0 : index
      %50 = vector.load %arg9[%c0_41, %c0_42] : memref<32x32xf32, #tpu.memory_space<vmem>>, vector<32x32xf32>
      %cst_43 = arith.constant dense<0.000000e+00> : vector<2x32xf32>
      %51 = tpu.matmul %42, %50, %cst_43 {dimension_numbers = #tpu.dot_dimension_numbers<[1], [0], [0], [1], [0, 0, 1, 1], [], []>} : vector<2x32xf32>, vector<32x32xf32>, vector<2x32xf32> -> vector<2x32xf32>
      %52 = arith.addf %51, %45 : vector<2x32xf32>
      %c0_44 = arith.constant 0 : index
      %c0_45 = arith.constant 0 : index
      %53 = vector.load %arg10[%c0_44, %c0_45] : memref<1x32xf32, #tpu.memory_space<vmem>>, vector<1x32xf32>
      %54 = vector.broadcast %53 : vector<1x32xf32> to vector<2x32xf32>
      %55 = arith.addf %52, %54 : vector<2x32xf32>
      %cst_46 = arith.constant 0.000000e+00 : f32
      %56 = vector.broadcast %cst_46 : f32 to vector<2x32xf32>
      %57 = arith.maximumf %55, %56 : vector<2x32xf32>
      %c0_47 = arith.constant 0 : index
      %c0_48 = arith.constant 0 : index
      %58 = vector.load %arg11[%c0_47, %c0_48] : memref<32x32xf32, #tpu.memory_space<vmem>>, vector<32x32xf32>
      %cst_49 = arith.constant dense<0.000000e+00> : vector<2x32xf32>
      %59 = tpu.matmul %57, %58, %cst_49 {dimension_numbers = #tpu.dot_dimension_numbers<[1], [0], [0], [1], [0, 0, 1, 1], [], []>} : vector<2x32xf32>, vector<32x32xf32>, vector<2x32xf32> -> vector<2x32xf32>
      %c0_50 = arith.constant 0 : index
      %c0_51 = arith.constant 0 : index
      %60 = vector.load %arg12[%c0_50, %c0_51] : memref<1x32xf32, #tpu.memory_space<vmem>>, vector<1x32xf32>
      %61 = vector.broadcast %60 : vector<1x32xf32> to vector<2x32xf32>
      %62 = arith.addf %59, %61 : vector<2x32xf32>
      %cst_52 = arith.constant 0.000000e+00 : f32
      %63 = vector.broadcast %cst_52 : f32 to vector<2x32xf32>
      %64 = arith.maximumf %62, %63 : vector<2x32xf32>
      %c0_53 = arith.constant 0 : index
      %c0_54 = arith.constant 0 : index
      %65 = vector.load %arg13[%c0_53, %c0_54] : memref<32x16xf32, #tpu.memory_space<vmem>>, vector<32x16xf32>
      %cst_55 = arith.constant dense<0.000000e+00> : vector<2x16xf32>
      %66 = tpu.matmul %64, %65, %cst_55 {dimension_numbers = #tpu.dot_dimension_numbers<[1], [0], [0], [1], [0, 0, 1, 1], [], []>} : vector<2x32xf32>, vector<32x16xf32>, vector<2x16xf32> -> vector<2x16xf32>
      %c0_56 = arith.constant 0 : index
      %c0_57 = arith.constant 0 : index
      %67 = vector.load %arg14[%c0_56, %c0_57] : memref<1x16xf32, #tpu.memory_space<vmem>>, vector<1x16xf32>
      %68 = vector.broadcast %67 : vector<1x16xf32> to vector<2x16xf32>
      %69 = arith.addf %66, %68 : vector<2x16xf32>
      %70 = vector.extract_strided_slice %69 {offsets = [0, 0], sizes = [2, 8], strides = [1, 1]} : vector<2x16xf32> to vector<2x8xf32>
      %71 = vector.extract_strided_slice %69 {offsets = [0, 8], sizes = [2, 8], strides = [1, 1]} : vector<2x16xf32> to vector<2x8xf32>
      %cst_58 = arith.constant 0.000000e+00 : f32
      %72 = vector.broadcast %cst_58 : f32 to vector<2x8xf32>
      %73 = arith.maximumf %71, %72 : vector<2x8xf32>
      %74 = math.absf %71 : vector<2x8xf32>
      %cst_59 = arith.constant 0.000000e+00 : f32
      %75 = vector.broadcast %cst_59 : f32 to vector<2x8xf32>
      %76 = arith.subf %75, %74 : vector<2x8xf32>
      %77 = math.exp %76 : vector<2x8xf32>
      %78 = math.log1p %77 : vector<2x8xf32>
      %79 = arith.addf %73, %78 : vector<2x8xf32>
      %c0_60 = arith.constant 0 : index
      %c0_61 = arith.constant 0 : index
      %80 = vector.load %arg15[%c0_60, %c0_61] : memref<1x32xf32, #tpu.memory_space<vmem>>, vector<1x32xf32>
      %81 = vector.broadcast %80 : vector<1x32xf32> to vector<2x32xf32>
      %82 = arith.addf %46, %81 : vector<2x32xf32>
      %cst_62 = arith.constant 0.000000e+00 : f32
      %83 = vector.broadcast %cst_62 : f32 to vector<2x32xf32>
      %84 = arith.maximumf %82, %83 : vector<2x32xf32>
      %c0_63 = arith.constant 0 : index
      %c0_64 = arith.constant 0 : index
      %85 = vector.load %arg16[%c0_63, %c0_64] : memref<32x16xf32, #tpu.memory_space<vmem>>, vector<32x16xf32>
      %cst_65 = arith.constant dense<0.000000e+00> : vector<2x16xf32>
      %86 = tpu.matmul %84, %85, %cst_65 {dimension_numbers = #tpu.dot_dimension_numbers<[1], [0], [0], [1], [0, 0, 1, 1], [], []>} : vector<2x32xf32>, vector<32x16xf32>, vector<2x16xf32> -> vector<2x16xf32>
      %c0_66 = arith.constant 0 : index
      %c0_67 = arith.constant 0 : index
      %87 = vector.load %arg17[%c0_66, %c0_67] : memref<1x16xf32, #tpu.memory_space<vmem>>, vector<1x16xf32>
      %88 = vector.broadcast %87 : vector<1x16xf32> to vector<2x16xf32>
      %89 = arith.addf %86, %88 : vector<2x16xf32>
      %90 = vector.extract_strided_slice %89 {offsets = [0, 0], sizes = [2, 8], strides = [1, 1]} : vector<2x16xf32> to vector<2x8xf32>
      %91 = vector.extract_strided_slice %89 {offsets = [0, 8], sizes = [2, 8], strides = [1, 1]} : vector<2x16xf32> to vector<2x8xf32>
      %cst_68 = arith.constant 0.000000e+00 : f32
      %92 = vector.broadcast %cst_68 : f32 to vector<2x8xf32>
      %93 = arith.maximumf %91, %92 : vector<2x8xf32>
      %94 = math.absf %91 : vector<2x8xf32>
      %cst_69 = arith.constant 0.000000e+00 : f32
      %95 = vector.broadcast %cst_69 : f32 to vector<2x8xf32>
      %96 = arith.subf %95, %94 : vector<2x8xf32>
      %97 = math.exp %96 : vector<2x8xf32>
      %98 = math.log1p %97 : vector<2x8xf32>
      %99 = arith.addf %93, %98 : vector<2x8xf32>
      %100 = arith.mulf %25, %79 : vector<2x8xf32>
      %101 = arith.addf %100, %70 : vector<2x8xf32>
      %c0_70 = arith.constant 0 : index
      %c0_71 = arith.constant 0 : index
      %102 = vector.load %arg18[%c0_70, %c0_71] : memref<8x32xf32, #tpu.memory_space<vmem>>, vector<8x32xf32>
      %cst_72 = arith.constant dense<0.000000e+00> : vector<2x32xf32>
      %103 = tpu.matmul %101, %102, %cst_72 {dimension_numbers = #tpu.dot_dimension_numbers<[1], [0], [0], [1], [0, 0, 1, 1], [], []>} : vector<2x8xf32>, vector<8x32xf32>, vector<2x32xf32> -> vector<2x32xf32>
      %c0_73 = arith.constant 0 : index
      %c0_74 = arith.constant 0 : index
      %104 = vector.load %arg19[%c0_73, %c0_74] : memref<1x32xf32, #tpu.memory_space<vmem>>, vector<1x32xf32>
      %105 = vector.broadcast %104 : vector<1x32xf32> to vector<2x32xf32>
      %106 = arith.addf %103, %105 : vector<2x32xf32>
      %cst_75 = arith.constant 0.000000e+00 : f32
      %107 = vector.broadcast %cst_75 : f32 to vector<2x32xf32>
      %108 = arith.maximumf %106, %107 : vector<2x32xf32>
      %c0_76 = arith.constant 0 : index
      %c0_77 = arith.constant 0 : index
      %109 = vector.load %arg20[%c0_76, %c0_77] : memref<32x32xf32, #tpu.memory_space<vmem>>, vector<32x32xf32>
      %cst_78 = arith.constant dense<0.000000e+00> : vector<2x32xf32>
      %110 = tpu.matmul %108, %109, %cst_78 {dimension_numbers = #tpu.dot_dimension_numbers<[1], [0], [0], [1], [0, 0, 1, 1], [], []>} : vector<2x32xf32>, vector<32x32xf32>, vector<2x32xf32> -> vector<2x32xf32>
      %c0_79 = arith.constant 0 : index
      %c0_80 = arith.constant 0 : index
      %111 = vector.load %arg21[%c0_79, %c0_80] : memref<1x32xf32, #tpu.memory_space<vmem>>, vector<1x32xf32>
      %112 = vector.broadcast %111 : vector<1x32xf32> to vector<2x32xf32>
      %113 = arith.addf %110, %112 : vector<2x32xf32>
      %cst_81 = arith.constant 0.000000e+00 : f32
      %114 = vector.broadcast %cst_81 : f32 to vector<2x32xf32>
      %115 = arith.maximumf %113, %114 : vector<2x32xf32>
      %c0_82 = arith.constant 0 : index
      %c0_83 = arith.constant 0 : index
      %116 = vector.load %arg22[%c0_82, %c0_83] : memref<32x16xf32, #tpu.memory_space<vmem>>, vector<32x16xf32>
      %cst_84 = arith.constant dense<0.000000e+00> : vector<2x16xf32>
      %117 = tpu.matmul %115, %116, %cst_84 {dimension_numbers = #tpu.dot_dimension_numbers<[1], [0], [0], [1], [0, 0, 1, 1], [], []>} : vector<2x32xf32>, vector<32x16xf32>, vector<2x16xf32> -> vector<2x16xf32>
      %c0_85 = arith.constant 0 : index
      %c0_86 = arith.constant 0 : index
      %118 = vector.load %arg23[%c0_85, %c0_86] : memref<1x16xf32, #tpu.memory_space<vmem>>, vector<1x16xf32>
      %119 = vector.broadcast %118 : vector<1x16xf32> to vector<2x16xf32>
      %120 = arith.addf %117, %119 : vector<2x16xf32>
      %121 = vector.extract_strided_slice %120 {offsets = [0, 0], sizes = [2, 8], strides = [1, 1]} : vector<2x16xf32> to vector<2x8xf32>
      %122 = vector.extract_strided_slice %120 {offsets = [0, 8], sizes = [2, 8], strides = [1, 1]} : vector<2x16xf32> to vector<2x8xf32>
      %cst_87 = arith.constant 0.000000e+00 : f32
      %123 = vector.broadcast %cst_87 : f32 to vector<2x8xf32>
      %124 = arith.maximumf %122, %123 : vector<2x8xf32>
      %125 = math.absf %122 : vector<2x8xf32>
      %cst_88 = arith.constant 0.000000e+00 : f32
      %126 = vector.broadcast %cst_88 : f32 to vector<2x8xf32>
      %127 = arith.subf %126, %125 : vector<2x8xf32>
      %128 = math.exp %127 : vector<2x8xf32>
      %129 = math.log1p %128 : vector<2x8xf32>
      %130 = arith.addf %124, %129 : vector<2x8xf32>
      %c0_89 = arith.constant 0 : index
      %c0_90 = arith.constant 0 : index
      %131 = vector.load %arg24[%c0_89, %c0_90] : memref<32x32xf32, #tpu.memory_space<vmem>>, vector<32x32xf32>
      %cst_91 = arith.constant dense<0.000000e+00> : vector<2x32xf32>
      %132 = tpu.matmul %108, %131, %cst_91 {dimension_numbers = #tpu.dot_dimension_numbers<[1], [0], [0], [1], [0, 0, 1, 1], [], []>} : vector<2x32xf32>, vector<32x32xf32>, vector<2x32xf32> -> vector<2x32xf32>
      %133 = arith.addf %132, %47 : vector<2x32xf32>
      %c0_92 = arith.constant 0 : index
      %c0_93 = arith.constant 0 : index
      %134 = vector.load %arg25[%c0_92, %c0_93] : memref<1x32xf32, #tpu.memory_space<vmem>>, vector<1x32xf32>
      %135 = vector.broadcast %134 : vector<1x32xf32> to vector<2x32xf32>
      %136 = arith.addf %133, %135 : vector<2x32xf32>
      %cst_94 = arith.constant 0.000000e+00 : f32
      %137 = vector.broadcast %cst_94 : f32 to vector<2x32xf32>
      %138 = arith.maximumf %136, %137 : vector<2x32xf32>
      %c0_95 = arith.constant 0 : index
      %c0_96 = arith.constant 0 : index
      %139 = vector.load %arg26[%c0_95, %c0_96] : memref<32x32xf32, #tpu.memory_space<vmem>>, vector<32x32xf32>
      %cst_97 = arith.constant dense<0.000000e+00> : vector<2x32xf32>
      %140 = tpu.matmul %138, %139, %cst_97 {dimension_numbers = #tpu.dot_dimension_numbers<[1], [0], [0], [1], [0, 0, 1, 1], [], []>} : vector<2x32xf32>, vector<32x32xf32>, vector<2x32xf32> -> vector<2x32xf32>
      %c0_98 = arith.constant 0 : index
      %c0_99 = arith.constant 0 : index
      %141 = vector.load %arg27[%c0_98, %c0_99] : memref<1x32xf32, #tpu.memory_space<vmem>>, vector<1x32xf32>
      %142 = vector.broadcast %141 : vector<1x32xf32> to vector<2x32xf32>
      %143 = arith.addf %140, %142 : vector<2x32xf32>
      %cst_100 = arith.constant 0.000000e+00 : f32
      %144 = vector.broadcast %cst_100 : f32 to vector<2x32xf32>
      %145 = arith.maximumf %143, %144 : vector<2x32xf32>
      %c0_101 = arith.constant 0 : index
      %c0_102 = arith.constant 0 : index
      %146 = vector.load %arg28[%c0_101, %c0_102] : memref<32x16xf32, #tpu.memory_space<vmem>>, vector<32x16xf32>
      %cst_103 = arith.constant dense<0.000000e+00> : vector<2x16xf32>
      %147 = tpu.matmul %145, %146, %cst_103 {dimension_numbers = #tpu.dot_dimension_numbers<[1], [0], [0], [1], [0, 0, 1, 1], [], []>} : vector<2x32xf32>, vector<32x16xf32>, vector<2x16xf32> -> vector<2x16xf32>
      %c0_104 = arith.constant 0 : index
      %c0_105 = arith.constant 0 : index
      %148 = vector.load %arg29[%c0_104, %c0_105] : memref<1x16xf32, #tpu.memory_space<vmem>>, vector<1x16xf32>
      %149 = vector.broadcast %148 : vector<1x16xf32> to vector<2x16xf32>
      %150 = arith.addf %147, %149 : vector<2x16xf32>
      %151 = vector.extract_strided_slice %150 {offsets = [0, 0], sizes = [2, 8], strides = [1, 1]} : vector<2x16xf32> to vector<2x8xf32>
      %152 = vector.extract_strided_slice %150 {offsets = [0, 8], sizes = [2, 8], strides = [1, 1]} : vector<2x16xf32> to vector<2x8xf32>
      %cst_106 = arith.constant 0.000000e+00 : f32
      %153 = vector.broadcast %cst_106 : f32 to vector<2x8xf32>
      %154 = arith.maximumf %152, %153 : vector<2x8xf32>
      %155 = math.absf %152 : vector<2x8xf32>
      %cst_107 = arith.constant 0.000000e+00 : f32
      %156 = vector.broadcast %cst_107 : f32 to vector<2x8xf32>
      %157 = arith.subf %156, %155 : vector<2x8xf32>
      %158 = math.exp %157 : vector<2x8xf32>
      %159 = math.log1p %158 : vector<2x8xf32>
      %160 = arith.addf %154, %159 : vector<2x8xf32>
      %161 = arith.mulf %28, %160 : vector<2x8xf32>
      %162 = arith.addf %161, %151 : vector<2x8xf32>
      %c0_108 = arith.constant 0 : index
      %c0_109 = arith.constant 0 : index
      %163 = vector.load %arg30[%c0_108, %c0_109] : memref<8x32xf32, #tpu.memory_space<vmem>>, vector<8x32xf32>
      %cst_110 = arith.constant dense<0.000000e+00> : vector<2x32xf32>
      %164 = tpu.matmul %162, %163, %cst_110 {dimension_numbers = #tpu.dot_dimension_numbers<[1], [0], [0], [1], [0, 0, 1, 1], [], []>} : vector<2x8xf32>, vector<8x32xf32>, vector<2x32xf32> -> vector<2x32xf32>
      %c0_111 = arith.constant 0 : index
      %c0_112 = arith.constant 0 : index
      %165 = vector.load %arg31[%c0_111, %c0_112] : memref<1x32xf32, #tpu.memory_space<vmem>>, vector<1x32xf32>
      %166 = vector.broadcast %165 : vector<1x32xf32> to vector<2x32xf32>
      %167 = arith.addf %164, %166 : vector<2x32xf32>
      %cst_113 = arith.constant 0.000000e+00 : f32
      %168 = vector.broadcast %cst_113 : f32 to vector<2x32xf32>
      %169 = arith.maximumf %167, %168 : vector<2x32xf32>
      %c0_114 = arith.constant 0 : index
      %c0_115 = arith.constant 0 : index
      %170 = vector.load %arg32[%c0_114, %c0_115] : memref<32x32xf32, #tpu.memory_space<vmem>>, vector<32x32xf32>
      %cst_116 = arith.constant dense<0.000000e+00> : vector<2x32xf32>
      %171 = tpu.matmul %169, %170, %cst_116 {dimension_numbers = #tpu.dot_dimension_numbers<[1], [0], [0], [1], [0, 0, 1, 1], [], []>} : vector<2x32xf32>, vector<32x32xf32>, vector<2x32xf32> -> vector<2x32xf32>
      %172 = arith.addf %171, %48 : vector<2x32xf32>
      %c0_117 = arith.constant 0 : index
      %c0_118 = arith.constant 0 : index
      %173 = vector.load %arg33[%c0_117, %c0_118] : memref<1x32xf32, #tpu.memory_space<vmem>>, vector<1x32xf32>
      %174 = vector.broadcast %173 : vector<1x32xf32> to vector<2x32xf32>
      %175 = arith.addf %172, %174 : vector<2x32xf32>
      %cst_119 = arith.constant 0.000000e+00 : f32
      %176 = vector.broadcast %cst_119 : f32 to vector<2x32xf32>
      %177 = arith.maximumf %175, %176 : vector<2x32xf32>
      %c0_120 = arith.constant 0 : index
      %c0_121 = arith.constant 0 : index
      %178 = vector.load %arg34[%c0_120, %c0_121] : memref<32x32xf32, #tpu.memory_space<vmem>>, vector<32x32xf32>
      %cst_122 = arith.constant dense<0.000000e+00> : vector<2x32xf32>
      %179 = tpu.matmul %177, %178, %cst_122 {dimension_numbers = #tpu.dot_dimension_numbers<[1], [0], [0], [1], [0, 0, 1, 1], [], []>} : vector<2x32xf32>, vector<32x32xf32>, vector<2x32xf32> -> vector<2x32xf32>
      %c0_123 = arith.constant 0 : index
      %c0_124 = arith.constant 0 : index
      %180 = vector.load %arg35[%c0_123, %c0_124] : memref<1x32xf32, #tpu.memory_space<vmem>>, vector<1x32xf32>
      %181 = vector.broadcast %180 : vector<1x32xf32> to vector<2x32xf32>
      %182 = arith.addf %179, %181 : vector<2x32xf32>
      %cst_125 = arith.constant 0.000000e+00 : f32
      %183 = vector.broadcast %cst_125 : f32 to vector<2x32xf32>
      %184 = arith.maximumf %182, %183 : vector<2x32xf32>
      %c0_126 = arith.constant 0 : index
      %c0_127 = arith.constant 0 : index
      %185 = vector.load %arg36[%c0_126, %c0_127] : memref<32x32xf32, #tpu.memory_space<vmem>>, vector<32x32xf32>
      %cst_128 = arith.constant dense<0.000000e+00> : vector<2x32xf32>
      %186 = tpu.matmul %184, %185, %cst_128 {dimension_numbers = #tpu.dot_dimension_numbers<[1], [0], [0], [1], [0, 0, 1, 1], [], []>} : vector<2x32xf32>, vector<32x32xf32>, vector<2x32xf32> -> vector<2x32xf32>
      %187 = arith.addf %186, %49 : vector<2x32xf32>
      %c0_129 = arith.constant 0 : index
      %c0_130 = arith.constant 0 : index
      %188 = vector.load %arg37[%c0_129, %c0_130] : memref<1x32xf32, #tpu.memory_space<vmem>>, vector<1x32xf32>
      %189 = vector.broadcast %188 : vector<1x32xf32> to vector<2x32xf32>
      %190 = arith.addf %187, %189 : vector<2x32xf32>
      %cst_131 = arith.constant 0.000000e+00 : f32
      %191 = vector.broadcast %cst_131 : f32 to vector<2x32xf32>
      %192 = arith.maximumf %190, %191 : vector<2x32xf32>
      %c0_132 = arith.constant 0 : index
      %c0_133 = arith.constant 0 : index
      %193 = vector.load %arg38[%c0_132, %c0_133] : memref<32x32xf32, #tpu.memory_space<vmem>>, vector<32x32xf32>
      %cst_134 = arith.constant dense<0.000000e+00> : vector<2x32xf32>
      %194 = tpu.matmul %192, %193, %cst_134 {dimension_numbers = #tpu.dot_dimension_numbers<[1], [0], [0], [1], [0, 0, 1, 1], [], []>} : vector<2x32xf32>, vector<32x32xf32>, vector<2x32xf32> -> vector<2x32xf32>
      %c0_135 = arith.constant 0 : index
      %c0_136 = arith.constant 0 : index
      %195 = vector.load %arg39[%c0_135, %c0_136] : memref<1x32xf32, #tpu.memory_space<vmem>>, vector<1x32xf32>
      %196 = vector.broadcast %195 : vector<1x32xf32> to vector<2x32xf32>
      %197 = arith.addf %194, %196 : vector<2x32xf32>
      %cst_137 = arith.constant 0.000000e+00 : f32
      %198 = vector.broadcast %cst_137 : f32 to vector<2x32xf32>
      %199 = arith.maximumf %197, %198 : vector<2x32xf32>
      %c0_138 = arith.constant 0 : index
      %c0_139 = arith.constant 0 : index
      %200 = vector.load %arg40[%c0_138, %c0_139] : memref<32x16xf32, #tpu.memory_space<vmem>>, vector<32x16xf32>
      %cst_140 = arith.constant dense<0.000000e+00> : vector<2x16xf32>
      %201 = tpu.matmul %199, %200, %cst_140 {dimension_numbers = #tpu.dot_dimension_numbers<[1], [0], [0], [1], [0, 0, 1, 1], [], []>} : vector<2x32xf32>, vector<32x16xf32>, vector<2x16xf32> -> vector<2x16xf32>
      %c0_141 = arith.constant 0 : index
      %c0_142 = arith.constant 0 : index
      %202 = vector.load %arg41[%c0_141, %c0_142] : memref<1x16xf32, #tpu.memory_space<vmem>>, vector<1x16xf32>
      %203 = vector.broadcast %202 : vector<1x16xf32> to vector<2x16xf32>
      %204 = arith.addf %201, %203 : vector<2x16xf32>
      %c0_143 = arith.constant 0 : index
      %c0_144 = arith.constant 0 : index
      %205 = vector.load %arg42[%c0_143, %c0_144] : memref<64x32xf32, #tpu.memory_space<vmem>>, vector<64x32xf32>
      %206 = vector.extract_strided_slice %205 {offsets = [0, 0], sizes = [32, 32], strides = [1, 1]} : vector<64x32xf32> to vector<32x32xf32>
      %cst_145 = arith.constant dense<0.000000e+00> : vector<2x32xf32>
      %207 = tpu.matmul %42, %206, %cst_145 {dimension_numbers = #tpu.dot_dimension_numbers<[1], [0], [0], [1], [0, 0, 1, 1], [], []>} : vector<2x32xf32>, vector<32x32xf32>, vector<2x32xf32> -> vector<2x32xf32>
      %208 = vector.extract_strided_slice %205 {offsets = [32, 0], sizes = [32, 32], strides = [1, 1]} : vector<64x32xf32> to vector<32x32xf32>
      %cst_146 = arith.constant dense<0.000000e+00> : vector<2x32xf32>
      %209 = tpu.matmul %169, %208, %cst_146 {dimension_numbers = #tpu.dot_dimension_numbers<[1], [0], [0], [1], [0, 0, 1, 1], [], []>} : vector<2x32xf32>, vector<32x32xf32>, vector<2x32xf32> -> vector<2x32xf32>
      %210 = arith.addf %207, %209 : vector<2x32xf32>
      %c0_147 = arith.constant 0 : index
      %c0_148 = arith.constant 0 : index
      %211 = vector.load %arg43[%c0_147, %c0_148] : memref<32x32xf32, #tpu.memory_space<vmem>>, vector<32x32xf32>
      %cst_149 = arith.constant dense<0.000000e+00> : vector<2x32xf32>
      %212 = tpu.matmul %arg56, %211, %cst_149 {dimension_numbers = #tpu.dot_dimension_numbers<[1], [0], [0], [1], [0, 0, 1, 1], [], []>} : vector<2x32xf32>, vector<32x32xf32>, vector<2x32xf32> -> vector<2x32xf32>
      %213 = arith.addf %210, %212 : vector<2x32xf32>
      %cst_150 = arith.constant 0.000000e+00 : f32
      %214 = vector.broadcast %cst_150 : f32 to vector<2x32xf32>
      %215 = arith.subf %214, %213 : vector<2x32xf32>
      %216 = math.exp %215 : vector<2x32xf32>
      %cst_151 = arith.constant 1.000000e+00 : f32
      %217 = vector.broadcast %cst_151 : f32 to vector<2x32xf32>
      %218 = arith.addf %217, %216 : vector<2x32xf32>
      %cst_152 = arith.constant 1.000000e+00 : f32
      %219 = vector.broadcast %cst_152 : f32 to vector<2x32xf32>
      %220 = arith.divf %219, %218 : vector<2x32xf32>
      %c0_153 = arith.constant 0 : index
      %c0_154 = arith.constant 0 : index
      %221 = vector.load %arg44[%c0_153, %c0_154] : memref<64x32xf32, #tpu.memory_space<vmem>>, vector<64x32xf32>
      %222 = vector.extract_strided_slice %221 {offsets = [0, 0], sizes = [32, 32], strides = [1, 1]} : vector<64x32xf32> to vector<32x32xf32>
      %cst_155 = arith.constant dense<0.000000e+00> : vector<2x32xf32>
      %223 = tpu.matmul %42, %222, %cst_155 {dimension_numbers = #tpu.dot_dimension_numbers<[1], [0], [0], [1], [0, 0, 1, 1], [], []>} : vector<2x32xf32>, vector<32x32xf32>, vector<2x32xf32> -> vector<2x32xf32>
      %224 = vector.extract_strided_slice %221 {offsets = [32, 0], sizes = [32, 32], strides = [1, 1]} : vector<64x32xf32> to vector<32x32xf32>
      %cst_156 = arith.constant dense<0.000000e+00> : vector<2x32xf32>
      %225 = tpu.matmul %169, %224, %cst_156 {dimension_numbers = #tpu.dot_dimension_numbers<[1], [0], [0], [1], [0, 0, 1, 1], [], []>} : vector<2x32xf32>, vector<32x32xf32>, vector<2x32xf32> -> vector<2x32xf32>
      %226 = arith.addf %223, %225 : vector<2x32xf32>
      %c0_157 = arith.constant 0 : index
      %c0_158 = arith.constant 0 : index
      %227 = vector.load %arg45[%c0_157, %c0_158] : memref<32x32xf32, #tpu.memory_space<vmem>>, vector<32x32xf32>
      %cst_159 = arith.constant dense<0.000000e+00> : vector<2x32xf32>
      %228 = tpu.matmul %arg56, %227, %cst_159 {dimension_numbers = #tpu.dot_dimension_numbers<[1], [0], [0], [1], [0, 0, 1, 1], [], []>} : vector<2x32xf32>, vector<32x32xf32>, vector<2x32xf32> -> vector<2x32xf32>
      %229 = arith.addf %226, %228 : vector<2x32xf32>
      %cst_160 = arith.constant 0.000000e+00 : f32
      %230 = vector.broadcast %cst_160 : f32 to vector<2x32xf32>
      %231 = arith.subf %230, %229 : vector<2x32xf32>
      %232 = math.exp %231 : vector<2x32xf32>
      %cst_161 = arith.constant 1.000000e+00 : f32
      %233 = vector.broadcast %cst_161 : f32 to vector<2x32xf32>
      %234 = arith.addf %233, %232 : vector<2x32xf32>
      %cst_162 = arith.constant 1.000000e+00 : f32
      %235 = vector.broadcast %cst_162 : f32 to vector<2x32xf32>
      %236 = arith.divf %235, %234 : vector<2x32xf32>
      %c0_163 = arith.constant 0 : index
      %c0_164 = arith.constant 0 : index
      %237 = vector.load %arg46[%c0_163, %c0_164] : memref<64x32xf32, #tpu.memory_space<vmem>>, vector<64x32xf32>
      %238 = vector.extract_strided_slice %237 {offsets = [0, 0], sizes = [32, 32], strides = [1, 1]} : vector<64x32xf32> to vector<32x32xf32>
      %cst_165 = arith.constant dense<0.000000e+00> : vector<2x32xf32>
      %239 = tpu.matmul %42, %238, %cst_165 {dimension_numbers = #tpu.dot_dimension_numbers<[1], [0], [0], [1], [0, 0, 1, 1], [], []>} : vector<2x32xf32>, vector<32x32xf32>, vector<2x32xf32> -> vector<2x32xf32>
      %240 = vector.extract_strided_slice %237 {offsets = [32, 0], sizes = [32, 32], strides = [1, 1]} : vector<64x32xf32> to vector<32x32xf32>
      %cst_166 = arith.constant dense<0.000000e+00> : vector<2x32xf32>
      %241 = tpu.matmul %169, %240, %cst_166 {dimension_numbers = #tpu.dot_dimension_numbers<[1], [0], [0], [1], [0, 0, 1, 1], [], []>} : vector<2x32xf32>, vector<32x32xf32>, vector<2x32xf32> -> vector<2x32xf32>
      %242 = arith.addf %239, %241 : vector<2x32xf32>
      %c0_167 = arith.constant 0 : index
      %c0_168 = arith.constant 0 : index
      %243 = vector.load %arg47[%c0_167, %c0_168] : memref<32x32xf32, #tpu.memory_space<vmem>>, vector<32x32xf32>
      %cst_169 = arith.constant dense<0.000000e+00> : vector<2x32xf32>
      %244 = tpu.matmul %arg56, %243, %cst_169 {dimension_numbers = #tpu.dot_dimension_numbers<[1], [0], [0], [1], [0, 0, 1, 1], [], []>} : vector<2x32xf32>, vector<32x32xf32>, vector<2x32xf32> -> vector<2x32xf32>
      %245 = arith.mulf %220, %244 : vector<2x32xf32>
      %246 = arith.addf %242, %245 : vector<2x32xf32>
      %247 = math.tanh %246 : vector<2x32xf32>
      %cst_170 = arith.constant 1.000000e+00 : f32
      %248 = vector.broadcast %cst_170 : f32 to vector<2x32xf32>
      %249 = arith.subf %248, %236 : vector<2x32xf32>
      %250 = arith.mulf %249, %247 : vector<2x32xf32>
      %251 = arith.mulf %236, %arg56 : vector<2x32xf32>
      %252 = arith.addf %250, %251 : vector<2x32xf32>
      %253 = arith.mulf %160, %160 : vector<2x8xf32>
      %254 = arith.mulf %130, %130 : vector<2x8xf32>
      %255 = tpu.reciprocal %253 {approx = true} : vector<2x8xf32> -> vector<2x8xf32>
      %256 = arith.mulf %254, %255 : vector<2x8xf32>
      %257 = math.log %256 : vector<2x8xf32>
      %258 = arith.subf %151, %121 : vector<2x8xf32>
      %259 = arith.mulf %258, %258 : vector<2x8xf32>
      %260 = arith.addf %253, %259 : vector<2x8xf32>
      %261 = tpu.reciprocal %254 {approx = true} : vector<2x8xf32> -> vector<2x8xf32>
      %262 = arith.mulf %260, %261 : vector<2x8xf32>
      %263 = arith.addf %257, %262 : vector<2x8xf32>
      %cst_171 = arith.constant 1.000000e+00 : f32
      %264 = vector.broadcast %cst_171 : f32 to vector<2x8xf32>
      %265 = arith.subf %263, %264 : vector<2x8xf32>
      %266 = vector.shape_cast %265 : vector<2x8xf32> to vector<1x2x8xf32>
      %cst_172 = arith.constant dense<0.000000e+00> : vector<1xf32>
      %267 = vector.multi_reduction <add>, %266, %cst_172 [1, 2] : vector<1x2x8xf32> to vector<1xf32>
      %268 = vector.shape_cast %267 : vector<1xf32> to vector<1x1x1xf32>
      %269 = vector.extract %268[0, 0, 0] : f32 from vector<1x1x1xf32>
      %cst_173 = arith.constant 5.000000e-01 : f32
      %270 = arith.mulf %cst_173, %269 : f32
      %271 = arith.mulf %79, %79 : vector<2x8xf32>
      %272 = arith.mulf %99, %99 : vector<2x8xf32>
      %273 = tpu.reciprocal %271 {approx = true} : vector<2x8xf32> -> vector<2x8xf32>
      %274 = arith.mulf %272, %273 : vector<2x8xf32>
      %275 = math.log %274 : vector<2x8xf32>
      %276 = arith.subf %70, %90 : vector<2x8xf32>
      %277 = arith.mulf %276, %276 : vector<2x8xf32>
      %278 = arith.addf %271, %277 : vector<2x8xf32>
      %279 = tpu.reciprocal %272 {approx = true} : vector<2x8xf32> -> vector<2x8xf32>
      %280 = arith.mulf %278, %279 : vector<2x8xf32>
      %281 = arith.addf %275, %280 : vector<2x8xf32>
      %cst_174 = arith.constant 1.000000e+00 : f32
      %282 = vector.broadcast %cst_174 : f32 to vector<2x8xf32>
      %283 = arith.subf %281, %282 : vector<2x8xf32>
      %284 = vector.shape_cast %283 : vector<2x8xf32> to vector<1x2x8xf32>
      %cst_175 = arith.constant dense<0.000000e+00> : vector<1xf32>
      %285 = vector.multi_reduction <add>, %284, %cst_175 [1, 2] : vector<1x2x8xf32> to vector<1xf32>
      %286 = vector.shape_cast %285 : vector<1xf32> to vector<1x1x1xf32>
      %287 = vector.extract %286[0, 0, 0] : f32 from vector<1x1x1xf32>
      %cst_176 = arith.constant 5.000000e-01 : f32
      %288 = arith.mulf %cst_176, %287 : f32
      %289 = arith.addf %270, %288 : f32
      %cst_177 = arith.constant 0.000000e+00 : f32
      %290 = vector.broadcast %cst_177 : f32 to vector<2x16xf32>
      %291 = arith.maximumf %204, %290 : vector<2x16xf32>
      %292 = math.absf %204 : vector<2x16xf32>
      %cst_178 = arith.constant 0.000000e+00 : f32
      %293 = vector.broadcast %cst_178 : f32 to vector<2x16xf32>
      %294 = arith.subf %293, %292 : vector<2x16xf32>
      %295 = math.exp %294 : vector<2x16xf32>
      %296 = math.log1p %295 : vector<2x16xf32>
      %297 = arith.addf %291, %296 : vector<2x16xf32>
      %298 = arith.mulf %22, %204 : vector<2x16xf32>
      %299 = arith.subf %297, %298 : vector<2x16xf32>
      %300 = vector.shape_cast %299 : vector<2x16xf32> to vector<1x2x16xf32>
      %cst_179 = arith.constant dense<0.000000e+00> : vector<1xf32>
      %301 = vector.multi_reduction <add>, %300, %cst_179 [1, 2] : vector<1x2x16xf32> to vector<1xf32>
      %302 = vector.shape_cast %301 : vector<1xf32> to vector<1x1x1xf32>
      %303 = vector.extract %302[0, 0, 0] : f32 from vector<1x1x1xf32>
      %304 = vector.extract_strided_slice %204 {offsets = [1, 0], sizes = [1, 16], strides = [1, 1]} : vector<2x16xf32> to vector<1x16xf32>
      %cst_180 = arith.constant 0.000000e+00 : f32
      %305 = vector.broadcast %cst_180 : f32 to vector<1x16xf32>
      %306 = arith.subf %305, %304 : vector<1x16xf32>
      %307 = math.exp %306 : vector<1x16xf32>
      %cst_181 = arith.constant 1.000000e+00 : f32
      %308 = vector.broadcast %cst_181 : f32 to vector<1x16xf32>
      %309 = arith.addf %308, %307 : vector<1x16xf32>
      %cst_182 = arith.constant 1.000000e+00 : f32
      %310 = vector.broadcast %cst_182 : f32 to vector<1x16xf32>
      %311 = arith.divf %310, %309 : vector<1x16xf32>
      %312 = tpu.iota {dimensions = array<i32: 0>} : vector<8x1xi32>
      %313 = vector.broadcast %arg52 : i32 to vector<8x1xi32>
      %314 = arith.cmpi eq, %312, %313 : vector<8x1xi32>
      %cst_183 = arith.constant 0.000000e+00 : f32
      %315 = vector.shape_cast %314 : vector<8x1xi1> to vector<8x1xi1>
      %316 = vector.broadcast %315 : vector<8x1xi1> to vector<8x16xi1>
      %317 = vector.shape_cast %311 : vector<1x16xf32> to vector<1x16xf32>
      %318 = vector.broadcast %317 : vector<1x16xf32> to vector<8x16xf32>
      %319 = vector.broadcast %cst_183 : f32 to vector<8x16xf32>
      %320 = arith.select %316, %318, %319 : vector<8x16xi1>, vector<8x16xf32>
      %321 = arith.addf %arg55, %320 : vector<8x16xf32>
      %322 = vector.broadcast %289 : f32 to vector<1x1xf32>
      %323 = arith.addf %arg53, %322 : vector<1x1xf32>
      %324 = vector.broadcast %303 : f32 to vector<1x1xf32>
      %325 = arith.addf %arg54, %324 : vector<1x1xf32>
      scf.yield %323, %325, %321, %252 : vector<1x1xf32>, vector<1x1xf32>, vector<8x16xf32>, vector<2x32xf32>
    }
    %c8_i32_6 = arith.constant 8 : i32
    %c0_7 = arith.constant 0 : index
    %c0_8 = arith.constant 0 : index
    %c0_9 = arith.constant 0 : index
    %10 = vector.load %arg51[%c0_7, %c0_8, %c0_9] : memref<1x2x32xf32, #tpu.memory_space<vmem>>, vector<1x2x32xf32>
    %11 = vector.shape_cast %10 : vector<1x2x32xf32> to vector<2x32xf32>
    %12 = vector.shape_cast %9#3 : vector<2x32xf32> to vector<1x2x32xf32>
    tpu.vector_store %arg51[%c0_7, %c0_8, %c0_9], %12 {strides = array<i32>} : memref<1x2x32xf32, #tpu.memory_space<vmem>>, vector<1x2x32xf32>,
    %c0_10 = arith.constant 0 : index
    %c0_11 = arith.constant 0 : index
    %13 = vector.load %arg48[%c0_10, %c0_11] : memref<1x1xf32, #tpu.memory_space<vmem>>, vector<1x1xf32>
    %14 = arith.addf %13, %9#0 : vector<1x1xf32>
    %c0_12 = arith.constant 0 : index
    %c0_13 = arith.constant 0 : index
    %15 = vector.load %arg48[%c0_12, %c0_13] : memref<1x1xf32, #tpu.memory_space<vmem>>, vector<1x1xf32>
    tpu.vector_store %arg48[%c0_12, %c0_13], %14 {strides = array<i32>} : memref<1x1xf32, #tpu.memory_space<vmem>>, vector<1x1xf32>,
    %c0_14 = arith.constant 0 : index
    %c0_15 = arith.constant 0 : index
    %16 = vector.load %arg49[%c0_14, %c0_15] : memref<1x1xf32, #tpu.memory_space<vmem>>, vector<1x1xf32>
    %17 = arith.addf %16, %9#1 : vector<1x1xf32>
    %c0_16 = arith.constant 0 : index
    %c0_17 = arith.constant 0 : index
    %18 = vector.load %arg49[%c0_16, %c0_17] : memref<1x1xf32, #tpu.memory_space<vmem>>, vector<1x1xf32>
    tpu.vector_store %arg49[%c0_16, %c0_17], %17 {strides = array<i32>} : memref<1x1xf32, #tpu.memory_space<vmem>>, vector<1x1xf32>,
    %c0_18 = arith.constant 0 : index
    %c0_19 = arith.constant 0 : index
    %19 = vector.load %arg50[%c0_18, %c0_19] : memref<8x16xf32, #tpu.memory_space<vmem>>, vector<8x16xf32>
    tpu.vector_store %arg50[%c0_18, %c0_19], %9#2 {strides = array<i32>} : memref<8x16xf32, #tpu.memory_space<vmem>>, vector<8x16xf32>,
    return
  }
  func.func @transform_0(%arg0: i32) -> (i32, i32, i32) {
    %c0_i32 = arith.constant 0 : i32
    %c0_i32_0 = arith.constant 0 : i32
    %c0_i32_1 = arith.constant 0 : i32
    return %arg0, %c0_i32, %c0_i32_0 : i32, i32, i32
  }
  func.func @transform_1(%arg0: i32) -> (i32, i32, i32) {
    %c0_i32 = arith.constant 0 : i32
    %c0_i32_0 = arith.constant 0 : i32
    %c0_i32_1 = arith.constant 0 : i32
    return %arg0, %c0_i32, %c0_i32_0 : i32, i32, i32
  }
  func.func @transform_2(%arg0: i32) -> (i32, i32, i32) {
    %c0_i32 = arith.constant 0 : i32
    %c0_i32_0 = arith.constant 0 : i32
    %c0_i32_1 = arith.constant 0 : i32
    return %arg0, %c0_i32, %c0_i32_0 : i32, i32, i32
  }
  func.func @transform_3(%arg0: i32) -> (i32, i32) {
    %c0_i32 = arith.constant 0 : i32
    %c0_i32_0 = arith.constant 0 : i32
    %c0_i32_1 = arith.constant 0 : i32
    return %c0_i32, %c0_i32_0 : i32, i32
  }
  func.func @transform_4(%arg0: i32) -> (i32, i32) {
    %c0_i32 = arith.constant 0 : i32
    %c0_i32_0 = arith.constant 0 : i32
    %c0_i32_1 = arith.constant 0 : i32
    return %c0_i32, %c0_i32_0 : i32, i32
  }
  func.func @transform_5(%arg0: i32) -> (i32, i32) {
    %c0_i32 = arith.constant 0 : i32
    %c0_i32_0 = arith.constant 0 : i32
    %c0_i32_1 = arith.constant 0 : i32
    return %c0_i32, %c0_i32_0 : i32, i32
  }
  func.func @transform_6(%arg0: i32) -> (i32, i32) {
    %c0_i32 = arith.constant 0 : i32
    %c0_i32_0 = arith.constant 0 : i32
    %c0_i32_1 = arith.constant 0 : i32
    return %c0_i32, %c0_i32_0 : i32, i32
  }
  func.func @transform_7(%arg0: i32) -> (i32, i32) {
    %c0_i32 = arith.constant 0 : i32
    %c0_i32_0 = arith.constant 0 : i32
    %c0_i32_1 = arith.constant 0 : i32
    return %c0_i32, %c0_i32_0 : i32, i32
  }
  func.func @transform_8(%arg0: i32) -> (i32, i32) {
    %c0_i32 = arith.constant 0 : i32
    %c0_i32_0 = arith.constant 0 : i32
    %c0_i32_1 = arith.constant 0 : i32
    return %c0_i32, %c0_i32_0 : i32, i32
  }
  func.func @transform_9(%arg0: i32) -> (i32, i32) {
    %c0_i32 = arith.constant 0 : i32
    %c0_i32_0 = arith.constant 0 : i32
    %c0_i32_1 = arith.constant 0 : i32
    return %c0_i32, %c0_i32_0 : i32, i32
  }
  func.func @transform_10(%arg0: i32) -> (i32, i32) {
    %c0_i32 = arith.constant 0 : i32
    %c0_i32_0 = arith.constant 0 : i32
    %c0_i32_1 = arith.constant 0 : i32
    return %c0_i32, %c0_i32_0 : i32, i32
  }
  func.func @transform_11(%arg0: i32) -> (i32, i32) {
    %c0_i32 = arith.constant 0 : i32
    %c0_i32_0 = arith.constant 0 : i32
    %c0_i32_1 = arith.constant 0 : i32
    return %c0_i32, %c0_i32_0 : i32, i32
  }
  func.func @transform_12(%arg0: i32) -> (i32, i32) {
    %c0_i32 = arith.constant 0 : i32
    %c0_i32_0 = arith.constant 0 : i32
    %c0_i32_1 = arith.constant 0 : i32
    return %c0_i32, %c0_i32_0 : i32, i32
  }
  func.func @transform_13(%arg0: i32) -> (i32, i32) {
    %c0_i32 = arith.constant 0 : i32
    %c0_i32_0 = arith.constant 0 : i32
    %c0_i32_1 = arith.constant 0 : i32
    return %c0_i32, %c0_i32_0 : i32, i32
  }
  func.func @transform_14(%arg0: i32) -> (i32, i32) {
    %c0_i32 = arith.constant 0 : i32
    %c0_i32_0 = arith.constant 0 : i32
    %c0_i32_1 = arith.constant 0 : i32
    return %c0_i32, %c0_i32_0 : i32, i32
  }
  func.func @transform_15(%arg0: i32) -> (i32, i32) {
    %c0_i32 = arith.constant 0 : i32
    %c0_i32_0 = arith.constant 0 : i32
    %c0_i32_1 = arith.constant 0 : i32
    return %c0_i32, %c0_i32_0 : i32, i32
  }
  func.func @transform_16(%arg0: i32) -> (i32, i32) {
    %c0_i32 = arith.constant 0 : i32
    %c0_i32_0 = arith.constant 0 : i32
    %c0_i32_1 = arith.constant 0 : i32
    return %c0_i32, %c0_i32_0 : i32, i32
  }
  func.func @transform_17(%arg0: i32) -> (i32, i32) {
    %c0_i32 = arith.constant 0 : i32
    %c0_i32_0 = arith.constant 0 : i32
    %c0_i32_1 = arith.constant 0 : i32
    return %c0_i32, %c0_i32_0 : i32, i32
  }
  func.func @transform_18(%arg0: i32) -> (i32, i32) {
    %c0_i32 = arith.constant 0 : i32
    %c0_i32_0 = arith.constant 0 : i32
    %c0_i32_1 = arith.constant 0 : i32
    return %c0_i32, %c0_i32_0 : i32, i32
  }
  func.func @transform_19(%arg0: i32) -> (i32, i32) {
    %c0_i32 = arith.constant 0 : i32
    %c0_i32_0 = arith.constant 0 : i32
    %c0_i32_1 = arith.constant 0 : i32
    return %c0_i32, %c0_i32_0 : i32, i32
  }
  func.func @transform_20(%arg0: i32) -> (i32, i32) {
    %c0_i32 = arith.constant 0 : i32
    %c0_i32_0 = arith.constant 0 : i32
    %c0_i32_1 = arith.constant 0 : i32
    return %c0_i32, %c0_i32_0 : i32, i32
  }
  func.func @transform_21(%arg0: i32) -> (i32, i32) {
    %c0_i32 = arith.constant 0 : i32
    %c0_i32_0 = arith.constant 0 : i32
    %c0_i32_1 = arith.constant 0 : i32
    return %c0_i32, %c0_i32_0 : i32, i32
  }
  func.func @transform_22(%arg0: i32) -> (i32, i32) {
    %c0_i32 = arith.constant 0 : i32
    %c0_i32_0 = arith.constant 0 : i32
    %c0_i32_1 = arith.constant 0 : i32
    return %c0_i32, %c0_i32_0 : i32, i32
  }
  func.func @transform_23(%arg0: i32) -> (i32, i32) {
    %c0_i32 = arith.constant 0 : i32
    %c0_i32_0 = arith.constant 0 : i32
    %c0_i32_1 = arith.constant 0 : i32
    return %c0_i32, %c0_i32_0 : i32, i32
  }
  func.func @transform_24(%arg0: i32) -> (i32, i32) {
    %c0_i32 = arith.constant 0 : i32
    %c0_i32_0 = arith.constant 0 : i32
    %c0_i32_1 = arith.constant 0 : i32
    return %c0_i32, %c0_i32_0 : i32, i32
  }
  func.func @transform_25(%arg0: i32) -> (i32, i32) {
    %c0_i32 = arith.constant 0 : i32
    %c0_i32_0 = arith.constant 0 : i32
    %c0_i32_1 = arith.constant 0 : i32
    return %c0_i32, %c0_i32_0 : i32, i32
  }
  func.func @transform_26(%arg0: i32) -> (i32, i32) {
    %c0_i32 = arith.constant 0 : i32
    %c0_i32_0 = arith.constant 0 : i32
    %c0_i32_1 = arith.constant 0 : i32
    return %c0_i32, %c0_i32_0 : i32, i32
  }
  func.func @transform_27(%arg0: i32) -> (i32, i32) {
    %c0_i32 = arith.constant 0 : i32
    %c0_i32_0 = arith.constant 0 : i32
    %c0_i32_1 = arith.constant 0 : i32
    return %c0_i32, %c0_i32_0 : i32, i32
  }
  func.func @transform_28(%arg0: i32) -> (i32, i32) {
    %c0_i32 = arith.constant 0 : i32
    %c0_i32_0 = arith.constant 0 : i32
    %c0_i32_1 = arith.constant 0 : i32
    return %c0_i32, %c0_i32_0 : i32, i32
  }
  func.func @transform_29(%arg0: i32) -> (i32, i32) {
    %c0_i32 = arith.constant 0 : i32
    %c0_i32_0 = arith.constant 0 : i32
    %c0_i32_1 = arith.constant 0 : i32
    return %c0_i32, %c0_i32_0 : i32, i32
  }
  func.func @transform_30(%arg0: i32) -> (i32, i32) {
    %c0_i32 = arith.constant 0 : i32
    %c0_i32_0 = arith.constant 0 : i32
    %c0_i32_1 = arith.constant 0 : i32
    return %c0_i32, %c0_i32_0 : i32, i32
  }
  func.func @transform_31(%arg0: i32) -> (i32, i32) {
    %c0_i32 = arith.constant 0 : i32
    %c0_i32_0 = arith.constant 0 : i32
    %c0_i32_1 = arith.constant 0 : i32
    return %c0_i32, %c0_i32_0 : i32, i32
  }
  func.func @transform_32(%arg0: i32) -> (i32, i32) {
    %c0_i32 = arith.constant 0 : i32
    %c0_i32_0 = arith.constant 0 : i32
    %c0_i32_1 = arith.constant 0 : i32
    return %c0_i32, %c0_i32_0 : i32, i32
  }
  func.func @transform_33(%arg0: i32) -> (i32, i32) {
    %c0_i32 = arith.constant 0 : i32
    %c0_i32_0 = arith.constant 0 : i32
    %c0_i32_1 = arith.constant 0 : i32
    return %c0_i32, %c0_i32_0 : i32, i32
  }
  func.func @transform_34(%arg0: i32) -> (i32, i32) {
    %c0_i32 = arith.constant 0 : i32
    %c0_i32_0 = arith.constant 0 : i32
    %c0_i32_1 = arith.constant 0 : i32
    return %c0_i32, %c0_i32_0 : i32, i32
  }
  func.func @transform_35(%arg0: i32) -> (i32, i32) {
    %c0_i32 = arith.constant 0 : i32
    %c0_i32_0 = arith.constant 0 : i32
    %c0_i32_1 = arith.constant 0 : i32
    return %c0_i32, %c0_i32_0 : i32, i32
  }
  func.func @transform_36(%arg0: i32) -> (i32, i32) {
    %c0_i32 = arith.constant 0 : i32
    %c0_i32_0 = arith.constant 0 : i32
    %c0_i32_1 = arith.constant 0 : i32
    return %c0_i32, %c0_i32_0 : i32, i32
  }
  func.func @transform_37(%arg0: i32) -> (i32, i32) {
    %c0_i32 = arith.constant 0 : i32
    %c0_i32_0 = arith.constant 0 : i32
    %c0_i32_1 = arith.constant 0 : i32
    return %c0_i32, %c0_i32_0 : i32, i32
  }
  func.func @transform_38(%arg0: i32) -> (i32, i32) {
    %c0_i32 = arith.constant 0 : i32
    %c0_i32_0 = arith.constant 0 : i32
    %c0_i32_1 = arith.constant 0 : i32
    return %c0_i32, %c0_i32_0 : i32, i32
  }
  func.func @transform_39(%arg0: i32) -> (i32, i32) {
    %c0_i32 = arith.constant 0 : i32
    %c0_i32_0 = arith.constant 0 : i32
    %c0_i32_1 = arith.constant 0 : i32
    return %c0_i32, %c0_i32_0 : i32, i32
  }
  func.func @transform_40(%arg0: i32) -> (i32, i32) {
    %c0_i32 = arith.constant 0 : i32
    %c0_i32_0 = arith.constant 0 : i32
    %c0_i32_1 = arith.constant 0 : i32
    return %c0_i32, %c0_i32_0 : i32, i32
  }
  func.func @transform_41(%arg0: i32) -> (i32, i32) {
    %c0_i32 = arith.constant 0 : i32
    %c0_i32_0 = arith.constant 0 : i32
    %c0_i32_1 = arith.constant 0 : i32
    return %c0_i32, %c0_i32_0 : i32, i32
  }
  func.func @transform_42(%arg0: i32) -> (i32, i32) {
    %c0_i32 = arith.constant 0 : i32
    %c0_i32_0 = arith.constant 0 : i32
    %c0_i32_1 = arith.constant 0 : i32
    return %c0_i32, %c0_i32_0 : i32, i32
  }
  func.func @transform_43(%arg0: i32) -> (i32, i32) {
    %c0_i32 = arith.constant 0 : i32
    %c0_i32_0 = arith.constant 0 : i32
    %c0_i32_1 = arith.constant 0 : i32
    return %c0_i32, %c0_i32_0 : i32, i32
  }
  func.func @transform_44(%arg0: i32) -> (i32, i32) {
    %c0_i32 = arith.constant 0 : i32
    %c0_i32_0 = arith.constant 0 : i32
    %c0_i32_1 = arith.constant 0 : i32
    return %c0_i32, %c0_i32_0 : i32, i32
  }
  func.func @transform_45(%arg0: i32) -> (i32, i32) {
    %c0_i32 = arith.constant 0 : i32
    %c0_i32_0 = arith.constant 0 : i32
    %c0_i32_1 = arith.constant 0 : i32
    return %c0_i32, %c0_i32_0 : i32, i32
  }
  func.func @transform_46(%arg0: i32) -> (i32, i32) {
    %c0_i32 = arith.constant 0 : i32
    %c0_i32_0 = arith.constant 0 : i32
    %c0_i32_1 = arith.constant 0 : i32
    return %c0_i32, %c0_i32_0 : i32, i32
  }
  func.func @transform_47(%arg0: i32) -> (i32, i32) {
    %c0_i32 = arith.constant 0 : i32
    %c0_i32_0 = arith.constant 0 : i32
    %c0_i32_1 = arith.constant 0 : i32
    return %c0_i32, %c0_i32_0 : i32, i32
  }
  func.func @transform_48(%arg0: i32) -> (i32, i32) {
    %c0_i32 = arith.constant 0 : i32
    %c0_i32_0 = arith.constant 0 : i32
    %c0_i32_1 = arith.constant 0 : i32
    return %c0_i32, %c0_i32_0 : i32, i32
  }
  func.func @transform_49(%arg0: i32) -> (i32, i32) {
    %c0_i32 = arith.constant 0 : i32
    %c0_i32_0 = arith.constant 0 : i32
    return %arg0, %c0_i32 : i32, i32
  }
}

</mosaic_0001>

<llo_original>
// kernel: tpu_custom_call.1
$region0: #{tpu_custom_call.1}
  #allocation0 [shape = 'u32[]', space=smem, size = 0x4, offset = 0x4, fixed_abs, tag = 'smem constant byte address 0x4 - core index']
  #allocation1 [shape = 'u32[144,128]{1,0:T(1,128)}', space=vmem, size = 0x12000, scoped, tag = 'internal scratch']
  #allocation2 [shape = 'f32[1,2,32]{2,1,0:T(2,128)}', space=vmem, size = 0x400, scoped, tag = 'scratch operand']
  %s0 = inlined_call_operand.smem [shape: u32[50], index: -1, kind: input, shape index: {}]
  %s1 = sld [smem:[%s0]]
  %s2 = scalar_lea.smem %s0, 1
  %s3 = sld [smem:[%s2]]
  %s4 = scalar_lea.smem %s0, 2
  %s5 = sld [smem:[%s4]]
  %s6 = scalar_lea.smem %s0, 3
  %s7 = sld [smem:[%s6]]
  %s8 = scalar_lea.smem %s0, 4
  %s9 = sld [smem:[%s8]]
  %s10 = scalar_lea.smem %s0, 5
  %s11 = sld [smem:[%s10]]
  %s12 = scalar_lea.smem %s0, 6
  %s13 = sld [smem:[%s12]]
  %s14 = scalar_lea.smem %s0, 7
  %s15 = sld [smem:[%s14]]
  %s16 = scalar_lea.smem %s0, 8
  %s17 = sld [smem:[%s16]]
  %s18 = scalar_lea.smem %s0, 9
  %s19 = sld [smem:[%s18]]
  %s20 = scalar_lea.smem %s0, 10
  %s21 = sld [smem:[%s20]]
  %s22 = scalar_lea.smem %s0, 11
  %s23 = sld [smem:[%s22]]
  %s24 = scalar_lea.smem %s0, 12
  %s25 = sld [smem:[%s24]]
  %s26 = scalar_lea.smem %s0, 13
  %s27 = sld [smem:[%s26]]
  %s28 = scalar_lea.smem %s0, 14
  %s29 = sld [smem:[%s28]]
  %s30 = scalar_lea.smem %s0, 15
  %s31 = sld [smem:[%s30]]
  %s32 = scalar_lea.smem %s0, 16
  %s33 = sld [smem:[%s32]]
  %s34 = scalar_lea.smem %s0, 17
  %s35 = sld [smem:[%s34]]
  %s36 = scalar_lea.smem %s0, 18
  %s37 = sld [smem:[%s36]]
  %s38 = scalar_lea.smem %s0, 19
  %s39 = sld [smem:[%s38]]
  %s40 = scalar_lea.smem %s0, 20
  %s41 = sld [smem:[%s40]]
  %s42 = scalar_lea.smem %s0, 21
  %s43 = sld [smem:[%s42]]
  %s44 = scalar_lea.smem %s0, 22
  %s45 = sld [smem:[%s44]]
  %s46 = scalar_lea.smem %s0, 23
  %s47 = sld [smem:[%s46]]
  %s48 = scalar_lea.smem %s0, 24
  %s49 = sld [smem:[%s48]]
  %s50 = scalar_lea.smem %s0, 25
  %s51 = sld [smem:[%s50]]
  %s52 = scalar_lea.smem %s0, 26
  %s53 = sld [smem:[%s52]]
  %s54 = scalar_lea.smem %s0, 27
  %s55 = sld [smem:[%s54]]
  %s56 = scalar_lea.smem %s0, 28
  %s57 = sld [smem:[%s56]]
  %s58 = scalar_lea.smem %s0, 29
  %s59 = sld [smem:[%s58]]
  %s60 = scalar_lea.smem %s0, 30
  %s61 = sld [smem:[%s60]]
  %s62 = scalar_lea.smem %s0, 31
  %s63 = sld [smem:[%s62]]
  %s64 = scalar_lea.smem %s0, 32
  %s65 = sld [smem:[%s64]]
  %s66 = scalar_lea.smem %s0, 33
  %s67 = sld [smem:[%s66]]
  %s68 = scalar_lea.smem %s0, 34
  %s69 = sld [smem:[%s68]]
  %s70 = scalar_lea.smem %s0, 35
  %s71 = sld [smem:[%s70]]
  %s72 = scalar_lea.smem %s0, 36
  %s73 = sld [smem:[%s72]]
  %s74 = scalar_lea.smem %s0, 37
  %s75 = sld [smem:[%s74]]
  %s76 = scalar_lea.smem %s0, 38
  %s77 = sld [smem:[%s76]]
  %s78 = scalar_lea.smem %s0, 39
  %s79 = sld [smem:[%s78]]
  %s80 = scalar_lea.smem %s0, 40
  %s81 = sld [smem:[%s80]]
  %s82 = scalar_lea.smem %s0, 41
  %s83 = sld [smem:[%s82]]
  %s84 = scalar_lea.smem %s0, 42
  %s85 = sld [smem:[%s84]]
  %s86 = scalar_lea.smem %s0, 43
  %s87 = sld [smem:[%s86]]
  %s88 = scalar_lea.smem %s0, 44
  %s89 = sld [smem:[%s88]]
  %s90 = scalar_lea.smem %s0, 45
  %s91 = sld [smem:[%s90]]
  %s92 = scalar_lea.smem %s0, 46
  %s93 = sld [smem:[%s92]]
  %s94 = scalar_lea.smem %s0, 47
  %s95 = sld [smem:[%s94]]
  %s96 = scalar_lea.smem %s0, 48
  %s97 = sld [smem:[%s96]]
  %s98 = scalar_lea.smem %s0, 49
  %s99 = sld [smem:[%s98]]
  %100 = xla_tuple %s95, %s97, %s99
  %s101 = sld [smem:[#allocation0]]
  $region304: #{tpu_custom_call.1} parent=0
    _
  %s103 = ssub.s32 1, %s101
  %s104 = scalar_select 0, %s103, %s101
  $region1: #{tpu_custom_call.1} parent=0
    #allocation3 [shape = 'u8[8192]{0}', space=vmem, size = 0x2000, scoped, tag = 'input window, operand 3, single buffered']
    #allocation4 [shape = 's32[2]{0}', space=sflag, size = 0x8, scoped, tag = 'scoped memory for tpu_custom_call.1']
    #allocation5 [shape = 's32[2]{0}', space=sflag, size = 0x8, scoped, tag = 'scoped memory for tpu_custom_call.1']
    #allocation6 [shape = 'u8[512]{0}', space=vmem, size = 0x400, scoped, tag = 'input window, operand 4, single buffered']
    #allocation7 [shape = 's32[1]{0}', space=sflag, size = 0x4, scoped, tag = 'scoped memory for tpu_custom_call.1']
    #allocation8 [shape = 'u8[512]{0}', space=vmem, size = 0x400, scoped, tag = 'input window, operand 6, single buffered']
    #allocation9 [shape = 'u8[512]{0}', space=vmem, size = 0x400, scoped, tag = 'input window, operand 9, single buffered']
    #allocation10 [shape = 's32[1]{0}', space=sflag, size = 0x4, scoped, tag = 'scoped memory for tpu_custom_call.1']
    #allocation11 [shape = 'u8[512]{0}', space=vmem, size = 0x400, scoped, tag = 'input window, operand 11, single buffered']
    #allocation12 [shape = 'u8[512]{0}', space=vmem, size = 0x400, scoped, tag = 'input window, operand 13, single buffered']
    #allocation13 [shape = 's32[1]{0}', space=sflag, size = 0x4, scoped, tag = 'scoped memory for tpu_custom_call.1']
    #allocation14 [shape = 'u8[512]{0}', space=vmem, size = 0x400, scoped, tag = 'input window, operand 14, single buffered']
    #allocation15 [shape = 'u8[512]{0}', space=vmem, size = 0x400, scoped, tag = 'input window, operand 16, single buffered']
    #allocation16 [shape = 's32[1]{0}', space=sflag, size = 0x4, scoped, tag = 'scoped memory for tpu_custom_call.1']
    #allocation17 [shape = 'u8[4096]{0}', space=vmem, size = 0x1000, scoped, tag = 'input window, operand 17, single buffered']
    #allocation18 [shape = 'u8[512]{0}', space=vmem, size = 0x400, scoped, tag = 'input window, operand 18, single buffered']
    #allocation19 [shape = 's32[1]{0}', space=sflag, size = 0x4, scoped, tag = 'scoped memory for tpu_custom_call.1']
    #allocation20 [shape = 'u8[512]{0}', space=vmem, size = 0x400, scoped, tag = 'input window, operand 26, single buffered']
    #allocation21 [shape = 'u8[512]{0}', space=vmem, size = 0x400, scoped, tag = 'input window, operand 28, single buffered']
    #allocation22 [shape = 's32[1]{0}', space=sflag, size = 0x4, scoped, tag = 'scoped memory for tpu_custom_call.1']
    #allocation23 [shape = 'u8[4096]{0}', space=vmem, size = 0x1000, scoped, tag = 'input window, operand 29, single buffered']
    #allocation24 [shape = 'u8[512]{0}', space=vmem, size = 0x400, scoped, tag = 'input window, operand 30, single buffered']
    #allocation25 [shape = 's32[1]{0}', space=sflag, size = 0x4, scoped, tag = 'scoped memory for tpu_custom_call.1']
    #allocation26 [shape = 'u8[512]{0}', space=vmem, size = 0x400, scoped, tag = 'output window, operand 0, single buffered']
    #allocation27 [shape = 'u8[512]{0}', space=vmem, size = 0x400, scoped, tag = 'output window, operand 1, single buffered']
    #allocation28 [shape = 's32[1]{0}', space=sflag, size = 0x4, scoped, tag = 'scoped memory for tpu_custom_call.1']
    #allocation29 [shape = 'u8[8192]{0}', space=vmem, size = 0x2000, scoped, tag = 'output window, operand 2']
    %105 = vsyncpa [#allocation4], 0
    %106 = vsyncpa [#allocation7], 0
    %107 = vsyncpa [#allocation10], 0
    %108 = vsyncpa [#allocation13], 0
    %109 = vsyncpa [#allocation16], 0
    %110 = vsyncpa [#allocation19], 0
    %111 = vsyncpa [#allocation22], 0
    %112 = vsyncpa [#allocation25], 0
    %113 = vsyncpa [#allocation5], 0
    %114 = vsyncpa [#allocation28], 0
    loop: start=0, step=1, limit=4
    $region2: #{tpu_custom_call.1} parent=1 // loop_pre_header
      _
    $region3: #{tpu_custom_call.1} parent=1 // loop_header
      %s116 = sphi 0, %s120
      %p117 = scmp.ge.s32.totalorder %s116, 4
      %s126 = sphi 0, %s128
      %s129 = sphi 0, %s126
      %s130 = sphi 0, %s129
      %s146 = sphi 0, %s130
      %s152 = sphi 0, %s154
      %s155 = sphi 0, %s152
      %s156 = sphi 0, %s155
      %s172 = sphi 0, %s156
      %s178 = sphi 0, %s180
      %s181 = sphi 0, %s178
      %s182 = sphi 0, %s181
      %s198 = sphi 0, %s182
      %s202 = sphi 0, %s202
      %s204 = sphi 0, %s202
      %s205 = sphi 0, %s204
      %s219 = sphi 0, %s205
      %s223 = sphi 0, %s223
      %s225 = sphi 0, %s223
      %s226 = sphi 0, %s225
      %s240 = sphi 0, %s226
      %s244 = sphi 0, %s244
      %s246 = sphi 0, %s244
      %s247 = sphi 0, %s246
      %s261 = sphi 0, %s247
      %s265 = sphi 0, %s265
      %s267 = sphi 0, %s265
      %s268 = sphi 0, %s267
      %s282 = sphi 0, %s268
      %s286 = sphi 0, %s286
      %s288 = sphi 0, %s286
      %s289 = sphi 0, %s288
      %s303 = sphi 0, %s289
      %s307 = sphi 0, %s307
      %s309 = sphi 0, %s307
      %s310 = sphi 0, %s309
      %s324 = sphi 0, %s310
      %s328 = sphi 0, %s328
      %s330 = sphi 0, %s328
      %s331 = sphi 0, %s330
      %s345 = sphi 0, %s331
      %s349 = sphi 0, %s349
      %s351 = sphi 0, %s349
      %s352 = sphi 0, %s351
      %s366 = sphi 0, %s352
      %s370 = sphi 0, %s370
      %s372 = sphi 0, %s370
      %s373 = sphi 0, %s372
      %s387 = sphi 0, %s373
      %s391 = sphi 0, %s391
      %s393 = sphi 0, %s391
      %s394 = sphi 0, %s393
      %s408 = sphi 0, %s394
      %s412 = sphi 0, %s412
      %s414 = sphi 0, %s412
      %s415 = sphi 0, %s414
      %s429 = sphi 0, %s415
      %s433 = sphi 0, %s433
      %s435 = sphi 0, %s433
      %s436 = sphi 0, %s435
      %s450 = sphi 0, %s436
      %s454 = sphi 0, %s454
      %s456 = sphi 0, %s454
      %s457 = sphi 0, %s456
      %s471 = sphi 0, %s457
      %s475 = sphi 0, %s475
      %s477 = sphi 0, %s475
      %s478 = sphi 0, %s477
      %s492 = sphi 0, %s478
      %s496 = sphi 0, %s496
      %s498 = sphi 0, %s496
      %s499 = sphi 0, %s498
      %s513 = sphi 0, %s499
      %s517 = sphi 0, %s517
      %s519 = sphi 0, %s517
      %s520 = sphi 0, %s519
      %s534 = sphi 0, %s520
      %s538 = sphi 0, %s538
      %s540 = sphi 0, %s538
      %s541 = sphi 0, %s540
      %s555 = sphi 0, %s541
      %s559 = sphi 0, %s559
      %s561 = sphi 0, %s559
      %s562 = sphi 0, %s561
      %s576 = sphi 0, %s562
      %s580 = sphi 0, %s580
      %s582 = sphi 0, %s580
      %s583 = sphi 0, %s582
      %s597 = sphi 0, %s583
      %s601 = sphi 0, %s601
      %s603 = sphi 0, %s601
      %s604 = sphi 0, %s603
      %s618 = sphi 0, %s604
      %s622 = sphi 0, %s622
      %s624 = sphi 0, %s622
      %s625 = sphi 0, %s624
      %s639 = sphi 0, %s625
      %s643 = sphi 0, %s643
      %s645 = sphi 0, %s643
      %s646 = sphi 0, %s645
      %s660 = sphi 0, %s646
      %s664 = sphi 0, %s664
      %s666 = sphi 0, %s664
      %s667 = sphi 0, %s666
      %s681 = sphi 0, %s667
      %s685 = sphi 0, %s685
      %s687 = sphi 0, %s685
      %s688 = sphi 0, %s687
      %s702 = sphi 0, %s688
      %s706 = sphi 0, %s706
      %s708 = sphi 0, %s706
      %s709 = sphi 0, %s708
      %s723 = sphi 0, %s709
      %s727 = sphi 0, %s727
      %s729 = sphi 0, %s727
      %s730 = sphi 0, %s729
      %s744 = sphi 0, %s730
      %s748 = sphi 0, %s748
      %s750 = sphi 0, %s748
      %s751 = sphi 0, %s750
      %s765 = sphi 0, %s751
      %s769 = sphi 0, %s769
      %s771 = sphi 0, %s769
      %s772 = sphi 0, %s771
      %s786 = sphi 0, %s772
      %s790 = sphi 0, %s790
      %s792 = sphi 0, %s790
      %s793 = sphi 0, %s792
      %s807 = sphi 0, %s793
      %s811 = sphi 0, %s811
      %s813 = sphi 0, %s811
      %s814 = sphi 0, %s813
      %s828 = sphi 0, %s814
      %s832 = sphi 0, %s832
      %s834 = sphi 0, %s832
      %s835 = sphi 0, %s834
      %s849 = sphi 0, %s835
      %s853 = sphi 0, %s853
      %s855 = sphi 0, %s853
      %s856 = sphi 0, %s855
      %s870 = sphi 0, %s856
      %s874 = sphi 0, %s874
      %s876 = sphi 0, %s874
      %s877 = sphi 0, %s876
      %s891 = sphi 0, %s877
      %s895 = sphi 0, %s895
      %s897 = sphi 0, %s895
      %s898 = sphi 0, %s897
      %s912 = sphi 0, %s898
      %s916 = sphi 0, %s916
      %s918 = sphi 0, %s916
      %s919 = sphi 0, %s918
      %s933 = sphi 0, %s919
      %s937 = sphi 0, %s937
      %s939 = sphi 0, %s937
      %s940 = sphi 0, %s939
      %s954 = sphi 0, %s940
      %s958 = sphi 0, %s958
      %s960 = sphi 0, %s958
      %s961 = sphi 0, %s960
      %s975 = sphi 0, %s961
      %s979 = sphi 0, %s979
      %s981 = sphi 0, %s979
      %s982 = sphi 0, %s981
      %s996 = sphi 0, %s982
      %s1000 = sphi 0, %s1000
      %s1002 = sphi 0, %s1000
      %s1003 = sphi 0, %s1002
      %s1017 = sphi 0, %s1003
      %s1021 = sphi 0, %s1021
      %s1023 = sphi 0, %s1021
      %s1024 = sphi 0, %s1023
      %s1038 = sphi 0, %s1024
      %s1042 = sphi 0, %s1042
      %s1044 = sphi 0, %s1042
      %s1045 = sphi 0, %s1044
      %s1059 = sphi 0, %s1045
      %s1063 = sphi 0, %s1063
      %s1065 = sphi 0, %s1063
      %s1066 = sphi 0, %s1065
      %s1080 = sphi 0, %s1066
      %s1084 = sphi 0, %s1084
      %s1086 = sphi 0, %s1084
      %s1087 = sphi 0, %s1086
      %s1101 = sphi 0, %s1087
      %s1105 = sphi 0, %s1105
      %s1107 = sphi 0, %s1105
      %s1108 = sphi 0, %s1107
      %s1122 = sphi 0, %s1108
      %s1126 = sphi 0, %s1126
      %s1128 = sphi 0, %s1126
      %s1129 = sphi 0, %s1128
      %s1143 = sphi 0, %s1129
      %s1147 = sphi 0, %s1147
      %s1149 = sphi 0, %s1147
      %s1150 = sphi 0, %s1149
      %s1164 = sphi 0, %s1150
      %s1170 = sphi 0, %s1172
      %s1173 = sphi 0, %s1170
      %s1174 = sphi 0, %s1173
      %s1190 = sphi 0, %s1174
    $region4: #{tpu_custom_call.1} parent=1 // loop_header_branch
      %119 = sbr.rel (%p117) target = $region8
    $region5: #{tpu_custom_call.1} parent=1 // loop_body
      %s121 = ssub.s32 %s116, 1
      %s122 = ssub.s32 %s116, 2
      %s123 = sadd.s32 %s116, 1
      %s124 = ssub.s32 %s116, %s123
      %p125 = scmp.eq.s32.totalorder %s124, 0
      %s127 = sadd.s32 %s126, 1
      %s128 = scalar_select %p125, %s126, %s127
      %p131 = pneg %p125
      %p132 = scmp.eq.s32.totalorder %s116, 1
      %p133 = por %p131, %p132
      %p134 = scmp.ne.s32.totalorder %s126, %s129
      %p135 = scmp.eq.s32.totalorder %s116, 0
      %p136 = por %p134, %p135
      %p137 = scmp.ne.s32.totalorder %s126, %s129
      %p138 = scmp.eq.s32.totalorder %s121, 1
      %p139 = por %p137, %p138
      %p140 = scmp.ne.s32.totalorder %s129, %s130
      %p141 = scmp.eq.s32.totalorder %s121, 0
      %p142 = por %p140, %p141
      %p143 = scmp.ne.s32.totalorder %s129, %s130
      %p144 = scmp.eq.s32.totalorder %s122, 1
      %p145 = por %p143, %p144
      %p147 = scmp.ne.s32.totalorder %s130, %s146
      %p148 = scmp.eq.s32.totalorder %s122, 0
      %p149 = por %p147, %p148
      %s150 = ssub.s32 %s116, %s123
      %p151 = scmp.eq.s32.totalorder %s150, 0
      %s153 = sadd.s32 %s152, 1
      %s154 = scalar_select %p151, %s152, %s153
      %p157 = pneg %p151
      %p158 = scmp.eq.s32.totalorder %s116, 1
      %p159 = por %p157, %p158
      %p160 = scmp.ne.s32.totalorder %s152, %s155
      %p161 = scmp.eq.s32.totalorder %s116, 0
      %p162 = por %p160, %p161
      %p163 = scmp.ne.s32.totalorder %s152, %s155
      %p164 = scmp.eq.s32.totalorder %s121, 1
      %p165 = por %p163, %p164
      %p166 = scmp.ne.s32.totalorder %s155, %s156
      %p167 = scmp.eq.s32.totalorder %s121, 0
      %p168 = por %p166, %p167
      %p169 = scmp.ne.s32.totalorder %s155, %s156
      %p170 = scmp.eq.s32.totalorder %s122, 1
      %p171 = por %p169, %p170
      %p173 = scmp.ne.s32.totalorder %s156, %s172
      %p174 = scmp.eq.s32.totalorder %s122, 0
      %p175 = por %p173, %p174
      %s176 = ssub.s32 %s116, %s123
      %p177 = scmp.eq.s32.totalorder %s176, 0
      %s179 = sadd.s32 %s178, 1
      %s180 = scalar_select %p177, %s178, %s179
      %p183 = pneg %p177
      %p184 = scmp.eq.s32.totalorder %s116, 1
      %p185 = por %p183, %p184
      %p186 = scmp.ne.s32.totalorder %s178, %s181
      %p187 = scmp.eq.s32.totalorder %s116, 0
      %p188 = por %p186, %p187
      %p189 = scmp.ne.s32.totalorder %s178, %s181
      %p190 = scmp.eq.s32.totalorder %s121, 1
      %p191 = por %p189, %p190
      %p192 = scmp.ne.s32.totalorder %s181, %s182
      %p193 = scmp.eq.s32.totalorder %s121, 0
      %p194 = por %p192, %p193
      %p195 = scmp.ne.s32.totalorder %s181, %s182
      %p196 = scmp.eq.s32.totalorder %s122, 1
      %p197 = por %p195, %p196
      %p199 = scmp.ne.s32.totalorder %s182, %s198
      %p200 = scmp.eq.s32.totalorder %s122, 0
      %p201 = por %p199, %p200
      %s203 = sadd.s32 %s202, 1
      %p206 = scmp.eq.s32.totalorder %s116, 1
      %p207 = scmp.ne.s32.totalorder %s202, %s204
      %p208 = scmp.eq.s32.totalorder %s116, 0
      %p209 = por %p207, %p208
      %p210 = scmp.ne.s32.totalorder %s202, %s204
      %p211 = scmp.eq.s32.totalorder %s121, 1
      %p212 = por %p210, %p211
      %p213 = scmp.ne.s32.totalorder %s204, %s205
      %p214 = scmp.eq.s32.totalorder %s121, 0
      %p215 = por %p213, %p214
      %p216 = scmp.ne.s32.totalorder %s204, %s205
      %p217 = scmp.eq.s32.totalorder %s122, 1
      %p218 = por %p216, %p217
      %p220 = scmp.ne.s32.totalorder %s205, %s219
      %p221 = scmp.eq.s32.totalorder %s122, 0
      %p222 = por %p220, %p221
      %s224 = sadd.s32 %s223, 1
      %p227 = scmp.eq.s32.totalorder %s116, 1
      %p228 = scmp.ne.s32.totalorder %s223, %s225
      %p229 = scmp.eq.s32.totalorder %s116, 0
      %p230 = por %p228, %p229
      %p231 = scmp.ne.s32.totalorder %s223, %s225
      %p232 = scmp.eq.s32.totalorder %s121, 1
      %p233 = por %p231, %p232
      %p234 = scmp.ne.s32.totalorder %s225, %s226
      %p235 = scmp.eq.s32.totalorder %s121, 0
      %p236 = por %p234, %p235
      %p237 = scmp.ne.s32.totalorder %s225, %s226
      %p238 = scmp.eq.s32.totalorder %s122, 1
      %p239 = por %p237, %p238
      %p241 = scmp.ne.s32.totalorder %s226, %s240
      %p242 = scmp.eq.s32.totalorder %s122, 0
      %p243 = por %p241, %p242
      %s245 = sadd.s32 %s244, 1
      %p248 = scmp.eq.s32.totalorder %s116, 1
      %p249 = scmp.ne.s32.totalorder %s244, %s246
      %p250 = scmp.eq.s32.totalorder %s116, 0
      %p251 = por %p249, %p250
      %p252 = scmp.ne.s32.totalorder %s244, %s246
      %p253 = scmp.eq.s32.totalorder %s121, 1
      %p254 = por %p252, %p253
      %p255 = scmp.ne.s32.totalorder %s246, %s247
      %p256 = scmp.eq.s32.totalorder %s121, 0
      %p257 = por %p255, %p256
      %p258 = scmp.ne.s32.totalorder %s246, %s247
      %p259 = scmp.eq.s32.totalorder %s122, 1
      %p260 = por %p258, %p259
      %p262 = scmp.ne.s32.totalorder %s247, %s261
      %p263 = scmp.eq.s32.totalorder %s122, 0
      %p264 = por %p262, %p263
      %s266 = sadd.s32 %s265, 1
      %p269 = scmp.eq.s32.totalorder %s116, 1
      %p270 = scmp.ne.s32.totalorder %s265, %s267
      %p271 = scmp.eq.s32.totalorder %s116, 0
      %p272 = por %p270, %p271
      %p273 = scmp.ne.s32.totalorder %s265, %s267
      %p274 = scmp.eq.s32.totalorder %s121, 1
      %p275 = por %p273, %p274
      %p276 = scmp.ne.s32.totalorder %s267, %s268
      %p277 = scmp.eq.s32.totalorder %s121, 0
      %p278 = por %p276, %p277
      %p279 = scmp.ne.s32.totalorder %s267, %s268
      %p280 = scmp.eq.s32.totalorder %s122, 1
      %p281 = por %p279, %p280
      %p283 = scmp.ne.s32.totalorder %s268, %s282
      %p284 = scmp.eq.s32.totalorder %s122, 0
      %p285 = por %p283, %p284
      %s287 = sadd.s32 %s286, 1
      %p290 = scmp.eq.s32.totalorder %s116, 1
      %p291 = scmp.ne.s32.totalorder %s286, %s288
      %p292 = scmp.eq.s32.totalorder %s116, 0
      %p293 = por %p291, %p292
      %p294 = scmp.ne.s32.totalorder %s286, %s288
      %p295 = scmp.eq.s32.totalorder %s121, 1
      %p296 = por %p294, %p295
      %p297 = scmp.ne.s32.totalorder %s288, %s289
      %p298 = scmp.eq.s32.totalorder %s121, 0
      %p299 = por %p297, %p298
      %p300 = scmp.ne.s32.totalorder %s288, %s289
      %p301 = scmp.eq.s32.totalorder %s122, 1
      %p302 = por %p300, %p301
      %p304 = scmp.ne.s32.totalorder %s289, %s303
      %p305 = scmp.eq.s32.totalorder %s122, 0
      %p306 = por %p304, %p305
      %s308 = sadd.s32 %s307, 1
      %p311 = scmp.eq.s32.totalorder %s116, 1
      %p312 = scmp.ne.s32.totalorder %s307, %s309
      %p313 = scmp.eq.s32.totalorder %s116, 0
      %p314 = por %p312, %p313
      %p315 = scmp.ne.s32.totalorder %s307, %s309
      %p316 = scmp.eq.s32.totalorder %s121, 1
      %p317 = por %p315, %p316
      %p318 = scmp.ne.s32.totalorder %s309, %s310
      %p319 = scmp.eq.s32.totalorder %s121, 0
      %p320 = por %p318, %p319
      %p321 = scmp.ne.s32.totalorder %s309, %s310
      %p322 = scmp.eq.s32.totalorder %s122, 1
      %p323 = por %p321, %p322
      %p325 = scmp.ne.s32.totalorder %s310, %s324
      %p326 = scmp.eq.s32.totalorder %s122, 0
      %p327 = por %p325, %p326
      %s329 = sadd.s32 %s328, 1
      %p332 = scmp.eq.s32.totalorder %s116, 1
      %p333 = scmp.ne.s32.totalorder %s328, %s330
      %p334 = scmp.eq.s32.totalorder %s116, 0
      %p335 = por %p333, %p334
      %p336 = scmp.ne.s32.totalorder %s328, %s330
      %p337 = scmp.eq.s32.totalorder %s121, 1
      %p338 = por %p336, %p337
      %p339 = scmp.ne.s32.totalorder %s330, %s331
      %p340 = scmp.eq.s32.totalorder %s121, 0
      %p341 = por %p339, %p340
      %p342 = scmp.ne.s32.totalorder %s330, %s331
      %p343 = scmp.eq.s32.totalorder %s122, 1
      %p344 = por %p342, %p343
      %p346 = scmp.ne.s32.totalorder %s331, %s345
      %p347 = scmp.eq.s32.totalorder %s122, 0
      %p348 = por %p346, %p347
      %s350 = sadd.s32 %s349, 1
      %p353 = scmp.eq.s32.totalorder %s116, 1
      %p354 = scmp.ne.s32.totalorder %s349, %s351
      %p355 = scmp.eq.s32.totalorder %s116, 0
      %p356 = por %p354, %p355
      %p357 = scmp.ne.s32.totalorder %s349, %s351
      %p358 = scmp.eq.s32.totalorder %s121, 1
      %p359 = por %p357, %p358
      %p360 = scmp.ne.s32.totalorder %s351, %s352
      %p361 = scmp.eq.s32.totalorder %s121, 0
      %p362 = por %p360, %p361
      %p363 = scmp.ne.s32.totalorder %s351, %s352
      %p364 = scmp.eq.s32.totalorder %s122, 1
      %p365 = por %p363, %p364
      %p367 = scmp.ne.s32.totalorder %s352, %s366
      %p368 = scmp.eq.s32.totalorder %s122, 0
      %p369 = por %p367, %p368
      %s371 = sadd.s32 %s370, 1
      %p374 = scmp.eq.s32.totalorder %s116, 1
      %p375 = scmp.ne.s32.totalorder %s370, %s372
      %p376 = scmp.eq.s32.totalorder %s116, 0
      %p377 = por %p375, %p376
      %p378 = scmp.ne.s32.totalorder %s370, %s372
      %p379 = scmp.eq.s32.totalorder %s121, 1
      %p380 = por %p378, %p379
      %p381 = scmp.ne.s32.totalorder %s372, %s373
      %p382 = scmp.eq.s32.totalorder %s121, 0
      %p383 = por %p381, %p382
      %p384 = scmp.ne.s32.totalorder %s372, %s373
      %p385 = scmp.eq.s32.totalorder %s122, 1
      %p386 = por %p384, %p385
      %p388 = scmp.ne.s32.totalorder %s373, %s387
      %p389 = scmp.eq.s32.totalorder %s122, 0
      %p390 = por %p388, %p389
      %s392 = sadd.s32 %s391, 1
      %p395 = scmp.eq.s32.totalorder %s116, 1
      %p396 = scmp.ne.s32.totalorder %s391, %s393
      %p397 = scmp.eq.s32.totalorder %s116, 0
      %p398 = por %p396, %p397
      %p399 = scmp.ne.s32.totalorder %s391, %s393
      %p400 = scmp.eq.s32.totalorder %s121, 1
      %p401 = por %p399, %p400
      %p402 = scmp.ne.s32.totalorder %s393, %s394
      %p403 = scmp.eq.s32.totalorder %s121, 0
      %p404 = por %p402, %p403
      %p405 = scmp.ne.s32.totalorder %s393, %s394
      %p406 = scmp.eq.s32.totalorder %s122, 1
      %p407 = por %p405, %p406
      %p409 = scmp.ne.s32.totalorder %s394, %s408
      %p410 = scmp.eq.s32.totalorder %s122, 0
      %p411 = por %p409, %p410
      %s413 = sadd.s32 %s412, 1
      %p416 = scmp.eq.s32.totalorder %s116, 1
      %p417 = scmp.ne.s32.totalorder %s412, %s414
      %p418 = scmp.eq.s32.totalorder %s116, 0
      %p419 = por %p417, %p418
      %p420 = scmp.ne.s32.totalorder %s412, %s414
      %p421 = scmp.eq.s32.totalorder %s121, 1
      %p422 = por %p420, %p421
      %p423 = scmp.ne.s32.totalorder %s414, %s415
      %p424 = scmp.eq.s32.totalorder %s121, 0
      %p425 = por %p423, %p424
      %p426 = scmp.ne.s32.totalorder %s414, %s415
      %p427 = scmp.eq.s32.totalorder %s122, 1
      %p428 = por %p426, %p427
      %p430 = scmp.ne.s32.totalorder %s415, %s429
      %p431 = scmp.eq.s32.totalorder %s122, 0
      %p432 = por %p430, %p431
      %s434 = sadd.s32 %s433, 1
      %p437 = scmp.eq.s32.totalorder %s116, 1
      %p438 = scmp.ne.s32.totalorder %s433, %s435
      %p439 = scmp.eq.s32.totalorder %s116, 0
      %p440 = por %p438, %p439
      %p441 = scmp.ne.s32.totalorder %s433, %s435
      %p442 = scmp.eq.s32.totalorder %s121, 1
      %p443 = por %p441, %p442
      %p444 = scmp.ne.s32.totalorder %s435, %s436
      %p445 = scmp.eq.s32.totalorder %s121, 0
      %p446 = por %p444, %p445
      %p447 = scmp.ne.s32.totalorder %s435, %s436
      %p448 = scmp.eq.s32.totalorder %s122, 1
      %p449 = por %p447, %p448
      %p451 = scmp.ne.s32.totalorder %s436, %s450
      %p452 = scmp.eq.s32.totalorder %s122, 0
      %p453 = por %p451, %p452
      %s455 = sadd.s32 %s454, 1
      %p458 = scmp.eq.s32.totalorder %s116, 1
      %p459 = scmp.ne.s32.totalorder %s454, %s456
      %p460 = scmp.eq.s32.totalorder %s116, 0
      %p461 = por %p459, %p460
      %p462 = scmp.ne.s32.totalorder %s454, %s456
      %p463 = scmp.eq.s32.totalorder %s121, 1
      %p464 = por %p462, %p463
      %p465 = scmp.ne.s32.totalorder %s456, %s457
      %p466 = scmp.eq.s32.totalorder %s121, 0
      %p467 = por %p465, %p466
      %p468 = scmp.ne.s32.totalorder %s456, %s457
      %p469 = scmp.eq.s32.totalorder %s122, 1
      %p470 = por %p468, %p469
      %p472 = scmp.ne.s32.totalorder %s457, %s471
      %p473 = scmp.eq.s32.totalorder %s122, 0
      %p474 = por %p472, %p473
      %s476 = sadd.s32 %s475, 1
      %p479 = scmp.eq.s32.totalorder %s116, 1
      %p480 = scmp.ne.s32.totalorder %s475, %s477
      %p481 = scmp.eq.s32.totalorder %s116, 0
      %p482 = por %p480, %p481
      %p483 = scmp.ne.s32.totalorder %s475, %s477
      %p484 = scmp.eq.s32.totalorder %s121, 1
      %p485 = por %p483, %p484
      %p486 = scmp.ne.s32.totalorder %s477, %s478
      %p487 = scmp.eq.s32.totalorder %s121, 0
      %p488 = por %p486, %p487
      %p489 = scmp.ne.s32.totalorder %s477, %s478
      %p490 = scmp.eq.s32.totalorder %s122, 1
      %p491 = por %p489, %p490
      %p493 = scmp.ne.s32.totalorder %s478, %s492
      %p494 = scmp.eq.s32.totalorder %s122, 0
      %p495 = por %p493, %p494
      %s497 = sadd.s32 %s496, 1
      %p500 = scmp.eq.s32.totalorder %s116, 1
      %p501 = scmp.ne.s32.totalorder %s496, %s498
      %p502 = scmp.eq.s32.totalorder %s116, 0
      %p503 = por %p501, %p502
      %p504 = scmp.ne.s32.totalorder %s496, %s498
      %p505 = scmp.eq.s32.totalorder %s121, 1
      %p506 = por %p504, %p505
      %p507 = scmp.ne.s32.totalorder %s498, %s499
      %p508 = scmp.eq.s32.totalorder %s121, 0
      %p509 = por %p507, %p508
      %p510 = scmp.ne.s32.totalorder %s498, %s499
      %p511 = scmp.eq.s32.totalorder %s122, 1
      %p512 = por %p510, %p511
      %p514 = scmp.ne.s32.totalorder %s499, %s513
      %p515 = scmp.eq.s32.totalorder %s122, 0
      %p516 = por %p514, %p515
      %s518 = sadd.s32 %s517, 1
      %p521 = scmp.eq.s32.totalorder %s116, 1
      %p522 = scmp.ne.s32.totalorder %s517, %s519
      %p523 = scmp.eq.s32.totalorder %s116, 0
      %p524 = por %p522, %p523
      %p525 = scmp.ne.s32.totalorder %s517, %s519
      %p526 = scmp.eq.s32.totalorder %s121, 1
      %p527 = por %p525, %p526
      %p528 = scmp.ne.s32.totalorder %s519, %s520
      %p529 = scmp.eq.s32.totalorder %s121, 0
      %p530 = por %p528, %p529
      %p531 = scmp.ne.s32.totalorder %s519, %s520
      %p532 = scmp.eq.s32.totalorder %s122, 1
      %p533 = por %p531, %p532
      %p535 = scmp.ne.s32.totalorder %s520, %s534
      %p536 = scmp.eq.s32.totalorder %s122, 0
      %p537 = por %p535, %p536
      %s539 = sadd.s32 %s538, 1
      %p542 = scmp.eq.s32.totalorder %s116, 1
      %p543 = scmp.ne.s32.totalorder %s538, %s540
      %p544 = scmp.eq.s32.totalorder %s116, 0
      %p545 = por %p543, %p544
      %p546 = scmp.ne.s32.totalorder %s538, %s540
      %p547 = scmp.eq.s32.totalorder %s121, 1
      %p548 = por %p546, %p547
      %p549 = scmp.ne.s32.totalorder %s540, %s541
      %p550 = scmp.eq.s32.totalorder %s121, 0
      %p551 = por %p549, %p550
      %p552 = scmp.ne.s32.totalorder %s540, %s541
      %p553 = scmp.eq.s32.totalorder %s122, 1
      %p554 = por %p552, %p553
      %p556 = scmp.ne.s32.totalorder %s541, %s555
      %p557 = scmp.eq.s32.totalorder %s122, 0
      %p558 = por %p556, %p557
      %s560 = sadd.s32 %s559, 1
      %p563 = scmp.eq.s32.totalorder %s116, 1
      %p564 = scmp.ne.s32.totalorder %s559, %s561
      %p565 = scmp.eq.s32.totalorder %s116, 0
      %p566 = por %p564, %p565
      %p567 = scmp.ne.s32.totalorder %s559, %s561
      %p568 = scmp.eq.s32.totalorder %s121, 1
      %p569 = por %p567, %p568
      %p570 = scmp.ne.s32.totalorder %s561, %s562
      %p571 = scmp.eq.s32.totalorder %s121, 0
      %p572 = por %p570, %p571
      %p573 = scmp.ne.s32.totalorder %s561, %s562
      %p574 = scmp.eq.s32.totalorder %s122, 1
      %p575 = por %p573, %p574
      %p577 = scmp.ne.s32.totalorder %s562, %s576
      %p578 = scmp.eq.s32.totalorder %s122, 0
      %p579 = por %p577, %p578
      %s581 = sadd.s32 %s580, 1
      %p584 = scmp.eq.s32.totalorder %s116, 1
      %p585 = scmp.ne.s32.totalorder %s580, %s582
      %p586 = scmp.eq.s32.totalorder %s116, 0
      %p587 = por %p585, %p586
      %p588 = scmp.ne.s32.totalorder %s580, %s582
      %p589 = scmp.eq.s32.totalorder %s121, 1
      %p590 = por %p588, %p589
      %p591 = scmp.ne.s32.totalorder %s582, %s583
      %p592 = scmp.eq.s32.totalorder %s121, 0
      %p593 = por %p591, %p592
      %p594 = scmp.ne.s32.totalorder %s582, %s583
      %p595 = scmp.eq.s32.totalorder %s122, 1
      %p596 = por %p594, %p595
      %p598 = scmp.ne.s32.totalorder %s583, %s597
      %p599 = scmp.eq.s32.totalorder %s122, 0
      %p600 = por %p598, %p599
      %s602 = sadd.s32 %s601, 1
      %p605 = scmp.eq.s32.totalorder %s116, 1
      %p606 = scmp.ne.s32.totalorder %s601, %s603
      %p607 = scmp.eq.s32.totalorder %s116, 0
      %p608 = por %p606, %p607
      %p609 = scmp.ne.s32.totalorder %s601, %s603
      %p610 = scmp.eq.s32.totalorder %s121, 1
      %p611 = por %p609, %p610
      %p612 = scmp.ne.s32.totalorder %s603, %s604
      %p613 = scmp.eq.s32.totalorder %s121, 0
      %p614 = por %p612, %p613
      %p615 = scmp.ne.s32.totalorder %s603, %s604
      %p616 = scmp.eq.s32.totalorder %s122, 1
      %p617 = por %p615, %p616
      %p619 = scmp.ne.s32.totalorder %s604, %s618
      %p620 = scmp.eq.s32.totalorder %s122, 0
      %p621 = por %p619, %p620
      %s623 = sadd.s32 %s622, 1
      %p626 = scmp.eq.s32.totalorder %s116, 1
      %p627 = scmp.ne.s32.totalorder %s622, %s624
      %p628 = scmp.eq.s32.totalorder %s116, 0
      %p629 = por %p627, %p628
      %p630 = scmp.ne.s32.totalorder %s622, %s624
      %p631 = scmp.eq.s32.totalorder %s121, 1
      %p632 = por %p630, %p631
      %p633 = scmp.ne.s32.totalorder %s624, %s625
      %p634 = scmp.eq.s32.totalorder %s121, 0
      %p635 = por %p633, %p634
      %p636 = scmp.ne.s32.totalorder %s624, %s625
      %p637 = scmp.eq.s32.totalorder %s122, 1
      %p638 = por %p636, %p637
      %p640 = scmp.ne.s32.totalorder %s625, %s639
      %p641 = scmp.eq.s32.totalorder %s122, 0
      %p642 = por %p640, %p641
      %s644 = sadd.s32 %s643, 1
      %p647 = scmp.eq.s32.totalorder %s116, 1
      %p648 = scmp.ne.s32.totalorder %s643, %s645
      %p649 = scmp.eq.s32.totalorder %s116, 0
      %p650 = por %p648, %p649
      %p651 = scmp.ne.s32.totalorder %s643, %s645
      %p652 = scmp.eq.s32.totalorder %s121, 1
      %p653 = por %p651, %p652
      %p654 = scmp.ne.s32.totalorder %s645, %s646
      %p655 = scmp.eq.s32.totalorder %s121, 0
      %p656 = por %p654, %p655
      %p657 = scmp.ne.s32.totalorder %s645, %s646
      %p658 = scmp.eq.s32.totalorder %s122, 1
      %p659 = por %p657, %p658
      %p661 = scmp.ne.s32.totalorder %s646, %s660
      %p662 = scmp.eq.s32.totalorder %s122, 0
      %p663 = por %p661, %p662
      %s665 = sadd.s32 %s664, 1
      %p668 = scmp.eq.s32.totalorder %s116, 1
      %p669 = scmp.ne.s32.totalorder %s664, %s666
      %p670 = scmp.eq.s32.totalorder %s116, 0
      %p671 = por %p669, %p670
      %p672 = scmp.ne.s32.totalorder %s664, %s666
      %p673 = scmp.eq.s32.totalorder %s121, 1
      %p674 = por %p672, %p673
      %p675 = scmp.ne.s32.totalorder %s666, %s667
      %p676 = scmp.eq.s32.totalorder %s121, 0
      %p677 = por %p675, %p676
      %p678 = scmp.ne.s32.totalorder %s666, %s667
      %p679 = scmp.eq.s32.totalorder %s122, 1
      %p680 = por %p678, %p679
      %p682 = scmp.ne.s32.totalorder %s667, %s681
      %p683 = scmp.eq.s32.totalorder %s122, 0
      %p684 = por %p682, %p683
      %s686 = sadd.s32 %s685, 1
      %p689 = scmp.eq.s32.totalorder %s116, 1
      %p690 = scmp.ne.s32.totalorder %s685, %s687
      %p691 = scmp.eq.s32.totalorder %s116, 0
      %p692 = por %p690, %p691
      %p693 = scmp.ne.s32.totalorder %s685, %s687
      %p694 = scmp.eq.s32.totalorder %s121, 1
      %p695 = por %p693, %p694
      %p696 = scmp.ne.s32.totalorder %s687, %s688
      %p697 = scmp.eq.s32.totalorder %s121, 0
      %p698 = por %p696, %p697
      %p699 = scmp.ne.s32.totalorder %s687, %s688
      %p700 = scmp.eq.s32.totalorder %s122, 1
      %p701 = por %p699, %p700
      %p703 = scmp.ne.s32.totalorder %s688, %s702
      %p704 = scmp.eq.s32.totalorder %s122, 0
      %p705 = por %p703, %p704
      %s707 = sadd.s32 %s706, 1
      %p710 = scmp.eq.s32.totalorder %s116, 1
      %p711 = scmp.ne.s32.totalorder %s706, %s708
      %p712 = scmp.eq.s32.totalorder %s116, 0
      %p713 = por %p711, %p712
      %p714 = scmp.ne.s32.totalorder %s706, %s708
      %p715 = scmp.eq.s32.totalorder %s121, 1
      %p716 = por %p714, %p715
      %p717 = scmp.ne.s32.totalorder %s708, %s709
      %p718 = scmp.eq.s32.totalorder %s121, 0
      %p719 = por %p717, %p718
      %p720 = scmp.ne.s32.totalorder %s708, %s709
      %p721 = scmp.eq.s32.totalorder %s122, 1
      %p722 = por %p720, %p721
      %p724 = scmp.ne.s32.totalorder %s709, %s723
      %p725 = scmp.eq.s32.totalorder %s122, 0
      %p726 = por %p724, %p725
      %s728 = sadd.s32 %s727, 1
      %p731 = scmp.eq.s32.totalorder %s116, 1
      %p732 = scmp.ne.s32.totalorder %s727, %s729
      %p733 = scmp.eq.s32.totalorder %s116, 0
      %p734 = por %p732, %p733
      %p735 = scmp.ne.s32.totalorder %s727, %s729
      %p736 = scmp.eq.s32.totalorder %s121, 1
      %p737 = por %p735, %p736
      %p738 = scmp.ne.s32.totalorder %s729, %s730
      %p739 = scmp.eq.s32.totalorder %s121, 0
      %p740 = por %p738, %p739
      %p741 = scmp.ne.s32.totalorder %s729, %s730
      %p742 = scmp.eq.s32.totalorder %s122, 1
      %p743 = por %p741, %p742
      %p745 = scmp.ne.s32.totalorder %s730, %s744
      %p746 = scmp.eq.s32.totalorder %s122, 0
      %p747 = por %p745, %p746
      %s749 = sadd.s32 %s748, 1
      %p752 = scmp.eq.s32.totalorder %s116, 1
      %p753 = scmp.ne.s32.totalorder %s748, %s750
      %p754 = scmp.eq.s32.totalorder %s116, 0
      %p755 = por %p753, %p754
      %p756 = scmp.ne.s32.totalorder %s748, %s750
      %p757 = scmp.eq.s32.totalorder %s121, 1
      %p758 = por %p756, %p757
      %p759 = scmp.ne.s32.totalorder %s750, %s751
      %p760 = scmp.eq.s32.totalorder %s121, 0
      %p761 = por %p759, %p760
      %p762 = scmp.ne.s32.totalorder %s750, %s751
      %p763 = scmp.eq.s32.totalorder %s122, 1
      %p764 = por %p762, %p763
      %p766 = scmp.ne.s32.totalorder %s751, %s765
      %p767 = scmp.eq.s32.totalorder %s122, 0
      %p768 = por %p766, %p767
      %s770 = sadd.s32 %s769, 1
      %p773 = scmp.eq.s32.totalorder %s116, 1
      %p774 = scmp.ne.s32.totalorder %s769, %s771
      %p775 = scmp.eq.s32.totalorder %s116, 0
      %p776 = por %p774, %p775
      %p777 = scmp.ne.s32.totalorder %s769, %s771
      %p778 = scmp.eq.s32.totalorder %s121, 1
      %p779 = por %p777, %p778
      %p780 = scmp.ne.s32.totalorder %s771, %s772
      %p781 = scmp.eq.s32.totalorder %s121, 0
      %p782 = por %p780, %p781
      %p783 = scmp.ne.s32.totalorder %s771, %s772
      %p784 = scmp.eq.s32.totalorder %s122, 1
      %p785 = por %p783, %p784
      %p787 = scmp.ne.s32.totalorder %s772, %s786
      %p788 = scmp.eq.s32.totalorder %s122, 0
      %p789 = por %p787, %p788
      %s791 = sadd.s32 %s790, 1
      %p794 = scmp.eq.s32.totalorder %s116, 1
      %p795 = scmp.ne.s32.totalorder %s790, %s792
      %p796 = scmp.eq.s32.totalorder %s116, 0
      %p797 = por %p795, %p796
      %p798 = scmp.ne.s32.totalorder %s790, %s792
      %p799 = scmp.eq.s32.totalorder %s121, 1
      %p800 = por %p798, %p799
      %p801 = scmp.ne.s32.totalorder %s792, %s793
      %p802 = scmp.eq.s32.totalorder %s121, 0
      %p803 = por %p801, %p802
      %p804 = scmp.ne.s32.totalorder %s792, %s793
      %p805 = scmp.eq.s32.totalorder %s122, 1
      %p806 = por %p804, %p805
      %p808 = scmp.ne.s32.totalorder %s793, %s807
      %p809 = scmp.eq.s32.totalorder %s122, 0
      %p810 = por %p808, %p809
      %s812 = sadd.s32 %s811, 1
      %p815 = scmp.eq.s32.totalorder %s116, 1
      %p816 = scmp.ne.s32.totalorder %s811, %s813
      %p817 = scmp.eq.s32.totalorder %s116, 0
      %p818 = por %p816, %p817
      %p819 = scmp.ne.s32.totalorder %s811, %s813
      %p820 = scmp.eq.s32.totalorder %s121, 1
      %p821 = por %p819, %p820
      %p822 = scmp.ne.s32.totalorder %s813, %s814
      %p823 = scmp.eq.s32.totalorder %s121, 0
      %p824 = por %p822, %p823
      %p825 = scmp.ne.s32.totalorder %s813, %s814
      %p826 = scmp.eq.s32.totalorder %s122, 1
      %p827 = por %p825, %p826
      %p829 = scmp.ne.s32.totalorder %s814, %s828
      %p830 = scmp.eq.s32.totalorder %s122, 0
      %p831 = por %p829, %p830
      %s833 = sadd.s32 %s832, 1
      %p836 = scmp.eq.s32.totalorder %s116, 1
      %p837 = scmp.ne.s32.totalorder %s832, %s834
      %p838 = scmp.eq.s32.totalorder %s116, 0
      %p839 = por %p837, %p838
      %p840 = scmp.ne.s32.totalorder %s832, %s834
      %p841 = scmp.eq.s32.totalorder %s121, 1
      %p842 = por %p840, %p841
      %p843 = scmp.ne.s32.totalorder %s834, %s835
      %p844 = scmp.eq.s32.totalorder %s121, 0
      %p845 = por %p843, %p844
      %p846 = scmp.ne.s32.totalorder %s834, %s835
      %p847 = scmp.eq.s32.totalorder %s122, 1
      %p848 = por %p846, %p847
      %p850 = scmp.ne.s32.totalorder %s835, %s849
      %p851 = scmp.eq.s32.totalorder %s122, 0
      %p852 = por %p850, %p851
      %s854 = sadd.s32 %s853, 1
      %p857 = scmp.eq.s32.totalorder %s116, 1
      %p858 = scmp.ne.s32.totalorder %s853, %s855
      %p859 = scmp.eq.s32.totalorder %s116, 0
      %p860 = por %p858, %p859
      %p861 = scmp.ne.s32.totalorder %s853, %s855
      %p862 = scmp.eq.s32.totalorder %s121, 1
      %p863 = por %p861, %p862
      %p864 = scmp.ne.s32.totalorder %s855, %s856
      %p865 = scmp.eq.s32.totalorder %s121, 0
      %p866 = por %p864, %p865
      %p867 = scmp.ne.s32.totalorder %s855, %s856
      %p868 = scmp.eq.s32.totalorder %s122, 1
      %p869 = por %p867, %p868
      %p871 = scmp.ne.s32.totalorder %s856, %s870
      %p872 = scmp.eq.s32.totalorder %s122, 0
      %p873 = por %p871, %p872
      %s875 = sadd.s32 %s874, 1
      %p878 = scmp.eq.s32.totalorder %s116, 1
      %p879 = scmp.ne.s32.totalorder %s874, %s876
      %p880 = scmp.eq.s32.totalorder %s116, 0
      %p881 = por %p879, %p880
      %p882 = scmp.ne.s32.totalorder %s874, %s876
      %p883 = scmp.eq.s32.totalorder %s121, 1
      %p884 = por %p882, %p883
      %p885 = scmp.ne.s32.totalorder %s876, %s877
      %p886 = scmp.eq.s32.totalorder %s121, 0
      %p887 = por %p885, %p886
      %p888 = scmp.ne.s32.totalorder %s876, %s877
      %p889 = scmp.eq.s32.totalorder %s122, 1
      %p890 = por %p888, %p889
      %p892 = scmp.ne.s32.totalorder %s877, %s891
      %p893 = scmp.eq.s32.totalorder %s122, 0
      %p894 = por %p892, %p893
      %s896 = sadd.s32 %s895, 1
      %p899 = scmp.eq.s32.totalorder %s116, 1
      %p900 = scmp.ne.s32.totalorder %s895, %s897
      %p901 = scmp.eq.s32.totalorder %s116, 0
      %p902 = por %p900, %p901
      %p903 = scmp.ne.s32.totalorder %s895, %s897
      %p904 = scmp.eq.s32.totalorder %s121, 1
      %p905 = por %p903, %p904
      %p906 = scmp.ne.s32.totalorder %s897, %s898
      %p907 = scmp.eq.s32.totalorder %s121, 0
      %p908 = por %p906, %p907
      %p909 = scmp.ne.s32.totalorder %s897, %s898
      %p910 = scmp.eq.s32.totalorder %s122, 1
      %p911 = por %p909, %p910
      %p913 = scmp.ne.s32.totalorder %s898, %s912
      %p914 = scmp.eq.s32.totalorder %s122, 0
      %p915 = por %p913, %p914
      %s917 = sadd.s32 %s916, 1
      %p920 = scmp.eq.s32.totalorder %s116, 1
      %p921 = scmp.ne.s32.totalorder %s916, %s918
      %p922 = scmp.eq.s32.totalorder %s116, 0
      %p923 = por %p921, %p922
      %p924 = scmp.ne.s32.totalorder %s916, %s918
      %p925 = scmp.eq.s32.totalorder %s121, 1
      %p926 = por %p924, %p925
      %p927 = scmp.ne.s32.totalorder %s918, %s919
      %p928 = scmp.eq.s32.totalorder %s121, 0
      %p929 = por %p927, %p928
      %p930 = scmp.ne.s32.totalorder %s918, %s919
      %p931 = scmp.eq.s32.totalorder %s122, 1
      %p932 = por %p930, %p931
      %p934 = scmp.ne.s32.totalorder %s919, %s933
      %p935 = scmp.eq.s32.totalorder %s122, 0
      %p936 = por %p934, %p935
      %s938 = sadd.s32 %s937, 1
      %p941 = scmp.eq.s32.totalorder %s116, 1
      %p942 = scmp.ne.s32.totalorder %s937, %s939
      %p943 = scmp.eq.s32.totalorder %s116, 0
      %p944 = por %p942, %p943
      %p945 = scmp.ne.s32.totalorder %s937, %s939
      %p946 = scmp.eq.s32.totalorder %s121, 1
      %p947 = por %p945, %p946
      %p948 = scmp.ne.s32.totalorder %s939, %s940
      %p949 = scmp.eq.s32.totalorder %s121, 0
      %p950 = por %p948, %p949
      %p951 = scmp.ne.s32.totalorder %s939, %s940
      %p952 = scmp.eq.s32.totalorder %s122, 1
      %p953 = por %p951, %p952
      %p955 = scmp.ne.s32.totalorder %s940, %s954
      %p956 = scmp.eq.s32.totalorder %s122, 0
      %p957 = por %p955, %p956
      %s959 = sadd.s32 %s958, 1
      %p962 = scmp.eq.s32.totalorder %s116, 1
      %p963 = scmp.ne.s32.totalorder %s958, %s960
      %p964 = scmp.eq.s32.totalorder %s116, 0
      %p965 = por %p963, %p964
      %p966 = scmp.ne.s32.totalorder %s958, %s960
      %p967 = scmp.eq.s32.totalorder %s121, 1
      %p968 = por %p966, %p967
      %p969 = scmp.ne.s32.totalorder %s960, %s961
      %p970 = scmp.eq.s32.totalorder %s121, 0
      %p971 = por %p969, %p970
      %p972 = scmp.ne.s32.totalorder %s960, %s961
      %p973 = scmp.eq.s32.totalorder %s122, 1
      %p974 = por %p972, %p973
      %p976 = scmp.ne.s32.totalorder %s961, %s975
      %p977 = scmp.eq.s32.totalorder %s122, 0
      %p978 = por %p976, %p977
      %s980 = sadd.s32 %s979, 1
      %p983 = scmp.eq.s32.totalorder %s116, 1
      %p984 = scmp.ne.s32.totalorder %s979, %s981
      %p985 = scmp.eq.s32.totalorder %s116, 0
      %p986 = por %p984, %p985
      %p987 = scmp.ne.s32.totalorder %s979, %s981
      %p988 = scmp.eq.s32.totalorder %s121, 1
      %p989 = por %p987, %p988
      %p990 = scmp.ne.s32.totalorder %s981, %s982
      %p991 = scmp.eq.s32.totalorder %s121, 0
      %p992 = por %p990, %p991
      %p993 = scmp.ne.s32.totalorder %s981, %s982
      %p994 = scmp.eq.s32.totalorder %s122, 1
      %p995 = por %p993, %p994
      %p997 = scmp.ne.s32.totalorder %s982, %s996
      %p998 = scmp.eq.s32.totalorder %s122, 0
      %p999 = por %p997, %p998
      %s1001 = sadd.s32 %s1000, 1
      %p1004 = scmp.eq.s32.totalorder %s116, 1
      %p1005 = scmp.ne.s32.totalorder %s1000, %s1002
      %p1006 = scmp.eq.s32.totalorder %s116, 0
      %p1007 = por %p1005, %p1006
      %p1008 = scmp.ne.s32.totalorder %s1000, %s1002
      %p1009 = scmp.eq.s32.totalorder %s121, 1
      %p1010 = por %p1008, %p1009
      %p1011 = scmp.ne.s32.totalorder %s1002, %s1003
      %p1012 = scmp.eq.s32.totalorder %s121, 0
      %p1013 = por %p1011, %p1012
      %p1014 = scmp.ne.s32.totalorder %s1002, %s1003
      %p1015 = scmp.eq.s32.totalorder %s122, 1
      %p1016 = por %p1014, %p1015
      %p1018 = scmp.ne.s32.totalorder %s1003, %s1017
      %p1019 = scmp.eq.s32.totalorder %s122, 0
      %p1020 = por %p1018, %p1019
      %s1022 = sadd.s32 %s1021, 1
      %p1025 = scmp.eq.s32.totalorder %s116, 1
      %p1026 = scmp.ne.s32.totalorder %s1021, %s1023
      %p1027 = scmp.eq.s32.totalorder %s116, 0
      %p1028 = por %p1026, %p1027
      %p1029 = scmp.ne.s32.totalorder %s1021, %s1023
      %p1030 = scmp.eq.s32.totalorder %s121, 1
      %p1031 = por %p1029, %p1030
      %p1032 = scmp.ne.s32.totalorder %s1023, %s1024
      %p1033 = scmp.eq.s32.totalorder %s121, 0
      %p1034 = por %p1032, %p1033
      %p1035 = scmp.ne.s32.totalorder %s1023, %s1024
      %p1036 = scmp.eq.s32.totalorder %s122, 1
      %p1037 = por %p1035, %p1036
      %p1039 = scmp.ne.s32.totalorder %s1024, %s1038
      %p1040 = scmp.eq.s32.totalorder %s122, 0
      %p1041 = por %p1039, %p1040
      %s1043 = sadd.s32 %s1042, 1
      %p1046 = scmp.eq.s32.totalorder %s116, 1
      %p1047 = scmp.ne.s32.totalorder %s1042, %s1044
      %p1048 = scmp.eq.s32.totalorder %s116, 0
      %p1049 = por %p1047, %p1048
      %p1050 = scmp.ne.s32.totalorder %s1042, %s1044
      %p1051 = scmp.eq.s32.totalorder %s121, 1
      %p1052 = por %p1050, %p1051
      %p1053 = scmp.ne.s32.totalorder %s1044, %s1045
      %p1054 = scmp.eq.s32.totalorder %s121, 0
      %p1055 = por %p1053, %p1054
      %p1056 = scmp.ne.s32.totalorder %s1044, %s1045
      %p1057 = scmp.eq.s32.totalorder %s122, 1
      %p1058 = por %p1056, %p1057
      %p1060 = scmp.ne.s32.totalorder %s1045, %s1059
      %p1061 = scmp.eq.s32.totalorder %s122, 0
      %p1062 = por %p1060, %p1061
      %s1064 = sadd.s32 %s1063, 1
      %p1067 = scmp.eq.s32.totalorder %s116, 1
      %p1068 = scmp.ne.s32.totalorder %s1063, %s1065
      %p1069 = scmp.eq.s32.totalorder %s116, 0
      %p1070 = por %p1068, %p1069
      %p1071 = scmp.ne.s32.totalorder %s1063, %s1065
      %p1072 = scmp.eq.s32.totalorder %s121, 1
      %p1073 = por %p1071, %p1072
      %p1074 = scmp.ne.s32.totalorder %s1065, %s1066
      %p1075 = scmp.eq.s32.totalorder %s121, 0
      %p1076 = por %p1074, %p1075
      %p1077 = scmp.ne.s32.totalorder %s1065, %s1066
      %p1078 = scmp.eq.s32.totalorder %s122, 1
      %p1079 = por %p1077, %p1078
      %p1081 = scmp.ne.s32.totalorder %s1066, %s1080
      %p1082 = scmp.eq.s32.totalorder %s122, 0
      %p1083 = por %p1081, %p1082
      %s1085 = sadd.s32 %s1084, 1
      %p1088 = scmp.eq.s32.totalorder %s116, 1
      %p1089 = scmp.ne.s32.totalorder %s1084, %s1086
      %p1090 = scmp.eq.s32.totalorder %s116, 0
      %p1091 = por %p1089, %p1090
      %p1092 = scmp.ne.s32.totalorder %s1084, %s1086
      %p1093 = scmp.eq.s32.totalorder %s121, 1
      %p1094 = por %p1092, %p1093
      %p1095 = scmp.ne.s32.totalorder %s1086, %s1087
      %p1096 = scmp.eq.s32.totalorder %s121, 0
      %p1097 = por %p1095, %p1096
      %p1098 = scmp.ne.s32.totalorder %s1086, %s1087
      %p1099 = scmp.eq.s32.totalorder %s122, 1
      %p1100 = por %p1098, %p1099
      %p1102 = scmp.ne.s32.totalorder %s1087, %s1101
      %p1103 = scmp.eq.s32.totalorder %s122, 0
      %p1104 = por %p1102, %p1103
      %s1106 = sadd.s32 %s1105, 1
      %p1109 = scmp.eq.s32.totalorder %s116, 1
      %p1110 = scmp.ne.s32.totalorder %s1105, %s1107
      %p1111 = scmp.eq.s32.totalorder %s116, 0
      %p1112 = por %p1110, %p1111
      %p1113 = scmp.ne.s32.totalorder %s1105, %s1107
      %p1114 = scmp.eq.s32.totalorder %s121, 1
      %p1115 = por %p1113, %p1114
      %p1116 = scmp.ne.s32.totalorder %s1107, %s1108
      %p1117 = scmp.eq.s32.totalorder %s121, 0
      %p1118 = por %p1116, %p1117
      %p1119 = scmp.ne.s32.totalorder %s1107, %s1108
      %p1120 = scmp.eq.s32.totalorder %s122, 1
      %p1121 = por %p1119, %p1120
      %p1123 = scmp.ne.s32.totalorder %s1108, %s1122
      %p1124 = scmp.eq.s32.totalorder %s122, 0
      %p1125 = por %p1123, %p1124
      %s1127 = sadd.s32 %s1126, 1
      %p1130 = scmp.eq.s32.totalorder %s116, 1
      %p1131 = scmp.ne.s32.totalorder %s1126, %s1128
      %p1132 = scmp.eq.s32.totalorder %s116, 0
      %p1133 = por %p1131, %p1132
      %p1134 = scmp.ne.s32.totalorder %s1126, %s1128
      %p1135 = scmp.eq.s32.totalorder %s121, 1
      %p1136 = por %p1134, %p1135
      %p1137 = scmp.ne.s32.totalorder %s1128, %s1129
      %p1138 = scmp.eq.s32.totalorder %s121, 0
      %p1139 = por %p1137, %p1138
      %p1140 = scmp.ne.s32.totalorder %s1128, %s1129
      %p1141 = scmp.eq.s32.totalorder %s122, 1
      %p1142 = por %p1140, %p1141
      %p1144 = scmp.ne.s32.totalorder %s1129, %s1143
      %p1145 = scmp.eq.s32.totalorder %s122, 0
      %p1146 = por %p1144, %p1145
      %s1148 = sadd.s32 %s1147, 1
      %p1151 = scmp.eq.s32.totalorder %s116, 1
      %p1152 = scmp.ne.s32.totalorder %s1147, %s1149
      %p1153 = scmp.eq.s32.totalorder %s116, 0
      %p1154 = por %p1152, %p1153
      %p1155 = scmp.ne.s32.totalorder %s1147, %s1149
      %p1156 = scmp.eq.s32.totalorder %s121, 1
      %p1157 = por %p1155, %p1156
      %p1158 = scmp.ne.s32.totalorder %s1149, %s1150
      %p1159 = scmp.eq.s32.totalorder %s121, 0
      %p1160 = por %p1158, %p1159
      %p1161 = scmp.ne.s32.totalorder %s1149, %s1150
      %p1162 = scmp.eq.s32.totalorder %s122, 1
      %p1163 = por %p1161, %p1162
      %p1165 = scmp.ne.s32.totalorder %s1150, %s1164
      %p1166 = scmp.eq.s32.totalorder %s122, 0
      %p1167 = por %p1165, %p1166
      %s1168 = ssub.s32 %s116, %s123
      %p1169 = scmp.eq.s32.totalorder %s1168, 0
      %s1171 = sadd.s32 %s1170, 1
      %s1172 = scalar_select %p1169, %s1170, %s1171
      %p1175 = pneg %p1169
      %p1176 = scmp.eq.s32.totalorder %s116, 1
      %p1177 = por %p1175, %p1176
      %p1178 = scmp.ne.s32.totalorder %s1170, %s1173
      %p1179 = scmp.eq.s32.totalorder %s116, 0
      %p1180 = por %p1178, %p1179
      %p1181 = scmp.ne.s32.totalorder %s1170, %s1173
      %p1182 = scmp.eq.s32.totalorder %s121, 1
      %p1183 = por %p1181, %p1182
      %p1184 = scmp.ne.s32.totalorder %s1173, %s1174
      %p1185 = scmp.eq.s32.totalorder %s121, 0
      %p1186 = por %p1184, %p1185
      %p1187 = scmp.ne.s32.totalorder %s1173, %s1174
      %p1188 = scmp.eq.s32.totalorder %s122, 1
      %p1189 = por %p1187, %p1188
      %p1191 = scmp.ne.s32.totalorder %s1174, %s1190
      %p1192 = scmp.eq.s32.totalorder %s122, 0
      %p1193 = por %p1191, %p1192
      %p1194 = scmp.le.s32.totalorder 1, %s116
      %p1195 = scmp.lt.s32.totalorder %s116, 3
      %p1196 = pnand %p1194, %p1195
      %p1197 = pneg %p1196
      // Predicated region
      $region9: #{tpu_custom_call.1} parent=5 // pred_check
        _
      $region10: #{tpu_custom_call.1} parent=5 // pred_check_branch
        %1199 = sbr.rel (%p1196) target = $region12
      $region11: #{tpu_custom_call.1} parent=5 // pred_region
        %s1200 = ssub.s32 %s116, 1
        // Predicated region
        $region13: #{tpu_custom_call.1} parent=11 // pred_check
          %p1201 = pneg %p215
        $region14: #{tpu_custom_call.1} parent=11 // pred_check_branch
          %1203 = sbr.rel (%p1201) target = $region16
        $region15: #{tpu_custom_call.1} parent=11 // pred_region
          %s1205 = ssub.s32 256, 256
          %1206 = vsyncadd [#allocation4], %s1205
          %s1207 = sshll.u32 [#allocation3], 4
          %s1208 = int_to_ptr.vmem [resolvable:$true] %s1207
          %1213 = dma.hbm_to_vmem [thread:$0]  %s7, 256, %s1208, [#allocation4], 128, 128, 8
        $region16: #{tpu_custom_call.1} parent=11 // pred_fallthru
          _
        // Predicated region
        $region17: #{tpu_custom_call.1} parent=11 // pred_check
          %p1214 = pneg %p236
        $region18: #{tpu_custom_call.1} parent=11 // pred_check_branch
          %1216 = sbr.rel (%p1214) target = $region20
        $region19: #{tpu_custom_call.1} parent=11 // pred_region
          %s1218 = ssub.s32 16, 16
          %1219 = vsyncadd [#allocation7], %s1218
          %s1221 = sshll.u32 [#allocation6], 4
          %s1222 = int_to_ptr.vmem [resolvable:$true] %s1221
          %1224 = dma.hbm_to_vmem [thread:$0]  %s9, 16, %s1222, [#allocation7]
        $region20: #{tpu_custom_call.1} parent=11 // pred_fallthru
          _
        // Predicated region
        $region21: #{tpu_custom_call.1} parent=11 // pred_check
          %p1225 = pneg %p257
        $region22: #{tpu_custom_call.1} parent=11 // pred_check_branch
          %1227 = sbr.rel (%p1225) target = $region24
        $region23: #{tpu_custom_call.1} parent=11 // pred_region
          _
        $region24: #{tpu_custom_call.1} parent=11 // pred_fallthru
          _
        // Predicated region
        $region25: #{tpu_custom_call.1} parent=11 // pred_check
          %p1228 = pneg %p278
        $region26: #{tpu_custom_call.1} parent=11 // pred_check_branch
          %1230 = sbr.rel (%p1228) target = $region28
        $region27: #{tpu_custom_call.1} parent=11 // pred_region
          %s1232 = ssub.s32 16, 16
          %1233 = vsyncadd [#allocation7], %s1232
          %s1235 = sshll.u32 [#allocation8], 4
          %s1236 = int_to_ptr.vmem [resolvable:$true] %s1235
          %1238 = dma.hbm_to_vmem [thread:$0]  %s13, 16, %s1236, [#allocation7]
        $region28: #{tpu_custom_call.1} parent=11 // pred_fallthru
          _
        // Predicated region
        $region29: #{tpu_custom_call.1} parent=11 // pred_check
          %p1239 = pneg %p299
        $region30: #{tpu_custom_call.1} parent=11 // pred_check_branch
          %1241 = sbr.rel (%p1239) target = $region32
        $region31: #{tpu_custom_call.1} parent=11 // pred_region
          _
        $region32: #{tpu_custom_call.1} parent=11 // pred_fallthru
          _
        // Predicated region
        $region33: #{tpu_custom_call.1} parent=11 // pred_check
          %p1242 = pneg %p320
        $region34: #{tpu_custom_call.1} parent=11 // pred_check_branch
          %1244 = sbr.rel (%p1242) target = $region36
        $region35: #{tpu_custom_call.1} parent=11 // pred_region
          _
        $region36: #{tpu_custom_call.1} parent=11 // pred_fallthru
          _
        // Predicated region
        $region37: #{tpu_custom_call.1} parent=11 // pred_check
          %p1245 = pneg %p341
        $region38: #{tpu_custom_call.1} parent=11 // pred_check_branch
          %1247 = sbr.rel (%p1245) target = $region40
        $region39: #{tpu_custom_call.1} parent=11 // pred_region
          %s1249 = ssub.s32 16, 16
          %1250 = vsyncadd [#allocation10], %s1249
          %s1252 = sshll.u32 [#allocation9], 4
          %s1253 = int_to_ptr.vmem [resolvable:$true] %s1252
          %1255 = dma.hbm_to_vmem [thread:$0]  %s19, 16, %s1253, [#allocation10]
        $region40: #{tpu_custom_call.1} parent=11 // pred_fallthru
          _
        // Predicated region
        $region41: #{tpu_custom_call.1} parent=11 // pred_check
          %p1256 = pneg %p362
        $region42: #{tpu_custom_call.1} parent=11 // pred_check_branch
          %1258 = sbr.rel (%p1256) target = $region44
        $region43: #{tpu_custom_call.1} parent=11 // pred_region
          _
        $region44: #{tpu_custom_call.1} parent=11 // pred_fallthru
          _
        // Predicated region
        $region45: #{tpu_custom_call.1} parent=11 // pred_check
          %p1259 = pneg %p383
        $region46: #{tpu_custom_call.1} parent=11 // pred_check_branch
          %1261 = sbr.rel (%p1259) target = $region48
        $region47: #{tpu_custom_call.1} parent=11 // pred_region
          %s1263 = ssub.s32 16, 16
          %1264 = vsyncadd [#allocation10], %s1263
          %s1266 = sshll.u32 [#allocation11], 4
          %s1267 = int_to_ptr.vmem [resolvable:$true] %s1266
          %1269 = dma.hbm_to_vmem [thread:$0]  %s23, 16, %s1267, [#allocation10]
        $region48: #{tpu_custom_call.1} parent=11 // pred_fallthru
          _
        // Predicated region
        $region49: #{tpu_custom_call.1} parent=11 // pred_check
          %p1270 = pneg %p404
        $region50: #{tpu_custom_call.1} parent=11 // pred_check_branch
          %1272 = sbr.rel (%p1270) target = $region52
        $region51: #{tpu_custom_call.1} parent=11 // pred_region
          _
        $region52: #{tpu_custom_call.1} parent=11 // pred_fallthru
          _
        // Predicated region
        $region53: #{tpu_custom_call.1} parent=11 // pred_check
          %p1273 = pneg %p425
        $region54: #{tpu_custom_call.1} parent=11 // pred_check_branch
          %1275 = sbr.rel (%p1273) target = $region56
        $region55: #{tpu_custom_call.1} parent=11 // pred_region
          %s1277 = ssub.s32 16, 16
          %1278 = vsyncadd [#allocation13], %s1277
          %s1280 = sshll.u32 [#allocation12], 4
          %s1281 = int_to_ptr.vmem [resolvable:$true] %s1280
          %1283 = dma.hbm_to_vmem [thread:$0]  %s27, 16, %s1281, [#allocation13]
        $region56: #{tpu_custom_call.1} parent=11 // pred_fallthru
          _
        // Predicated region
        $region57: #{tpu_custom_call.1} parent=11 // pred_check
          %p1284 = pneg %p446
        $region58: #{tpu_custom_call.1} parent=11 // pred_check_branch
          %1286 = sbr.rel (%p1284) target = $region60
        $region59: #{tpu_custom_call.1} parent=11 // pred_region
          %s1288 = ssub.s32 16, 16
          %1289 = vsyncadd [#allocation13], %s1288
          %s1291 = sshll.u32 [#allocation14], 4
          %s1292 = int_to_ptr.vmem [resolvable:$true] %s1291
          %1294 = dma.hbm_to_vmem [thread:$0]  %s29, 16, %s1292, [#allocation13]
        $region60: #{tpu_custom_call.1} parent=11 // pred_fallthru
          _
        // Predicated region
        $region61: #{tpu_custom_call.1} parent=11 // pred_check
          %p1295 = pneg %p467
        $region62: #{tpu_custom_call.1} parent=11 // pred_check_branch
          %1297 = sbr.rel (%p1295) target = $region64
        $region63: #{tpu_custom_call.1} parent=11 // pred_region
          _
        $region64: #{tpu_custom_call.1} parent=11 // pred_fallthru
          _
        // Predicated region
        $region65: #{tpu_custom_call.1} parent=11 // pred_check
          %p1298 = pneg %p488
        $region66: #{tpu_custom_call.1} parent=11 // pred_check_branch
          %1300 = sbr.rel (%p1298) target = $region68
        $region67: #{tpu_custom_call.1} parent=11 // pred_region
          %s1302 = ssub.s32 16, 16
          %1303 = vsyncadd [#allocation16], %s1302
          %s1305 = sshll.u32 [#allocation15], 4
          %s1306 = int_to_ptr.vmem [resolvable:$true] %s1305
          %1308 = dma.hbm_to_vmem [thread:$0]  %s33, 16, %s1306, [#allocation16]
        $region68: #{tpu_custom_call.1} parent=11 // pred_fallthru
          _
        // Predicated region
        $region69: #{tpu_custom_call.1} parent=11 // pred_check
          %p1309 = pneg %p509
        $region70: #{tpu_custom_call.1} parent=11 // pred_check_branch
          %1311 = sbr.rel (%p1309) target = $region72
        $region71: #{tpu_custom_call.1} parent=11 // pred_region
          %s1313 = ssub.s32 128, 128
          %1314 = vsyncadd [#allocation16], %s1313
          %s1316 = sshll.u32 [#allocation17], 4
          %s1317 = int_to_ptr.vmem [resolvable:$true] %s1316
          %1319 = dma.hbm_to_vmem [thread:$0]  %s35, 128, %s1317, [#allocation16]
        $region72: #{tpu_custom_call.1} parent=11 // pred_fallthru
          _
        // Predicated region
        $region73: #{tpu_custom_call.1} parent=11 // pred_check
          %p1320 = pneg %p530
        $region74: #{tpu_custom_call.1} parent=11 // pred_check_branch
          %1322 = sbr.rel (%p1320) target = $region76
        $region75: #{tpu_custom_call.1} parent=11 // pred_region
          %s1324 = ssub.s32 16, 16
          %1325 = vsyncadd [#allocation19], %s1324
          %s1327 = sshll.u32 [#allocation18], 4
          %s1328 = int_to_ptr.vmem [resolvable:$true] %s1327
          %1330 = dma.hbm_to_vmem [thread:$0]  %s37, 16, %s1328, [#allocation19]
        $region76: #{tpu_custom_call.1} parent=11 // pred_fallthru
          _
        // Predicated region
        $region77: #{tpu_custom_call.1} parent=11 // pred_check
          %p1331 = pneg %p551
        $region78: #{tpu_custom_call.1} parent=11 // pred_check_branch
          %1333 = sbr.rel (%p1331) target = $region80
        $region79: #{tpu_custom_call.1} parent=11 // pred_region
          _
        $region80: #{tpu_custom_call.1} parent=11 // pred_fallthru
          _
        // Predicated region
        $region81: #{tpu_custom_call.1} parent=11 // pred_check
          %p1334 = pneg %p572
        $region82: #{tpu_custom_call.1} parent=11 // pred_check_branch
          %1336 = sbr.rel (%p1334) target = $region84
        $region83: #{tpu_custom_call.1} parent=11 // pred_region
          _
        $region84: #{tpu_custom_call.1} parent=11 // pred_fallthru
          _
        // Predicated region
        $region85: #{tpu_custom_call.1} parent=11 // pred_check
          %p1337 = pneg %p593
        $region86: #{tpu_custom_call.1} parent=11 // pred_check_branch
          %1339 = sbr.rel (%p1337) target = $region88
        $region87: #{tpu_custom_call.1} parent=11 // pred_region
          _
        $region88: #{tpu_custom_call.1} parent=11 // pred_fallthru
          _
        // Predicated region
        $region89: #{tpu_custom_call.1} parent=11 // pred_check
          %p1340 = pneg %p614
        $region90: #{tpu_custom_call.1} parent=11 // pred_check_branch
          %1342 = sbr.rel (%p1340) target = $region92
        $region91: #{tpu_custom_call.1} parent=11 // pred_region
          _
        $region92: #{tpu_custom_call.1} parent=11 // pred_fallthru
          _
        // Predicated region
        $region93: #{tpu_custom_call.1} parent=11 // pred_check
          %p1343 = pneg %p635
        $region94: #{tpu_custom_call.1} parent=11 // pred_check_branch
          %1345 = sbr.rel (%p1343) target = $region96
        $region95: #{tpu_custom_call.1} parent=11 // pred_region
          _
        $region96: #{tpu_custom_call.1} parent=11 // pred_fallthru
          _
        // Predicated region
        $region97: #{tpu_custom_call.1} parent=11 // pred_check
          %p1346 = pneg %p656
        $region98: #{tpu_custom_call.1} parent=11 // pred_check_branch
          %1348 = sbr.rel (%p1346) target = $region100
        $region99: #{tpu_custom_call.1} parent=11 // pred_region
          _
        $region100: #{tpu_custom_call.1} parent=11 // pred_fallthru
          _
        // Predicated region
        $region101: #{tpu_custom_call.1} parent=11 // pred_check
          %p1349 = pneg %p677
        $region102: #{tpu_custom_call.1} parent=11 // pred_check_branch
          %1351 = sbr.rel (%p1349) target = $region104
        $region103: #{tpu_custom_call.1} parent=11 // pred_region
          _
        $region104: #{tpu_custom_call.1} parent=11 // pred_fallthru
          _
        // Predicated region
        $region105: #{tpu_custom_call.1} parent=11 // pred_check
          %p1352 = pneg %p698
        $region106: #{tpu_custom_call.1} parent=11 // pred_check_branch
          %1354 = sbr.rel (%p1352) target = $region108
        $region107: #{tpu_custom_call.1} parent=11 // pred_region
          %s1356 = ssub.s32 16, 16
          %1357 = vsyncadd [#allocation19], %s1356
          %s1359 = sshll.u32 [#allocation20], 4
          %s1360 = int_to_ptr.vmem [resolvable:$true] %s1359
          %1362 = dma.hbm_to_vmem [thread:$0]  %s53, 16, %s1360, [#allocation19]
        $region108: #{tpu_custom_call.1} parent=11 // pred_fallthru
          _
        // Predicated region
        $region109: #{tpu_custom_call.1} parent=11 // pred_check
          %p1363 = pneg %p719
        $region110: #{tpu_custom_call.1} parent=11 // pred_check_branch
          %1365 = sbr.rel (%p1363) target = $region112
        $region111: #{tpu_custom_call.1} parent=11 // pred_region
          _
        $region112: #{tpu_custom_call.1} parent=11 // pred_fallthru
          _
        // Predicated region
        $region113: #{tpu_custom_call.1} parent=11 // pred_check
          %p1366 = pneg %p740
        $region114: #{tpu_custom_call.1} parent=11 // pred_check_branch
          %1368 = sbr.rel (%p1366) target = $region116
        $region115: #{tpu_custom_call.1} parent=11 // pred_region
          %s1370 = ssub.s32 16, 16
          %1371 = vsyncadd [#allocation22], %s1370
          %s1373 = sshll.u32 [#allocation21], 4
          %s1374 = int_to_ptr.vmem [resolvable:$true] %s1373
          %1376 = dma.hbm_to_vmem [thread:$0]  %s57, 16, %s1374, [#allocation22]
        $region116: #{tpu_custom_call.1} parent=11 // pred_fallthru
          _
        // Predicated region
        $region117: #{tpu_custom_call.1} parent=11 // pred_check
          %p1377 = pneg %p761
        $region118: #{tpu_custom_call.1} parent=11 // pred_check_branch
          %1379 = sbr.rel (%p1377) target = $region120
        $region119: #{tpu_custom_call.1} parent=11 // pred_region
          %s1381 = ssub.s32 128, 128
          %1382 = vsyncadd [#allocation22], %s1381
          %s1384 = sshll.u32 [#allocation23], 4
          %s1385 = int_to_ptr.vmem [resolvable:$true] %s1384
          %1387 = dma.hbm_to_vmem [thread:$0]  %s59, 128, %s1385, [#allocation22]
        $region120: #{tpu_custom_call.1} parent=11 // pred_fallthru
          _
        // Predicated region
        $region121: #{tpu_custom_call.1} parent=11 // pred_check
          %p1388 = pneg %p782
        $region122: #{tpu_custom_call.1} parent=11 // pred_check_branch
          %1390 = sbr.rel (%p1388) target = $region124
        $region123: #{tpu_custom_call.1} parent=11 // pred_region
          %s1392 = ssub.s32 16, 16
          %1393 = vsyncadd [#allocation25], %s1392
          %s1395 = sshll.u32 [#allocation24], 4
          %s1396 = int_to_ptr.vmem [resolvable:$true] %s1395
          %1398 = dma.hbm_to_vmem [thread:$0]  %s61, 16, %s1396, [#allocation25]
        $region124: #{tpu_custom_call.1} parent=11 // pred_fallthru
          _
        // Predicated region
        $region125: #{tpu_custom_call.1} parent=11 // pred_check
          %p1399 = pneg %p803
        $region126: #{tpu_custom_call.1} parent=11 // pred_check_branch
          %1401 = sbr.rel (%p1399) target = $region128
        $region127: #{tpu_custom_call.1} parent=11 // pred_region
          _
        $region128: #{tpu_custom_call.1} parent=11 // pred_fallthru
          _
        // Predicated region
        $region129: #{tpu_custom_call.1} parent=11 // pred_check
          %p1402 = pneg %p824
        $region130: #{tpu_custom_call.1} parent=11 // pred_check_branch
          %1404 = sbr.rel (%p1402) target = $region132
        $region131: #{tpu_custom_call.1} parent=11 // pred_region
          _
        $region132: #{tpu_custom_call.1} parent=11 // pred_fallthru
          _
        // Predicated region
        $region133: #{tpu_custom_call.1} parent=11 // pred_check
          %p1405 = pneg %p845
        $region134: #{tpu_custom_call.1} parent=11 // pred_check_branch
          %1407 = sbr.rel (%p1405) target = $region136
        $region135: #{tpu_custom_call.1} parent=11 // pred_region
          _
        $region136: #{tpu_custom_call.1} parent=11 // pred_fallthru
          _
        // Predicated region
        $region137: #{tpu_custom_call.1} parent=11 // pred_check
          %p1408 = pneg %p866
        $region138: #{tpu_custom_call.1} parent=11 // pred_check_branch
          %1410 = sbr.rel (%p1408) target = $region140
        $region139: #{tpu_custom_call.1} parent=11 // pred_region
          _
        $region140: #{tpu_custom_call.1} parent=11 // pred_fallthru
          _
        // Predicated region
        $region141: #{tpu_custom_call.1} parent=11 // pred_check
          %p1411 = pneg %p887
        $region142: #{tpu_custom_call.1} parent=11 // pred_check_branch
          %1413 = sbr.rel (%p1411) target = $region144
        $region143: #{tpu_custom_call.1} parent=11 // pred_region
          _
        $region144: #{tpu_custom_call.1} parent=11 // pred_fallthru
          _
        // Predicated region
        $region145: #{tpu_custom_call.1} parent=11 // pred_check
          %p1414 = pneg %p908
        $region146: #{tpu_custom_call.1} parent=11 // pred_check_branch
          %1416 = sbr.rel (%p1414) target = $region148
        $region147: #{tpu_custom_call.1} parent=11 // pred_region
          _
        $region148: #{tpu_custom_call.1} parent=11 // pred_fallthru
          _
        // Predicated region
        $region149: #{tpu_custom_call.1} parent=11 // pred_check
          %p1417 = pneg %p929
        $region150: #{tpu_custom_call.1} parent=11 // pred_check_branch
          %1419 = sbr.rel (%p1417) target = $region152
        $region151: #{tpu_custom_call.1} parent=11 // pred_region
          _
        $region152: #{tpu_custom_call.1} parent=11 // pred_fallthru
          _
        // Predicated region
        $region153: #{tpu_custom_call.1} parent=11 // pred_check
          %p1420 = pneg %p950
        $region154: #{tpu_custom_call.1} parent=11 // pred_check_branch
          %1422 = sbr.rel (%p1420) target = $region156
        $region155: #{tpu_custom_call.1} parent=11 // pred_region
          _
        $region156: #{tpu_custom_call.1} parent=11 // pred_fallthru
          _
        // Predicated region
        $region157: #{tpu_custom_call.1} parent=11 // pred_check
          %p1423 = pneg %p971
        $region158: #{tpu_custom_call.1} parent=11 // pred_check_branch
          %1425 = sbr.rel (%p1423) target = $region160
        $region159: #{tpu_custom_call.1} parent=11 // pred_region
          _
        $region160: #{tpu_custom_call.1} parent=11 // pred_fallthru
          _
        // Predicated region
        $region161: #{tpu_custom_call.1} parent=11 // pred_check
          %p1426 = pneg %p992
        $region162: #{tpu_custom_call.1} parent=11 // pred_check_branch
          %1428 = sbr.rel (%p1426) target = $region164
        $region163: #{tpu_custom_call.1} parent=11 // pred_region
          _
        $region164: #{tpu_custom_call.1} parent=11 // pred_fallthru
          _
        // Predicated region
        $region165: #{tpu_custom_call.1} parent=11 // pred_check
          %p1429 = pneg %p1013
        $region166: #{tpu_custom_call.1} parent=11 // pred_check_branch
          %1431 = sbr.rel (%p1429) target = $region168
        $region167: #{tpu_custom_call.1} parent=11 // pred_region
          _
        $region168: #{tpu_custom_call.1} parent=11 // pred_fallthru
          _
        // Predicated region
        $region169: #{tpu_custom_call.1} parent=11 // pred_check
          %p1432 = pneg %p1034
        $region170: #{tpu_custom_call.1} parent=11 // pred_check_branch
          %1434 = sbr.rel (%p1432) target = $region172
        $region171: #{tpu_custom_call.1} parent=11 // pred_region
          _
        $region172: #{tpu_custom_call.1} parent=11 // pred_fallthru
          _
        // Predicated region
        $region173: #{tpu_custom_call.1} parent=11 // pred_check
          %p1435 = pneg %p1055
        $region174: #{tpu_custom_call.1} parent=11 // pred_check_branch
          %1437 = sbr.rel (%p1435) target = $region176
        $region175: #{tpu_custom_call.1} parent=11 // pred_region
          _
        $region176: #{tpu_custom_call.1} parent=11 // pred_fallthru
          _
        // Predicated region
        $region177: #{tpu_custom_call.1} parent=11 // pred_check
          %p1438 = pneg %p1076
        $region178: #{tpu_custom_call.1} parent=11 // pred_check_branch
          %1440 = sbr.rel (%p1438) target = $region180
        $region179: #{tpu_custom_call.1} parent=11 // pred_region
          _
        $region180: #{tpu_custom_call.1} parent=11 // pred_fallthru
          _
        // Predicated region
        $region181: #{tpu_custom_call.1} parent=11 // pred_check
          %p1441 = pneg %p1097
        $region182: #{tpu_custom_call.1} parent=11 // pred_check_branch
          %1443 = sbr.rel (%p1441) target = $region184
        $region183: #{tpu_custom_call.1} parent=11 // pred_region
          _
        $region184: #{tpu_custom_call.1} parent=11 // pred_fallthru
          _
        // Predicated region
        $region185: #{tpu_custom_call.1} parent=11 // pred_check
          %p1444 = pneg %p1118
        $region186: #{tpu_custom_call.1} parent=11 // pred_check_branch
          %1446 = sbr.rel (%p1444) target = $region188
        $region187: #{tpu_custom_call.1} parent=11 // pred_region
          _
        $region188: #{tpu_custom_call.1} parent=11 // pred_fallthru
          _
      $region12: #{tpu_custom_call.1} parent=5 // pred_fallthru
        _
      %p1447 = scmp.lt.s32.totalorder %s116, 2
      // Predicated region
      $region189: #{tpu_custom_call.1} parent=5 // pred_check
        %p1448 = pneg %p1447
      $region190: #{tpu_custom_call.1} parent=5 // pred_check_branch
        %1450 = sbr.rel (%p1448) target = $region192
      $region191: #{tpu_custom_call.1} parent=5 // pred_region
        // Predicated region
        $region193: #{tpu_custom_call.1} parent=191 // pred_check
          %p1451 = pneg %p136
        $region194: #{tpu_custom_call.1} parent=191 // pred_check_branch
          %1453 = sbr.rel (%p1451) target = $region196
        $region195: #{tpu_custom_call.1} parent=191 // pred_region
          %s1454 = smul.u32 8, %s116
          %p1455 = scmp.lt.s32.totalorder %s1454, 15
          %s1456 = scalar_select %p1455, %s1454, 15
          %s1457 = smul.addr %s1456, 2
          %s1458 = scalar_lea.vmem %s1, %s1457
          %s1459 = smul.u32 8, %s116
        $region196: #{tpu_custom_call.1} parent=191 // pred_fallthru
          _
        // Predicated region
        $region197: #{tpu_custom_call.1} parent=191 // pred_check
          %p1460 = pneg %p162
        $region198: #{tpu_custom_call.1} parent=191 // pred_check_branch
          %1462 = sbr.rel (%p1460) target = $region200
        $region199: #{tpu_custom_call.1} parent=191 // pred_region
          %s1463 = smul.u32 8, %s116
          %p1464 = scmp.lt.s32.totalorder %s1463, 15
          %s1465 = scalar_select %p1464, %s1463, 15
          %s1466 = smul.addr %s1465, 2
          %s1467 = scalar_lea.vmem %s3, %s1466
          %s1468 = smul.u32 8, %s116
        $region200: #{tpu_custom_call.1} parent=191 // pred_fallthru
          _
        // Predicated region
        $region201: #{tpu_custom_call.1} parent=191 // pred_check
          %p1469 = pneg %p188
        $region202: #{tpu_custom_call.1} parent=191 // pred_check_branch
          %1471 = sbr.rel (%p1469) target = $region204
        $region203: #{tpu_custom_call.1} parent=191 // pred_region
          %s1472 = smul.u32 8, %s116
          %p1473 = scmp.lt.s32.totalorder %s1472, 15
          %s1474 = scalar_select %p1473, %s1472, 15
          %s1475 = smul.addr %s1474, 2
          %s1476 = scalar_lea.vmem %s5, %s1475
          %s1477 = smul.u32 8, %s116
        $region204: #{tpu_custom_call.1} parent=191 // pred_fallthru
          _
      $region192: #{tpu_custom_call.1} parent=5 // pred_fallthru
        _
      %p1478 = scmp.le.s32.totalorder 1, %s116
      %p1479 = scmp.lt.s32.totalorder %s116, 3
      %p1480 = pnand %p1478, %p1479
      %p1481 = pneg %p1480
      // Predicated region
      $region205: #{tpu_custom_call.1} parent=5 // pred_check
        _
      $region206: #{tpu_custom_call.1} parent=5 // pred_check_branch
        %1483 = sbr.rel (%p1480) target = $region208
      $region207: #{tpu_custom_call.1} parent=5 // pred_region
        %s1484 = ssub.s32 %s116, 1
        // Predicated region
        $region209: #{tpu_custom_call.1} parent=207 // pred_check
          %p1485 = pneg %p215
        $region210: #{tpu_custom_call.1} parent=207 // pred_check_branch
          %1487 = sbr.rel (%p1485) target = $region212
        $region211: #{tpu_custom_call.1} parent=207 // pred_region
          %1488 = dma.done [#allocation4], 256
        $region212: #{tpu_custom_call.1} parent=207 // pred_fallthru
          _
        // Predicated region
        $region213: #{tpu_custom_call.1} parent=207 // pred_check
          %p1489 = pneg %p236
        $region214: #{tpu_custom_call.1} parent=207 // pred_check_branch
          %1491 = sbr.rel (%p1489) target = $region216
        $region215: #{tpu_custom_call.1} parent=207 // pred_region
          %1492 = dma.done [#allocation7], 16
        $region216: #{tpu_custom_call.1} parent=207 // pred_fallthru
          _
        // Predicated region
        $region217: #{tpu_custom_call.1} parent=207 // pred_check
          %p1493 = pneg %p278
        $region218: #{tpu_custom_call.1} parent=207 // pred_check_branch
          %1495 = sbr.rel (%p1493) target = $region220
        $region219: #{tpu_custom_call.1} parent=207 // pred_region
          %1496 = dma.done [#allocation7], 16
        $region220: #{tpu_custom_call.1} parent=207 // pred_fallthru
          _
        // Predicated region
        $region221: #{tpu_custom_call.1} parent=207 // pred_check
          %p1497 = pneg %p341
        $region222: #{tpu_custom_call.1} parent=207 // pred_check_branch
          %1499 = sbr.rel (%p1497) target = $region224
        $region223: #{tpu_custom_call.1} parent=207 // pred_region
          %1500 = dma.done [#allocation10], 16
        $region224: #{tpu_custom_call.1} parent=207 // pred_fallthru
          _
        // Predicated region
        $region225: #{tpu_custom_call.1} parent=207 // pred_check
          %p1501 = pneg %p383
        $region226: #{tpu_custom_call.1} parent=207 // pred_check_branch
          %1503 = sbr.rel (%p1501) target = $region228
        $region227: #{tpu_custom_call.1} parent=207 // pred_region
          %1504 = dma.done [#allocation10], 16
        $region228: #{tpu_custom_call.1} parent=207 // pred_fallthru
          _
        // Predicated region
        $region229: #{tpu_custom_call.1} parent=207 // pred_check
          %p1505 = pneg %p425
        $region230: #{tpu_custom_call.1} parent=207 // pred_check_branch
          %1507 = sbr.rel (%p1505) target = $region232
        $region231: #{tpu_custom_call.1} parent=207 // pred_region
          %1508 = dma.done [#allocation13], 16
        $region232: #{tpu_custom_call.1} parent=207 // pred_fallthru
          _
        // Predicated region
        $region233: #{tpu_custom_call.1} parent=207 // pred_check
          %p1509 = pneg %p446
        $region234: #{tpu_custom_call.1} parent=207 // pred_check_branch
          %1511 = sbr.rel (%p1509) target = $region236
        $region235: #{tpu_custom_call.1} parent=207 // pred_region
          %1512 = dma.done [#allocation13], 16
        $region236: #{tpu_custom_call.1} parent=207 // pred_fallthru
          _
        // Predicated region
        $region237: #{tpu_custom_call.1} parent=207 // pred_check
          %p1513 = pneg %p488
        $region238: #{tpu_custom_call.1} parent=207 // pred_check_branch
          %1515 = sbr.rel (%p1513) target = $region240
        $region239: #{tpu_custom_call.1} parent=207 // pred_region
          %1516 = dma.done [#allocation16], 16
        $region240: #{tpu_custom_call.1} parent=207 // pred_fallthru
          _
        // Predicated region
        $region241: #{tpu_custom_call.1} parent=207 // pred_check
          %p1517 = pneg %p509
        $region242: #{tpu_custom_call.1} parent=207 // pred_check_branch
          %1519 = sbr.rel (%p1517) target = $region244
        $region243: #{tpu_custom_call.1} parent=207 // pred_region
          %1520 = dma.done [#allocation16], 128
        $region244: #{tpu_custom_call.1} parent=207 // pred_fallthru
          _
        // Predicated region
        $region245: #{tpu_custom_call.1} parent=207 // pred_check
          %p1521 = pneg %p530
        $region246: #{tpu_custom_call.1} parent=207 // pred_check_branch
          %1523 = sbr.rel (%p1521) target = $region248
        $region247: #{tpu_custom_call.1} parent=207 // pred_region
          %1524 = dma.done [#allocation19], 16
        $region248: #{tpu_custom_call.1} parent=207 // pred_fallthru
          _
        // Predicated region
        $region249: #{tpu_custom_call.1} parent=207 // pred_check
          %p1525 = pneg %p698
        $region250: #{tpu_custom_call.1} parent=207 // pred_check_branch
          %1527 = sbr.rel (%p1525) target = $region252
        $region251: #{tpu_custom_call.1} parent=207 // pred_region
          %1528 = dma.done [#allocation19], 16
        $region252: #{tpu_custom_call.1} parent=207 // pred_fallthru
          _
        // Predicated region
        $region253: #{tpu_custom_call.1} parent=207 // pred_check
          %p1529 = pneg %p740
        $region254: #{tpu_custom_call.1} parent=207 // pred_check_branch
          %1531 = sbr.rel (%p1529) target = $region256
        $region255: #{tpu_custom_call.1} parent=207 // pred_region
          %1532 = dma.done [#allocation22], 16
        $region256: #{tpu_custom_call.1} parent=207 // pred_fallthru
          _
        // Predicated region
        $region257: #{tpu_custom_call.1} parent=207 // pred_check
          %p1533 = pneg %p761
        $region258: #{tpu_custom_call.1} parent=207 // pred_check_branch
          %1535 = sbr.rel (%p1533) target = $region260
        $region259: #{tpu_custom_call.1} parent=207 // pred_region
          %1536 = dma.done [#allocation22], 128
        $region260: #{tpu_custom_call.1} parent=207 // pred_fallthru
          _
        // Predicated region
        $region261: #{tpu_custom_call.1} parent=207 // pred_check
          %p1537 = pneg %p782
        $region262: #{tpu_custom_call.1} parent=207 // pred_check_branch
          %1539 = sbr.rel (%p1537) target = $region264
        $region263: #{tpu_custom_call.1} parent=207 // pred_region
          %1540 = dma.done [#allocation25], 16
        $region264: #{tpu_custom_call.1} parent=207 // pred_fallthru
          _
        %s1541 = smul.u32 8, %s121
        %p1542 = scmp.lt.s32.totalorder %s1541, 15
        %s1543 = scalar_select %p1542, %s1541, 15
        %s1544 = smul.addr %s1543, 2
        %s1545 = scalar_lea.vmem %s1, %s1544
        %p1546 = pneg %p142
        %p1547 = pneg %p139
        %s1548 = smul.u32 8, %s121
        %p1549 = scmp.lt.s32.totalorder %s1548, 15
        %s1550 = scalar_select %p1549, %s1548, 15
        %s1551 = smul.addr %s1550, 2
        %s1552 = scalar_lea.vmem %s3, %s1551
        %p1553 = pneg %p168
        %p1554 = pneg %p165
        %s1555 = smul.u32 8, %s121
        %p1556 = scmp.lt.s32.totalorder %s1555, 15
        %s1557 = scalar_select %p1556, %s1555, 15
        %s1558 = smul.addr %s1557, 2
        %s1559 = scalar_lea.vmem %s5, %s1558
        %p1560 = pneg %p194
        %p1561 = pneg %p191
        %p1562 = pneg %p215
        %p1563 = pneg %p212
        %p1564 = pneg %p236
        %p1565 = pneg %p233
        %p1566 = pneg %p257
        %p1567 = pneg %p254
        %p1568 = pneg %p278
        %p1569 = pneg %p275
        %p1570 = pneg %p299
        %p1571 = pneg %p296
        %p1572 = pneg %p320
        %p1573 = pneg %p317
        %p1574 = pneg %p341
        %p1575 = pneg %p338
        %p1576 = pneg %p362
        %p1577 = pneg %p359
        %p1578 = pneg %p383
        %p1579 = pneg %p380
        %p1580 = pneg %p404
        %p1581 = pneg %p401
        %p1582 = pneg %p425
        %p1583 = pneg %p422
        %p1584 = pneg %p446
        %p1585 = pneg %p443
        %p1586 = pneg %p467
        %p1587 = pneg %p464
        %p1588 = pneg %p488
        %p1589 = pneg %p485
        %p1590 = pneg %p509
        %p1591 = pneg %p506
        %p1592 = pneg %p530
        %p1593 = pneg %p527
        %p1594 = pneg %p551
        %p1595 = pneg %p548
        %p1596 = pneg %p572
        %p1597 = pneg %p569
        %p1598 = pneg %p593
        %p1599 = pneg %p590
        %p1600 = pneg %p614
        %p1601 = pneg %p611
        %p1602 = pneg %p635
        %p1603 = pneg %p632
        %p1604 = pneg %p656
        %p1605 = pneg %p653
        %p1606 = pneg %p677
        %p1607 = pneg %p674
        %p1608 = pneg %p698
        %p1609 = pneg %p695
        %p1610 = pneg %p719
        %p1611 = pneg %p716
        %p1612 = pneg %p740
        %p1613 = pneg %p737
        %p1614 = pneg %p761
        %p1615 = pneg %p758
        %p1616 = pneg %p782
        %p1617 = pneg %p779
        %p1618 = pneg %p803
        %p1619 = pneg %p800
        %p1620 = pneg %p824
        %p1621 = pneg %p821
        %p1622 = pneg %p845
        %p1623 = pneg %p842
        %p1624 = pneg %p866
        %p1625 = pneg %p863
        %p1626 = pneg %p887
        %p1627 = pneg %p884
        %p1628 = pneg %p908
        %p1629 = pneg %p905
        %p1630 = pneg %p929
        %p1631 = pneg %p926
        %p1632 = pneg %p950
        %p1633 = pneg %p947
        %p1634 = pneg %p971
        %p1635 = pneg %p968
        %p1636 = pneg %p992
        %p1637 = pneg %p989
        %p1638 = pneg %p1013
        %p1639 = pneg %p1010
        %p1640 = pneg %p1034
        %p1641 = pneg %p1031
        %p1642 = pneg %p1055
        %p1643 = pneg %p1052
        %p1644 = pneg %p1076
        %p1645 = pneg %p1073
        %p1646 = pneg %p1097
        %p1647 = pneg %p1094
        %p1648 = pneg %p1118
        %p1649 = pneg %p1115
        %p1650 = pneg %p1139
        %p1651 = pneg %p1136
        %p1652 = pneg %p1160
        %p1653 = pneg %p1157
        %p1654 = pneg %p1186
        %p1655 = pneg %p1183
        %s1656 = sand.u32 %s121, 1
        %s1657 = scalar_lea.sflag [#allocation5], %s1656
        %s1658 = sand.u32 %s1173, 1
        %s1659 = smul.addr %s1658, 8
        %s1660 = scalar_lea.vmem [#allocation29], %s1659
        %s1661 = smul.u32 8, %s121
        %p1662 = scmp.lt.s32.totalorder %s1661, 15
        %s1663 = scalar_select %p1662, %s1661, 15
        %s1664 = smul.addr %s1663, 2
        %s1665 = scalar_lea.vmem %s1, %s1664
        %s1666 = smul.u32 8, %s121
        %s1667 = smul.u32 8, %s121
        %p1668 = scmp.lt.s32.totalorder %s1667, 15
        %s1669 = scalar_select %p1668, %s1667, 15
        %s1670 = smul.addr %s1669, 2
        %s1671 = scalar_lea.vmem %s3, %s1670
        %s1672 = smul.u32 8, %s121
        %s1673 = smul.u32 8, %s121
        %p1674 = scmp.lt.s32.totalorder %s1673, 15
        %s1675 = scalar_select %p1674, %s1673, 15
        %s1676 = smul.addr %s1675, 2
        %s1677 = scalar_lea.vmem %s5, %s1676
        %s1678 = smul.u32 8, %s121
        %p1679 = scmp.eq.s32.totalorder %s121, 0
        // Predicated region
        $region265: #{tpu_custom_call.1} parent=207 // pred_check
          %p1680 = pneg %p1679
        $region266: #{tpu_custom_call.1} parent=207 // pred_check_branch
          %1682 = sbr.rel (%p1680) target = $region268
        $region267: #{tpu_custom_call.1} parent=207 // pred_region
          %vm1683 = vcmask 254976
          %1684 = vst.msk [vmem:[#allocation2] sm:$0x3] %vm1683, 0.0
          %vm1685 = vcmask 0
          %1686 = vst.msk [vmem:[#allocation26] sm:$0x1] %vm1685, 0.0
          %1687 = vst.msk [vmem:[#allocation27] sm:$0x1] %vm1685, 0.0
        $region268: #{tpu_custom_call.1} parent=207 // pred_fallthru
          _
        %v1688 = vld [vmem:[#allocation2] sm:$0x3]
        loop: start=0, step=1, limit=8
        $region269: #{tpu_custom_call.1} parent=207 // loop_pre_header
          _
        $region270: #{tpu_custom_call.1} parent=207 // loop_header
          %s1690 = sphi 0, %s1694
          %p1691 = scmp.ge.s32.totalorder %s1690, 8
          %v1695 = vphi 0.0, %v4201
          %v1696 = vphi 0.0, %v4203
          %v1697 = vphi 0.0, %v4199
          %v1698 = vphi %v1688, %v4087
        $region271: #{tpu_custom_call.1} parent=207 // loop_header_branch
          %1693 = sbr.rel (%p1691) target = $region275
        $region272: #{tpu_custom_call.1} parent=207 // loop_body
          %s1699 = smul.u32 %s1690, 2
          %s1700 = scalar_lea.vmem %s1665, %s1699
          %v1701 = vld [vmem:[%s1700] sm:$0x3]
          %s1702 = scalar_lea.vmem %s1671, %s1699
          %v1703 = vld [vmem:[%s1702] sm:$0x3]
          %s1704 = scalar_lea.vmem %s1677, %s1699
          %v1705 = vld [vmem:[%s1704] sm:$0x3]
          %v1706 = vld [vmem:[#allocation3] sm:$0xff]
          %v1707 = vld [vmem:[#allocation3 + $0x8] sm:$0xff]
          %v1708 = vld [vmem:[#allocation6] sm:$0x1]
          %v1710 = vlaneseq
          %v1711 = vshrl.u32 %v1710, 7
          %v1712 = vsub.s32 0, %v1711
          %v1713 = vrot.slane %v1708, %v1712
          %vm1715 = vcmask 130048
          %v1717 = vsel %vm1715, %v1701, 0
          %1719 = vmatprep.subr.mxu0 0.0
          %1720 = vmatpush1.msra.mxu0 0.0
          %1721 = vmatprep.subr.mxu0 0.0
          %1722 = vmatpush1.msra.mxu0 0.0
          %1723 = vmatprep.subr.mxu0 0.0
          %1724 = vmatpush1.msra.mxu0 0.0
          %1725 = vmatprep.subr.mxu0 0.0
          %1726 = vmatpush1.msra.mxu0 0.0
          %1727 = vmatprep.subr.mxu0 0.0
          %1728 = vmatpush1.msra.mxu0 0.0
          %1729 = vmatprep.subr.mxu0 0.0
          %1730 = vmatpush1.msra.mxu0 0.0
          %1731 = vmatprep.subr.mxu0 0.0
          %1732 = vmatpush1.msra.mxu0 0.0
          %1733 = vmatprep.subr.mxu0 0.0
          %1734 = vmatpush1.msra.mxu0 0.0
          %1735 = vmatprep.subr.mxu0 0.0
          %1736 = vmatpush1.msra.mxu0 0.0
          %1737 = vmatprep.subr.mxu0 0.0
          %1738 = vmatpush1.msra.mxu0 0.0
          %1739 = vmatprep.subr.mxu0 0.0
          %1740 = vmatpush1.msra.mxu0 0.0
          %1741 = vmatprep.subr.mxu0 0.0
          %1742 = vmatpush1.msra.mxu0 0.0
          %1743 = vmatprep.subr.mxu0 0.0
          %1744 = vmatpush1.msra.mxu0 0.0
          %1745 = vmatprep.subr.mxu0 0.0
          %1746 = vmatpush1.msra.mxu0 0.0
          %1747 = vmatprep.subr.mxu0 0.0
          %1748 = vmatpush1.msra.mxu0 %v1707
          %1749 = vmatprep.subr.mxu0 0.0
          %1750 = vmatpush1.msra.mxu0 %v1706
          %1751 = vmatprep.subr.mxu0 0.0
          %1752 = vmatpush2.msra.mxu0 0.0
          %1753 = vmatprep.subr.mxu0 0.0
          %1754 = vmatpush2.msra.mxu0 0.0
          %1755 = vmatprep.subr.mxu0 0.0
          %1756 = vmatpush2.msra.mxu0 0.0
          %1757 = vmatprep.subr.mxu0 0.0
          %1758 = vmatpush2.msra.mxu0 0.0
          %1759 = vmatprep.subr.mxu0 0.0
          %1760 = vmatpush2.msra.mxu0 0.0
          %1761 = vmatprep.subr.mxu0 0.0
          %1762 = vmatpush2.msra.mxu0 0.0
          %1763 = vmatprep.subr.mxu0 0.0
          %1764 = vmatpush2.msra.mxu0 0.0
          %1765 = vmatprep.subr.mxu0 0.0
          %1766 = vmatpush2.msra.mxu0 0.0
          %1767 = vmatprep.subr.mxu0 0.0
          %1768 = vmatpush2.msra.mxu0 0.0
          %1769 = vmatprep.subr.mxu0 0.0
          %1770 = vmatpush2.msra.mxu0 0.0
          %1771 = vmatprep.subr.mxu0 0.0
          %1772 = vmatpush2.msra.mxu0 0.0
          %1773 = vmatprep.subr.mxu0 0.0
          %1774 = vmatpush2.msra.mxu0 0.0
          %1775 = vmatprep.subr.mxu0 0.0
          %1776 = vmatpush2.msra.mxu0 0.0
          %1777 = vmatprep.subr.mxu0 0.0
          %1778 = vmatpush2.msra.mxu0 0.0
          %1779 = vmatprep.subr.mxu0 0.0
          %1780 = vmatpush2.msra.mxu0 0.0
          %1781 = vmatprep.subr.mxu0 0.0
          %1782 = vmatpush2.msra.mxu0 0.0
          %1783 = vmatprep.mubr.f32.mxu0 0.0
          %1784 = vmatmul.mubr.f32.gmra.mxu0 %v1717
          %v1785 = vpop.f32.mrf.mxu0
          %v1786 = vadd.f32 %v1713, %v1785
          %v1787 = vpop.f32.mrf.mxu0
          %1788 = vdwg.mxu0
          %v1789 = vmax.f32 %v1786, 0.0
          %v1790 = vld [vmem:[%s11] sm:$0xff]
          %v1791 = vld [vmem:[%s11 + $0x8] sm:$0xff]
          %v1792 = vld [vmem:[%s11 + $0x10] sm:$0xff]
          %v1793 = vld [vmem:[%s11 + $0x18] sm:$0xff]
          %v1794 = vld [vmem:[#allocation8] sm:$0x1]
          %v1796 = vlaneseq
          %v1797 = vshrl.u32 %v1796, 7
          %v1798 = vsub.s32 0, %v1797
          %v1799 = vrot.slane %v1794, %v1798
          %vm1801 = vcmask 261120
          %v1803 = vsel %vm1801, %v1789, 0
          %1805 = vmatprep.subr.mxu0 0.0
          %1806 = vmatpush1.msra.mxu0 0.0
          %1807 = vmatprep.subr.mxu0 0.0
          %1808 = vmatpush1.msra.mxu0 0.0
          %1809 = vmatprep.subr.mxu0 0.0
          %1810 = vmatpush1.msra.mxu0 0.0
          %1811 = vmatprep.subr.mxu0 0.0
          %1812 = vmatpush1.msra.mxu0 0.0
          %1813 = vmatprep.subr.mxu0 0.0
          %1814 = vmatpush1.msra.mxu0 0.0
          %1815 = vmatprep.subr.mxu0 0.0
          %1816 = vmatpush1.msra.mxu0 0.0
          %1817 = vmatprep.subr.mxu0 0.0
          %1818 = vmatpush1.msra.mxu0 0.0
          %1819 = vmatprep.subr.mxu0 0.0
          %1820 = vmatpush1.msra.mxu0 0.0
          %1821 = vmatprep.subr.mxu0 0.0
          %1822 = vmatpush1.msra.mxu0 0.0
          %1823 = vmatprep.subr.mxu0 0.0
          %1824 = vmatpush1.msra.mxu0 0.0
          %1825 = vmatprep.subr.mxu0 0.0
          %1826 = vmatpush1.msra.mxu0 0.0
          %1827 = vmatprep.subr.mxu0 0.0
          %1828 = vmatpush1.msra.mxu0 0.0
          %1829 = vmatprep.subr.mxu0 0.0
          %1830 = vmatpush1.msra.mxu0 %v1793
          %1831 = vmatprep.subr.mxu0 0.0
          %1832 = vmatpush1.msra.mxu0 %v1792
          %1833 = vmatprep.subr.mxu0 0.0
          %1834 = vmatpush1.msra.mxu0 %v1791
          %1835 = vmatprep.subr.mxu0 0.0
          %1836 = vmatpush1.msra.mxu0 %v1790
          %1837 = vmatprep.subr.mxu0 0.0
          %1838 = vmatpush2.msra.mxu0 0.0
          %1839 = vmatprep.subr.mxu0 0.0
          %1840 = vmatpush2.msra.mxu0 0.0
          %1841 = vmatprep.subr.mxu0 0.0
          %1842 = vmatpush2.msra.mxu0 0.0
          %1843 = vmatprep.subr.mxu0 0.0
          %1844 = vmatpush2.msra.mxu0 0.0
          %1845 = vmatprep.subr.mxu0 0.0
          %1846 = vmatpush2.msra.mxu0 0.0
          %1847 = vmatprep.subr.mxu0 0.0
          %1848 = vmatpush2.msra.mxu0 0.0
          %1849 = vmatprep.subr.mxu0 0.0
          %1850 = vmatpush2.msra.mxu0 0.0
          %1851 = vmatprep.subr.mxu0 0.0
          %1852 = vmatpush2.msra.mxu0 0.0
          %1853 = vmatprep.subr.mxu0 0.0
          %1854 = vmatpush2.msra.mxu0 0.0
          %1855 = vmatprep.subr.mxu0 0.0
          %1856 = vmatpush2.msra.mxu0 0.0
          %1857 = vmatprep.subr.mxu0 0.0
          %1858 = vmatpush2.msra.mxu0 0.0
          %1859 = vmatprep.subr.mxu0 0.0
          %1860 = vmatpush2.msra.mxu0 0.0
          %1861 = vmatprep.subr.mxu0 0.0
          %1862 = vmatpush2.msra.mxu0 0.0
          %1863 = vmatprep.subr.mxu0 0.0
          %1864 = vmatpush2.msra.mxu0 0.0
          %1865 = vmatprep.subr.mxu0 0.0
          %1866 = vmatpush2.msra.mxu0 0.0
          %1867 = vmatprep.subr.mxu0 0.0
          %1868 = vmatpush2.msra.mxu0 0.0
          %1869 = vmatprep.mubr.f32.mxu0 0.0
          %1870 = vmatmul.mubr.f32.gmra.mxu0 %v1803
          %v1871 = vpop.f32.mrf.mxu0
          %v1872 = vadd.f32 %v1799, %v1871
          %v1873 = vpop.f32.mrf.mxu0
          %1874 = vdwg.mxu0
          %v1875 = vmax.f32 %v1872, 0.0
          %v1876 = vld [vmem:[%s15] sm:$0xff]
          %v1877 = vld [vmem:[%s15 + $0x8] sm:$0xff]
          %v1878 = vld [vmem:[%s15 + $0x10] sm:$0xff]
          %v1879 = vld [vmem:[%s15 + $0x18] sm:$0xff]
          %v1880 = vld [vmem:[%s15 + $0x20] sm:$0xff]
          %v1881 = vld [vmem:[%s15 + $0x28] sm:$0xff]
          %v1882 = vld [vmem:[%s15 + $0x30] sm:$0xff]
          %v1883 = vld [vmem:[%s15 + $0x38] sm:$0xff]
          %v1885 = vsel %vm1801, %v1698, 0
          %1887 = vmatprep.subr.mxu0 0.0
          %1888 = vmatpush1.msra.mxu0 0.0
          %1889 = vmatprep.subr.mxu0 0.0
          %1890 = vmatpush1.msra.mxu0 0.0
          %1891 = vmatprep.subr.mxu0 0.0
          %1892 = vmatpush1.msra.mxu0 0.0
          %1893 = vmatprep.subr.mxu0 0.0
          %1894 = vmatpush1.msra.mxu0 0.0
          %1895 = vmatprep.subr.mxu0 0.0
          %1896 = vmatpush1.msra.mxu0 0.0
          %1897 = vmatprep.subr.mxu0 0.0
          %1898 = vmatpush1.msra.mxu0 0.0
          %1899 = vmatprep.subr.mxu0 0.0
          %1900 = vmatpush1.msra.mxu0 0.0
          %1901 = vmatprep.subr.mxu0 0.0
          %1902 = vmatpush1.msra.mxu0 0.0
          %1903 = vmatprep.subr.mxu0 0.0
          %1904 = vmatpush1.msra.mxu0 0.0
          %1905 = vmatprep.subr.mxu0 0.0
          %1906 = vmatpush1.msra.mxu0 0.0
          %1907 = vmatprep.subr.mxu0 0.0
          %1908 = vmatpush1.msra.mxu0 0.0
          %1909 = vmatprep.subr.mxu0 0.0
          %1910 = vmatpush1.msra.mxu0 0.0
          %1911 = vmatprep.subr.mxu0 %v1883
          %1912 = vmatpush1.msra.mxu0 %v1882
          %1913 = vmatprep.subr.mxu0 %v1881
          %1914 = vmatpush1.msra.mxu0 %v1880
          %1915 = vmatprep.subr.mxu0 %v1879
          %1916 = vmatpush1.msra.mxu0 %v1878
          %1917 = vmatprep.subr.mxu0 %v1877
          %1918 = vmatpush1.msra.mxu0 %v1876
          %1919 = vmatprep.subr.mxu0 0.0
          %1920 = vmatpush2.msra.mxu0 0.0
          %1921 = vmatprep.subr.mxu0 0.0
          %1922 = vmatpush2.msra.mxu0 0.0
          %1923 = vmatprep.subr.mxu0 0.0
          %1924 = vmatpush2.msra.mxu0 0.0
          %1925 = vmatprep.subr.mxu0 0.0
          %1926 = vmatpush2.msra.mxu0 0.0
          %1927 = vmatprep.subr.mxu0 0.0
          %1928 = vmatpush2.msra.mxu0 0.0
          %1929 = vmatprep.subr.mxu0 0.0
          %1930 = vmatpush2.msra.mxu0 0.0
          %1931 = vmatprep.subr.mxu0 0.0
          %1932 = vmatpush2.msra.mxu0 0.0
          %1933 = vmatprep.subr.mxu0 0.0
          %1934 = vmatpush2.msra.mxu0 0.0
          %1935 = vmatprep.subr.mxu0 0.0
          %1936 = vmatpush2.msra.mxu0 0.0
          %1937 = vmatprep.subr.mxu0 0.0
          %1938 = vmatpush2.msra.mxu0 0.0
          %1939 = vmatprep.subr.mxu0 0.0
          %1940 = vmatpush2.msra.mxu0 0.0
          %1941 = vmatprep.subr.mxu0 0.0
          %1942 = vmatpush2.msra.mxu0 0.0
          %1943 = vmatprep.subr.mxu0 0.0
          %1944 = vmatpush2.msra.mxu0 0.0
          %1945 = vmatprep.subr.mxu0 0.0
          %1946 = vmatpush2.msra.mxu0 0.0
          %1947 = vmatprep.subr.mxu0 0.0
          %1948 = vmatpush2.msra.mxu0 0.0
          %1949 = vmatprep.subr.mxu0 0.0
          %1950 = vmatpush2.msra.mxu0 0.0
          %1951 = vmatprep.mubr.f32.mxu0 0.0
          %1952 = vmatmul.mubr.f32.gmra.mxu0 %v1885
          %v1953 = vpop.f32.mrf.mxu0
          %v1954 = vadd.f32 0.0, %v1953
          %v1955 = vpop.f32.mrf.mxu0
          %v1956 = vadd.f32 0.0, %v1955
          %1957 = vdwg.mxu0
          %v1958 = vld [vmem:[%s17] sm:$0xff]
          %v1959 = vld [vmem:[%s17 + $0x8] sm:$0xff]
          %v1960 = vld [vmem:[%s17 + $0x10] sm:$0xff]
          %v1961 = vld [vmem:[%s17 + $0x18] sm:$0xff]
          %v1963 = vsel %vm1801, %v1875, 0
          %1965 = vmatprep.subr.mxu0 0.0
          %1966 = vmatpush1.msra.mxu0 0.0
          %1967 = vmatprep.subr.mxu0 0.0
          %1968 = vmatpush1.msra.mxu0 0.0
          %1969 = vmatprep.subr.mxu0 0.0
          %1970 = vmatpush1.msra.mxu0 0.0
          %1971 = vmatprep.subr.mxu0 0.0
          %1972 = vmatpush1.msra.mxu0 0.0
          %1973 = vmatprep.subr.mxu0 0.0
          %1974 = vmatpush1.msra.mxu0 0.0
          %1975 = vmatprep.subr.mxu0 0.0
          %1976 = vmatpush1.msra.mxu0 0.0
          %1977 = vmatprep.subr.mxu0 0.0
          %1978 = vmatpush1.msra.mxu0 0.0
          %1979 = vmatprep.subr.mxu0 0.0
          %1980 = vmatpush1.msra.mxu0 0.0
          %1981 = vmatprep.subr.mxu0 0.0
          %1982 = vmatpush1.msra.mxu0 0.0
          %1983 = vmatprep.subr.mxu0 0.0
          %1984 = vmatpush1.msra.mxu0 0.0
          %1985 = vmatprep.subr.mxu0 0.0
          %1986 = vmatpush1.msra.mxu0 0.0
          %1987 = vmatprep.subr.mxu0 0.0
          %1988 = vmatpush1.msra.mxu0 0.0
          %1989 = vmatprep.subr.mxu0 0.0
          %1990 = vmatpush1.msra.mxu0 %v1961
          %1991 = vmatprep.subr.mxu0 0.0
          %1992 = vmatpush1.msra.mxu0 %v1960
          %1993 = vmatprep.subr.mxu0 0.0
          %1994 = vmatpush1.msra.mxu0 %v1959
          %1995 = vmatprep.subr.mxu0 0.0
          %1996 = vmatpush1.msra.mxu0 %v1958
          %1997 = vmatprep.subr.mxu0 0.0
          %1998 = vmatpush2.msra.mxu0 0.0
          %1999 = vmatprep.subr.mxu0 0.0
          %2000 = vmatpush2.msra.mxu0 0.0
          %2001 = vmatprep.subr.mxu0 0.0
          %2002 = vmatpush2.msra.mxu0 0.0
          %2003 = vmatprep.subr.mxu0 0.0
          %2004 = vmatpush2.msra.mxu0 0.0
          %2005 = vmatprep.subr.mxu0 0.0
          %2006 = vmatpush2.msra.mxu0 0.0
          %2007 = vmatprep.subr.mxu0 0.0
          %2008 = vmatpush2.msra.mxu0 0.0
          %2009 = vmatprep.subr.mxu0 0.0
          %2010 = vmatpush2.msra.mxu0 0.0
          %2011 = vmatprep.subr.mxu0 0.0
          %2012 = vmatpush2.msra.mxu0 0.0
          %2013 = vmatprep.subr.mxu0 0.0
          %2014 = vmatpush2.msra.mxu0 0.0
          %2015 = vmatprep.subr.mxu0 0.0
          %2016 = vmatpush2.msra.mxu0 0.0
          %2017 = vmatprep.subr.mxu0 0.0
          %2018 = vmatpush2.msra.mxu0 0.0
          %2019 = vmatprep.subr.mxu0 0.0
          %2020 = vmatpush2.msra.mxu0 0.0
          %2021 = vmatprep.subr.mxu0 0.0
          %2022 = vmatpush2.msra.mxu0 0.0
          %2023 = vmatprep.subr.mxu0 0.0
          %2024 = vmatpush2.msra.mxu0 0.0
          %2025 = vmatprep.subr.mxu0 0.0
          %2026 = vmatpush2.msra.mxu0 0.0
          %2027 = vmatprep.subr.mxu0 0.0
          %2028 = vmatpush2.msra.mxu0 0.0
          %2029 = vmatprep.mubr.f32.mxu0 0.0
          %2030 = vmatmul.mubr.f32.gmra.mxu0 %v1963
          %v2031 = vpop.f32.mrf.mxu0
          %v2032 = vadd.f32 %v1954, %v2031
          %v2033 = vpop.f32.mrf.mxu0
          %2034 = vdwg.mxu0
          %v2035 = vld [vmem:[#allocation9] sm:$0x1]
          %v2037 = vlaneseq
          %v2038 = vshrl.u32 %v2037, 7
          %v2039 = vsub.s32 0, %v2038
          %v2040 = vrot.slane %v2035, %v2039
          %v2042 = vadd.f32 %v2032, %v2040
          %v2043 = vmax.f32 %v2042, 0.0
          %v2044 = vld [vmem:[%s21] sm:$0xff]
          %v2045 = vld [vmem:[%s21 + $0x8] sm:$0xff]
          %v2046 = vld [vmem:[%s21 + $0x10] sm:$0xff]
          %v2047 = vld [vmem:[%s21 + $0x18] sm:$0xff]
          %v2048 = vld [vmem:[#allocation11] sm:$0x1]
          %v2050 = vlaneseq
          %v2051 = vshrl.u32 %v2050, 7
          %v2052 = vsub.s32 0, %v2051
          %v2053 = vrot.slane %v2048, %v2052
          %v2056 = vsel %vm1801, %v2043, 0
          %2058 = vmatprep.subr.mxu0 0.0
          %2059 = vmatpush1.msra.mxu0 0.0
          %2060 = vmatprep.subr.mxu0 0.0
          %2061 = vmatpush1.msra.mxu0 0.0
          %2062 = vmatprep.subr.mxu0 0.0
          %2063 = vmatpush1.msra.mxu0 0.0
          %2064 = vmatprep.subr.mxu0 0.0
          %2065 = vmatpush1.msra.mxu0 0.0
          %2066 = vmatprep.subr.mxu0 0.0
          %2067 = vmatpush1.msra.mxu0 0.0
          %2068 = vmatprep.subr.mxu0 0.0
          %2069 = vmatpush1.msra.mxu0 0.0
          %2070 = vmatprep.subr.mxu0 0.0
          %2071 = vmatpush1.msra.mxu0 0.0
          %2072 = vmatprep.subr.mxu0 0.0
          %2073 = vmatpush1.msra.mxu0 0.0
          %2074 = vmatprep.subr.mxu0 0.0
          %2075 = vmatpush1.msra.mxu0 0.0
          %2076 = vmatprep.subr.mxu0 0.0
          %2077 = vmatpush1.msra.mxu0 0.0
          %2078 = vmatprep.subr.mxu0 0.0
          %2079 = vmatpush1.msra.mxu0 0.0
          %2080 = vmatprep.subr.mxu0 0.0
          %2081 = vmatpush1.msra.mxu0 0.0
          %2082 = vmatprep.subr.mxu0 0.0
          %2083 = vmatpush1.msra.mxu0 %v2047
          %2084 = vmatprep.subr.mxu0 0.0
          %2085 = vmatpush1.msra.mxu0 %v2046
          %2086 = vmatprep.subr.mxu0 0.0
          %2087 = vmatpush1.msra.mxu0 %v2045
          %2088 = vmatprep.subr.mxu0 0.0
          %2089 = vmatpush1.msra.mxu0 %v2044
          %2090 = vmatprep.subr.mxu0 0.0
          %2091 = vmatpush2.msra.mxu0 0.0
          %2092 = vmatprep.subr.mxu0 0.0
          %2093 = vmatpush2.msra.mxu0 0.0
          %2094 = vmatprep.subr.mxu0 0.0
          %2095 = vmatpush2.msra.mxu0 0.0
          %2096 = vmatprep.subr.mxu0 0.0
          %2097 = vmatpush2.msra.mxu0 0.0
          %2098 = vmatprep.subr.mxu0 0.0
          %2099 = vmatpush2.msra.mxu0 0.0
          %2100 = vmatprep.subr.mxu0 0.0
          %2101 = vmatpush2.msra.mxu0 0.0
          %2102 = vmatprep.subr.mxu0 0.0
          %2103 = vmatpush2.msra.mxu0 0.0
          %2104 = vmatprep.subr.mxu0 0.0
          %2105 = vmatpush2.msra.mxu0 0.0
          %2106 = vmatprep.subr.mxu0 0.0
          %2107 = vmatpush2.msra.mxu0 0.0
          %2108 = vmatprep.subr.mxu0 0.0
          %2109 = vmatpush2.msra.mxu0 0.0
          %2110 = vmatprep.subr.mxu0 0.0
          %2111 = vmatpush2.msra.mxu0 0.0
          %2112 = vmatprep.subr.mxu0 0.0
          %2113 = vmatpush2.msra.mxu0 0.0
          %2114 = vmatprep.subr.mxu0 0.0
          %2115 = vmatpush2.msra.mxu0 0.0
          %2116 = vmatprep.subr.mxu0 0.0
          %2117 = vmatpush2.msra.mxu0 0.0
          %2118 = vmatprep.subr.mxu0 0.0
          %2119 = vmatpush2.msra.mxu0 0.0
          %2120 = vmatprep.subr.mxu0 0.0
          %2121 = vmatpush2.msra.mxu0 0.0
          %2122 = vmatprep.mubr.f32.mxu0 0.0
          %2123 = vmatmul.mubr.f32.gmra.mxu0 %v2056
          %v2124 = vpop.f32.mrf.mxu0
          %v2125 = vadd.f32 %v2053, %v2124
          %v2126 = vpop.f32.mrf.mxu0
          %2127 = vdwg.mxu0
          %v2128 = vmax.f32 %v2125, 0.0
          %v2129 = vld [vmem:[%s25] sm:$0xff]
          %v2130 = vld [vmem:[%s25 + $0x8] sm:$0xff]
          %v2131 = vld [vmem:[%s25 + $0x10] sm:$0xff]
          %v2132 = vld [vmem:[%s25 + $0x18] sm:$0xff]
          %v2133 = vld [vmem:[#allocation12] sm:$0x1]
          %v2135 = vlaneseq
          %v2136 = vshrl.u32 %v2135, 7
          %v2137 = vsub.s32 0, %v2136
          %v2138 = vrot.slane %v2133, %v2137
          %v2141 = vsel %vm1801, %v2128, 0
          %2143 = vmatprep.subr.mxu0 0.0
          %2144 = vmatpush1.msra.mxu0 0.0
          %2145 = vmatprep.subr.mxu0 0.0
          %2146 = vmatpush1.msra.mxu0 0.0
          %2147 = vmatprep.subr.mxu0 0.0
          %2148 = vmatpush1.msra.mxu0 0.0
          %2149 = vmatprep.subr.mxu0 0.0
          %2150 = vmatpush1.msra.mxu0 0.0
          %2151 = vmatprep.subr.mxu0 0.0
          %2152 = vmatpush1.msra.mxu0 0.0
          %2153 = vmatprep.subr.mxu0 0.0
          %2154 = vmatpush1.msra.mxu0 0.0
          %2155 = vmatprep.subr.mxu0 0.0
          %2156 = vmatpush1.msra.mxu0 0.0
          %2157 = vmatprep.subr.mxu0 0.0
          %2158 = vmatpush1.msra.mxu0 0.0
          %2159 = vmatprep.subr.mxu0 0.0
          %2160 = vmatpush1.msra.mxu0 0.0
          %2161 = vmatprep.subr.mxu0 0.0
          %2162 = vmatpush1.msra.mxu0 0.0
          %2163 = vmatprep.subr.mxu0 0.0
          %2164 = vmatpush1.msra.mxu0 0.0
          %2165 = vmatprep.subr.mxu0 0.0
          %2166 = vmatpush1.msra.mxu0 0.0
          %2167 = vmatprep.subr.mxu0 0.0
          %2168 = vmatpush1.msra.mxu0 %v2132
          %2169 = vmatprep.subr.mxu0 0.0
          %2170 = vmatpush1.msra.mxu0 %v2131
          %2171 = vmatprep.subr.mxu0 0.0
          %2172 = vmatpush1.msra.mxu0 %v2130
          %2173 = vmatprep.subr.mxu0 0.0
          %2174 = vmatpush1.msra.mxu0 %v2129
          %2175 = vmatprep.subr.mxu0 0.0
          %2176 = vmatpush2.msra.mxu0 0.0
          %2177 = vmatprep.subr.mxu0 0.0
          %2178 = vmatpush2.msra.mxu0 0.0
          %2179 = vmatprep.subr.mxu0 0.0
          %2180 = vmatpush2.msra.mxu0 0.0
          %2181 = vmatprep.subr.mxu0 0.0
          %2182 = vmatpush2.msra.mxu0 0.0
          %2183 = vmatprep.subr.mxu0 0.0
          %2184 = vmatpush2.msra.mxu0 0.0
          %2185 = vmatprep.subr.mxu0 0.0
          %2186 = vmatpush2.msra.mxu0 0.0
          %2187 = vmatprep.subr.mxu0 0.0
          %2188 = vmatpush2.msra.mxu0 0.0
          %2189 = vmatprep.subr.mxu0 0.0
          %2190 = vmatpush2.msra.mxu0 0.0
          %2191 = vmatprep.subr.mxu0 0.0
          %2192 = vmatpush2.msra.mxu0 0.0
          %2193 = vmatprep.subr.mxu0 0.0
          %2194 = vmatpush2.msra.mxu0 0.0
          %2195 = vmatprep.subr.mxu0 0.0
          %2196 = vmatpush2.msra.mxu0 0.0
          %2197 = vmatprep.subr.mxu0 0.0
          %2198 = vmatpush2.msra.mxu0 0.0
          %2199 = vmatprep.subr.mxu0 0.0
          %2200 = vmatpush2.msra.mxu0 0.0
          %2201 = vmatprep.subr.mxu0 0.0
          %2202 = vmatpush2.msra.mxu0 0.0
          %2203 = vmatprep.subr.mxu0 0.0
          %2204 = vmatpush2.msra.mxu0 0.0
          %2205 = vmatprep.subr.mxu0 0.0
          %2206 = vmatpush2.msra.mxu0 0.0
          %2207 = vmatprep.mubr.f32.mxu0 0.0
          %2208 = vmatmul.mubr.f32.gmra.mxu0 %v2141
          %v2209 = vpop.f32.mrf.mxu0
          %v2210 = vadd.f32 %v2138, %v2209
          %v2211 = vpop.f32.mrf.mxu0
          %2212 = vdwg.mxu0
          %v2213 = vmax.f32 %v2210, 0.0
          %v2214 = vand.u32 2147483647, %v2210
          %v2215 = vsub.f32 0.0, %v2214
          %v2216 = vmul.f32 %v2215, 1.442695
          %v2217 = vpow.pop %v2216
          %v2218 = vadd.f32 %v2217, 1.0
          %v2219 = vlog2.pop %v2218
          %v2220 = vmul.f32 %v2219, 0.6931472
          %v2221 = vmul.f32 -0.5, %v2217
          %v2222 = vadd.f32 %v2221, 1.0
          %v2223 = vmul.f32 %v2222, %v2217
          %v2224 = vand.u32 2147483647, %v2217
          %vm2225 = vcmp.lt.f32.partialorder %v2224, 0.0004427343
          %v2226 = vsel %vm2225, %v2223, %v2220
          %v2227 = vadd.f32 %v2213, %v2226
          %v2228 = vld [vmem:[#allocation14] sm:$0x1]
          %v2230 = vlaneseq
          %v2231 = vshrl.u32 %v2230, 7
          %v2232 = vsub.s32 0, %v2231
          %v2233 = vrot.slane %v2228, %v2232
          %2234 = vrot.lane.b32.xlu0 %v2233, 32
          %v2235 = vpop.permute.xlu0 %2234
          %v2237 = vadd.f32 %v1954, %v2235
          %v2238 = vmax.f32 %v2237, 0.0
          %v2239 = vld [vmem:[%s31] sm:$0xff]
          %v2240 = vld [vmem:[%s31 + $0x8] sm:$0xff]
          %v2241 = vld [vmem:[%s31 + $0x10] sm:$0xff]
          %v2242 = vld [vmem:[%s31 + $0x18] sm:$0xff]
          %v2243 = vld [vmem:[#allocation15] sm:$0x1]
          %v2245 = vlaneseq
          %v2246 = vshrl.u32 %v2245, 7
          %v2247 = vsub.s32 0, %v2246
          %v2248 = vrot.slane %v2243, %v2247
          %2251 = vrot.lane.b32.xlu0 %v2238, 96
          %v2252 = vpop.permute.xlu0 %2251
          %v2253 = vsel %vm1801, %v2252, 0
          %2255 = vmatprep.subr.mxu0 0.0
          %2256 = vmatpush1.msra.mxu0 0.0
          %2257 = vmatprep.subr.mxu0 0.0
          %2258 = vmatpush1.msra.mxu0 0.0
          %2259 = vmatprep.subr.mxu0 0.0
          %2260 = vmatpush1.msra.mxu0 0.0
          %2261 = vmatprep.subr.mxu0 0.0
          %2262 = vmatpush1.msra.mxu0 0.0
          %2263 = vmatprep.subr.mxu0 0.0
          %2264 = vmatpush1.msra.mxu0 0.0
          %2265 = vmatprep.subr.mxu0 0.0
          %2266 = vmatpush1.msra.mxu0 0.0
          %2267 = vmatprep.subr.mxu0 0.0
          %2268 = vmatpush1.msra.mxu0 0.0
          %2269 = vmatprep.subr.mxu0 0.0
          %2270 = vmatpush1.msra.mxu0 0.0
          %2271 = vmatprep.subr.mxu0 0.0
          %2272 = vmatpush1.msra.mxu0 0.0
          %2273 = vmatprep.subr.mxu0 0.0
          %2274 = vmatpush1.msra.mxu0 0.0
          %2275 = vmatprep.subr.mxu0 0.0
          %2276 = vmatpush1.msra.mxu0 0.0
          %2277 = vmatprep.subr.mxu0 0.0
          %2278 = vmatpush1.msra.mxu0 0.0
          %2279 = vmatprep.subr.mxu0 0.0
          %2280 = vmatpush1.msra.mxu0 %v2242
          %2281 = vmatprep.subr.mxu0 0.0
          %2282 = vmatpush1.msra.mxu0 %v2241
          %2283 = vmatprep.subr.mxu0 0.0
          %2284 = vmatpush1.msra.mxu0 %v2240
          %2285 = vmatprep.subr.mxu0 0.0
          %2286 = vmatpush1.msra.mxu0 %v2239
          %2287 = vmatprep.subr.mxu0 0.0
          %2288 = vmatpush2.msra.mxu0 0.0
          %2289 = vmatprep.subr.mxu0 0.0
          %2290 = vmatpush2.msra.mxu0 0.0
          %2291 = vmatprep.subr.mxu0 0.0
          %2292 = vmatpush2.msra.mxu0 0.0
          %2293 = vmatprep.subr.mxu0 0.0
          %2294 = vmatpush2.msra.mxu0 0.0
          %2295 = vmatprep.subr.mxu0 0.0
          %2296 = vmatpush2.msra.mxu0 0.0
          %2297 = vmatprep.subr.mxu0 0.0
          %2298 = vmatpush2.msra.mxu0 0.0
          %2299 = vmatprep.subr.mxu0 0.0
          %2300 = vmatpush2.msra.mxu0 0.0
          %2301 = vmatprep.subr.mxu0 0.0
          %2302 = vmatpush2.msra.mxu0 0.0
          %2303 = vmatprep.subr.mxu0 0.0
          %2304 = vmatpush2.msra.mxu0 0.0
          %2305 = vmatprep.subr.mxu0 0.0
          %2306 = vmatpush2.msra.mxu0 0.0
          %2307 = vmatprep.subr.mxu0 0.0
          %2308 = vmatpush2.msra.mxu0 0.0
          %2309 = vmatprep.subr.mxu0 0.0
          %2310 = vmatpush2.msra.mxu0 0.0
          %2311 = vmatprep.subr.mxu0 0.0
          %2312 = vmatpush2.msra.mxu0 0.0
          %2313 = vmatprep.subr.mxu0 0.0
          %2314 = vmatpush2.msra.mxu0 0.0
          %2315 = vmatprep.subr.mxu0 0.0
          %2316 = vmatpush2.msra.mxu0 0.0
          %2317 = vmatprep.subr.mxu0 0.0
          %2318 = vmatpush2.msra.mxu0 0.0
          %2319 = vmatprep.mubr.f32.mxu0 0.0
          %2320 = vmatmul.mubr.f32.gmra.mxu0 %v2253
          %v2321 = vpop.f32.mrf.mxu0
          %v2322 = vadd.f32 %v2248, %v2321
          %v2323 = vpop.f32.mrf.mxu0
          %2324 = vdwg.mxu0
          %v2325 = vmax.f32 %v2322, 0.0
          %v2326 = vand.u32 2147483647, %v2322
          %v2327 = vsub.f32 0.0, %v2326
          %v2328 = vmul.f32 %v2327, 1.442695
          %v2329 = vpow.pop %v2328
          %v2330 = vadd.f32 %v2329, 1.0
          %v2331 = vlog2.pop %v2330
          %v2332 = vmul.f32 %v2331, 0.6931472
          %v2333 = vmul.f32 -0.5, %v2329
          %v2334 = vadd.f32 %v2333, 1.0
          %v2335 = vmul.f32 %v2334, %v2329
          %v2336 = vand.u32 2147483647, %v2329
          %vm2337 = vcmp.lt.f32.partialorder %v2336, 0.0004427343
          %v2338 = vsel %vm2337, %v2335, %v2332
          %v2339 = vadd.f32 %v2325, %v2338
          %2341 = vrot.lane.b32.xlu0 %v2227, 120
          %v2342 = vpop.permute.xlu0 %2341
          %v2344 = vmul.f32 %v1703, %v2342
          %v2345 = vadd.f32 %v2344, %v2210
          %v2346 = vld [vmem:[#allocation17] sm:$0xff]
          %v2347 = vld [vmem:[#allocation18] sm:$0x1]
          %v2349 = vlaneseq
          %v2350 = vshrl.u32 %v2349, 7
          %v2351 = vsub.s32 0, %v2350
          %v2352 = vrot.slane %v2347, %v2351
          %vm2354 = vcmask 64512
          %v2356 = vsel %vm2354, %v2345, 0
          %2358 = vmatprep.subr.mxu0 0.0
          %2359 = vmatpush1.msra.mxu0 0.0
          %2360 = vmatprep.subr.mxu0 0.0
          %2361 = vmatpush1.msra.mxu0 0.0
          %2362 = vmatprep.subr.mxu0 0.0
          %2363 = vmatpush1.msra.mxu0 0.0
          %2364 = vmatprep.subr.mxu0 0.0
          %2365 = vmatpush1.msra.mxu0 0.0
          %2366 = vmatprep.subr.mxu0 0.0
          %2367 = vmatpush1.msra.mxu0 0.0
          %2368 = vmatprep.subr.mxu0 0.0
          %2369 = vmatpush1.msra.mxu0 0.0
          %2370 = vmatprep.subr.mxu0 0.0
          %2371 = vmatpush1.msra.mxu0 0.0
          %2372 = vmatprep.subr.mxu0 0.0
          %2373 = vmatpush1.msra.mxu0 0.0
          %2374 = vmatprep.subr.mxu0 0.0
          %2375 = vmatpush1.msra.mxu0 0.0
          %2376 = vmatprep.subr.mxu0 0.0
          %2377 = vmatpush1.msra.mxu0 0.0
          %2378 = vmatprep.subr.mxu0 0.0
          %2379 = vmatpush1.msra.mxu0 0.0
          %2380 = vmatprep.subr.mxu0 0.0
          %2381 = vmatpush1.msra.mxu0 0.0
          %2382 = vmatprep.subr.mxu0 0.0
          %2383 = vmatpush1.msra.mxu0 0.0
          %2384 = vmatprep.subr.mxu0 0.0
          %2385 = vmatpush1.msra.mxu0 0.0
          %2386 = vmatprep.subr.mxu0 0.0
          %2387 = vmatpush1.msra.mxu0 0.0
          %2388 = vmatprep.subr.mxu0 0.0
          %2389 = vmatpush1.msra.mxu0 %v2346
          %2390 = vmatprep.subr.mxu0 0.0
          %2391 = vmatpush2.msra.mxu0 0.0
          %2392 = vmatprep.subr.mxu0 0.0
          %2393 = vmatpush2.msra.mxu0 0.0
          %2394 = vmatprep.subr.mxu0 0.0
          %2395 = vmatpush2.msra.mxu0 0.0
          %2396 = vmatprep.subr.mxu0 0.0
          %2397 = vmatpush2.msra.mxu0 0.0
          %2398 = vmatprep.subr.mxu0 0.0
          %2399 = vmatpush2.msra.mxu0 0.0
          %2400 = vmatprep.subr.mxu0 0.0
          %2401 = vmatpush2.msra.mxu0 0.0
          %2402 = vmatprep.subr.mxu0 0.0
          %2403 = vmatpush2.msra.mxu0 0.0
          %2404 = vmatprep.subr.mxu0 0.0
          %2405 = vmatpush2.msra.mxu0 0.0
          %2406 = vmatprep.subr.mxu0 0.0
          %2407 = vmatpush2.msra.mxu0 0.0
          %2408 = vmatprep.subr.mxu0 0.0
          %2409 = vmatpush2.msra.mxu0 0.0
          %2410 = vmatprep.subr.mxu0 0.0
          %2411 = vmatpush2.msra.mxu0 0.0
          %2412 = vmatprep.subr.mxu0 0.0
          %2413 = vmatpush2.msra.mxu0 0.0
          %2414 = vmatprep.subr.mxu0 0.0
          %2415 = vmatpush2.msra.mxu0 0.0
          %2416 = vmatprep.subr.mxu0 0.0
          %2417 = vmatpush2.msra.mxu0 0.0
          %2418 = vmatprep.subr.mxu0 0.0
          %2419 = vmatpush2.msra.mxu0 0.0
          %2420 = vmatprep.subr.mxu0 0.0
          %2421 = vmatpush2.msra.mxu0 0.0
          %2422 = vmatprep.mubr.f32.mxu0 0.0
          %2423 = vmatmul.mubr.f32.gmra.mxu0 %v2356
          %v2424 = vpop.f32.mrf.mxu0
          %v2425 = vadd.f32 %v2352, %v2424
          %v2426 = vpop.f32.mrf.mxu0
          %2427 = vdwg.mxu0
          %v2428 = vmax.f32 %v2425, 0.0
          %v2429 = vld [vmem:[%s39] sm:$0xff]
          %v2430 = vld [vmem:[%s39 + $0x8] sm:$0xff]
          %v2431 = vld [vmem:[%s39 + $0x10] sm:$0xff]
          %v2432 = vld [vmem:[%s39 + $0x18] sm:$0xff]
          %v2433 = vld [vmem:[%s41] sm:$0x1]
          %v2435 = vlaneseq
          %v2436 = vshrl.u32 %v2435, 7
          %v2437 = vsub.s32 0, %v2436
          %v2438 = vrot.slane %v2433, %v2437
          %v2441 = vsel %vm1801, %v2428, 0
          %2443 = vmatprep.subr.mxu0 0.0
          %2444 = vmatpush1.msra.mxu0 0.0
          %2445 = vmatprep.subr.mxu0 0.0
          %2446 = vmatpush1.msra.mxu0 0.0
          %2447 = vmatprep.subr.mxu0 0.0
          %2448 = vmatpush1.msra.mxu0 0.0
          %2449 = vmatprep.subr.mxu0 0.0
          %2450 = vmatpush1.msra.mxu0 0.0
          %2451 = vmatprep.subr.mxu0 0.0
          %2452 = vmatpush1.msra.mxu0 0.0
          %2453 = vmatprep.subr.mxu0 0.0
          %2454 = vmatpush1.msra.mxu0 0.0
          %2455 = vmatprep.subr.mxu0 0.0
          %2456 = vmatpush1.msra.mxu0 0.0
          %2457 = vmatprep.subr.mxu0 0.0
          %2458 = vmatpush1.msra.mxu0 0.0
          %2459 = vmatprep.subr.mxu0 0.0
          %2460 = vmatpush1.msra.mxu0 0.0
          %2461 = vmatprep.subr.mxu0 0.0
          %2462 = vmatpush1.msra.mxu0 0.0
          %2463 = vmatprep.subr.mxu0 0.0
          %2464 = vmatpush1.msra.mxu0 0.0
          %2465 = vmatprep.subr.mxu0 0.0
          %2466 = vmatpush1.msra.mxu0 0.0
          %2467 = vmatprep.subr.mxu0 0.0
          %2468 = vmatpush1.msra.mxu0 %v2432
          %2469 = vmatprep.subr.mxu0 0.0
          %2470 = vmatpush1.msra.mxu0 %v2431
          %2471 = vmatprep.subr.mxu0 0.0
          %2472 = vmatpush1.msra.mxu0 %v2430
          %2473 = vmatprep.subr.mxu0 0.0
          %2474 = vmatpush1.msra.mxu0 %v2429
          %2475 = vmatprep.subr.mxu0 0.0
          %2476 = vmatpush2.msra.mxu0 0.0
          %2477 = vmatprep.subr.mxu0 0.0
          %2478 = vmatpush2.msra.mxu0 0.0
          %2479 = vmatprep.subr.mxu0 0.0
          %2480 = vmatpush2.msra.mxu0 0.0
          %2481 = vmatprep.subr.mxu0 0.0
          %2482 = vmatpush2.msra.mxu0 0.0
          %2483 = vmatprep.subr.mxu0 0.0
          %2484 = vmatpush2.msra.mxu0 0.0
          %2485 = vmatprep.subr.mxu0 0.0
          %2486 = vmatpush2.msra.mxu0 0.0
          %2487 = vmatprep.subr.mxu0 0.0
          %2488 = vmatpush2.msra.mxu0 0.0
          %2489 = vmatprep.subr.mxu0 0.0
          %2490 = vmatpush2.msra.mxu0 0.0
          %2491 = vmatprep.subr.mxu0 0.0
          %2492 = vmatpush2.msra.mxu0 0.0
          %2493 = vmatprep.subr.mxu0 0.0
          %2494 = vmatpush2.msra.mxu0 0.0
          %2495 = vmatprep.subr.mxu0 0.0
          %2496 = vmatpush2.msra.mxu0 0.0
          %2497 = vmatprep.subr.mxu0 0.0
          %2498 = vmatpush2.msra.mxu0 0.0
          %2499 = vmatprep.subr.mxu0 0.0
          %2500 = vmatpush2.msra.mxu0 0.0
          %2501 = vmatprep.subr.mxu0 0.0
          %2502 = vmatpush2.msra.mxu0 0.0
          %2503 = vmatprep.subr.mxu0 0.0
          %2504 = vmatpush2.msra.mxu0 0.0
          %2505 = vmatprep.subr.mxu0 0.0
          %2506 = vmatpush2.msra.mxu0 0.0
          %2507 = vmatprep.mubr.f32.mxu0 0.0
          %2508 = vmatmul.mubr.f32.gmra.mxu0 %v2441
          %v2509 = vpop.f32.mrf.mxu0
          %v2510 = vadd.f32 %v2438, %v2509
          %v2511 = vpop.f32.mrf.mxu0
          %2512 = vdwg.mxu0
          %v2513 = vmax.f32 %v2510, 0.0
          %v2514 = vld [vmem:[%s43] sm:$0xff]
          %v2515 = vld [vmem:[%s43 + $0x8] sm:$0xff]
          %v2516 = vld [vmem:[%s43 + $0x10] sm:$0xff]
          %v2517 = vld [vmem:[%s43 + $0x18] sm:$0xff]
          %v2518 = vld [vmem:[%s45] sm:$0x1]
          %v2520 = vlaneseq
          %v2521 = vshrl.u32 %v2520, 7
          %v2522 = vsub.s32 0, %v2521
          %v2523 = vrot.slane %v2518, %v2522
          %v2526 = vsel %vm1801, %v2513, 0
          %2528 = vmatprep.subr.mxu0 0.0
          %2529 = vmatpush1.msra.mxu0 0.0
          %2530 = vmatprep.subr.mxu0 0.0
          %2531 = vmatpush1.msra.mxu0 0.0
          %2532 = vmatprep.subr.mxu0 0.0
          %2533 = vmatpush1.msra.mxu0 0.0
          %2534 = vmatprep.subr.mxu0 0.0
          %2535 = vmatpush1.msra.mxu0 0.0
          %2536 = vmatprep.subr.mxu0 0.0
          %2537 = vmatpush1.msra.mxu0 0.0
          %2538 = vmatprep.subr.mxu0 0.0
          %2539 = vmatpush1.msra.mxu0 0.0
          %2540 = vmatprep.subr.mxu0 0.0
          %2541 = vmatpush1.msra.mxu0 0.0
          %2542 = vmatprep.subr.mxu0 0.0
          %2543 = vmatpush1.msra.mxu0 0.0
          %2544 = vmatprep.subr.mxu0 0.0
          %2545 = vmatpush1.msra.mxu0 0.0
          %2546 = vmatprep.subr.mxu0 0.0
          %2547 = vmatpush1.msra.mxu0 0.0
          %2548 = vmatprep.subr.mxu0 0.0
          %2549 = vmatpush1.msra.mxu0 0.0
          %2550 = vmatprep.subr.mxu0 0.0
          %2551 = vmatpush1.msra.mxu0 0.0
          %2552 = vmatprep.subr.mxu0 0.0
          %2553 = vmatpush1.msra.mxu0 %v2517
          %2554 = vmatprep.subr.mxu0 0.0
          %2555 = vmatpush1.msra.mxu0 %v2516
          %2556 = vmatprep.subr.mxu0 0.0
          %2557 = vmatpush1.msra.mxu0 %v2515
          %2558 = vmatprep.subr.mxu0 0.0
          %2559 = vmatpush1.msra.mxu0 %v2514
          %2560 = vmatprep.subr.mxu0 0.0
          %2561 = vmatpush2.msra.mxu0 0.0
          %2562 = vmatprep.subr.mxu0 0.0
          %2563 = vmatpush2.msra.mxu0 0.0
          %2564 = vmatprep.subr.mxu0 0.0
          %2565 = vmatpush2.msra.mxu0 0.0
          %2566 = vmatprep.subr.mxu0 0.0
          %2567 = vmatpush2.msra.mxu0 0.0
          %2568 = vmatprep.subr.mxu0 0.0
          %2569 = vmatpush2.msra.mxu0 0.0
          %2570 = vmatprep.subr.mxu0 0.0
          %2571 = vmatpush2.msra.mxu0 0.0
          %2572 = vmatprep.subr.mxu0 0.0
          %2573 = vmatpush2.msra.mxu0 0.0
          %2574 = vmatprep.subr.mxu0 0.0
          %2575 = vmatpush2.msra.mxu0 0.0
          %2576 = vmatprep.subr.mxu0 0.0
          %2577 = vmatpush2.msra.mxu0 0.0
          %2578 = vmatprep.subr.mxu0 0.0
          %2579 = vmatpush2.msra.mxu0 0.0
          %2580 = vmatprep.subr.mxu0 0.0
          %2581 = vmatpush2.msra.mxu0 0.0
          %2582 = vmatprep.subr.mxu0 0.0
          %2583 = vmatpush2.msra.mxu0 0.0
          %2584 = vmatprep.subr.mxu0 0.0
          %2585 = vmatpush2.msra.mxu0 0.0
          %2586 = vmatprep.subr.mxu0 0.0
          %2587 = vmatpush2.msra.mxu0 0.0
          %2588 = vmatprep.subr.mxu0 0.0
          %2589 = vmatpush2.msra.mxu0 0.0
          %2590 = vmatprep.subr.mxu0 0.0
          %2591 = vmatpush2.msra.mxu0 0.0
          %2592 = vmatprep.mubr.f32.mxu0 0.0
          %2593 = vmatmul.mubr.f32.gmra.mxu0 %v2526
          %v2594 = vpop.f32.mrf.mxu0
          %v2595 = vadd.f32 %v2523, %v2594
          %v2596 = vpop.f32.mrf.mxu0
          %2597 = vdwg.mxu0
          %v2598 = vmax.f32 %v2595, 0.0
          %v2599 = vand.u32 2147483647, %v2595
          %v2600 = vsub.f32 0.0, %v2599
          %v2601 = vmul.f32 %v2600, 1.442695
          %v2602 = vpow.pop %v2601
          %v2603 = vadd.f32 %v2602, 1.0
          %v2604 = vlog2.pop %v2603
          %v2605 = vmul.f32 %v2604, 0.6931472
          %v2606 = vmul.f32 -0.5, %v2602
          %v2607 = vadd.f32 %v2606, 1.0
          %v2608 = vmul.f32 %v2607, %v2602
          %v2609 = vand.u32 2147483647, %v2602
          %vm2610 = vcmp.lt.f32.partialorder %v2609, 0.0004427343
          %v2611 = vsel %vm2610, %v2608, %v2605
          %v2612 = vadd.f32 %v2598, %v2611
          %v2613 = vld [vmem:[%s47] sm:$0xff]
          %v2614 = vld [vmem:[%s47 + $0x8] sm:$0xff]
          %v2615 = vld [vmem:[%s47 + $0x10] sm:$0xff]
          %v2616 = vld [vmem:[%s47 + $0x18] sm:$0xff]
          %2618 = vrot.lane.b32.xlu0 %v1954, 64
          %v2619 = vpop.permute.xlu0 %2618
          %2621 = vmatprep.subr.mxu0 0.0
          %2622 = vmatpush1.msra.mxu0 0.0
          %2623 = vmatprep.subr.mxu0 0.0
          %2624 = vmatpush1.msra.mxu0 0.0
          %2625 = vmatprep.subr.mxu0 0.0
          %2626 = vmatpush1.msra.mxu0 0.0
          %2627 = vmatprep.subr.mxu0 0.0
          %2628 = vmatpush1.msra.mxu0 0.0
          %2629 = vmatprep.subr.mxu0 0.0
          %2630 = vmatpush1.msra.mxu0 0.0
          %2631 = vmatprep.subr.mxu0 0.0
          %2632 = vmatpush1.msra.mxu0 0.0
          %2633 = vmatprep.subr.mxu0 0.0
          %2634 = vmatpush1.msra.mxu0 0.0
          %2635 = vmatprep.subr.mxu0 0.0
          %2636 = vmatpush1.msra.mxu0 0.0
          %2637 = vmatprep.subr.mxu0 0.0
          %2638 = vmatpush1.msra.mxu0 0.0
          %2639 = vmatprep.subr.mxu0 0.0
          %2640 = vmatpush1.msra.mxu0 0.0
          %2641 = vmatprep.subr.mxu0 0.0
          %2642 = vmatpush1.msra.mxu0 0.0
          %2643 = vmatprep.subr.mxu0 0.0
          %2644 = vmatpush1.msra.mxu0 0.0
          %2645 = vmatprep.subr.mxu0 0.0
          %2646 = vmatpush1.msra.mxu0 %v2616
          %2647 = vmatprep.subr.mxu0 0.0
          %2648 = vmatpush1.msra.mxu0 %v2615
          %2649 = vmatprep.subr.mxu0 0.0
          %2650 = vmatpush1.msra.mxu0 %v2614
          %2651 = vmatprep.subr.mxu0 0.0
          %2652 = vmatpush1.msra.mxu0 %v2613
          %2653 = vmatprep.subr.mxu0 0.0
          %2654 = vmatpush2.msra.mxu0 0.0
          %2655 = vmatprep.subr.mxu0 0.0
          %2656 = vmatpush2.msra.mxu0 0.0
          %2657 = vmatprep.subr.mxu0 0.0
          %2658 = vmatpush2.msra.mxu0 0.0
          %2659 = vmatprep.subr.mxu0 0.0
          %2660 = vmatpush2.msra.mxu0 0.0
          %2661 = vmatprep.subr.mxu0 0.0
          %2662 = vmatpush2.msra.mxu0 0.0
          %2663 = vmatprep.subr.mxu0 0.0
          %2664 = vmatpush2.msra.mxu0 0.0
          %2665 = vmatprep.subr.mxu0 0.0
          %2666 = vmatpush2.msra.mxu0 0.0
          %2667 = vmatprep.subr.mxu0 0.0
          %2668 = vmatpush2.msra.mxu0 0.0
          %2669 = vmatprep.subr.mxu0 0.0
          %2670 = vmatpush2.msra.mxu0 0.0
          %2671 = vmatprep.subr.mxu0 0.0
          %2672 = vmatpush2.msra.mxu0 0.0
          %2673 = vmatprep.subr.mxu0 0.0
          %2674 = vmatpush2.msra.mxu0 0.0
          %2675 = vmatprep.subr.mxu0 0.0
          %2676 = vmatpush2.msra.mxu0 0.0
          %2677 = vmatprep.subr.mxu0 0.0
          %2678 = vmatpush2.msra.mxu0 0.0
          %2679 = vmatprep.subr.mxu0 0.0
          %2680 = vmatpush2.msra.mxu0 0.0
          %2681 = vmatprep.subr.mxu0 0.0
          %2682 = vmatpush2.msra.mxu0 0.0
          %2683 = vmatprep.subr.mxu0 0.0
          %2684 = vmatpush2.msra.mxu0 0.0
          %2685 = vmatprep.mubr.f32.mxu0 0.0
          %2686 = vmatmul.mubr.f32.gmra.mxu0 %v2441
          %v2687 = vpop.f32.mrf.mxu0
          %v2688 = vadd.f32 %v2619, %v2687
          %v2689 = vpop.f32.mrf.mxu0
          %2690 = vdwg.mxu0
          %v2691 = vld [vmem:[%s49] sm:$0x1]
          %v2693 = vlaneseq
          %v2694 = vshrl.u32 %v2693, 7
          %v2695 = vsub.s32 0, %v2694
          %v2696 = vrot.slane %v2691, %v2695
          %v2698 = vadd.f32 %v2688, %v2696
          %v2699 = vmax.f32 %v2698, 0.0
          %v2700 = vld [vmem:[%s51] sm:$0xff]
          %v2701 = vld [vmem:[%s51 + $0x8] sm:$0xff]
          %v2702 = vld [vmem:[%s51 + $0x10] sm:$0xff]
          %v2703 = vld [vmem:[%s51 + $0x18] sm:$0xff]
          %v2704 = vld [vmem:[#allocation20] sm:$0x1]
          %v2706 = vlaneseq
          %v2707 = vshrl.u32 %v2706, 7
          %v2708 = vsub.s32 0, %v2707
          %v2709 = vrot.slane %v2704, %v2708
          %v2712 = vsel %vm1801, %v2699, 0
          %2714 = vmatprep.subr.mxu0 0.0
          %2715 = vmatpush1.msra.mxu0 0.0
          %2716 = vmatprep.subr.mxu0 0.0
          %2717 = vmatpush1.msra.mxu0 0.0
          %2718 = vmatprep.subr.mxu0 0.0
          %2719 = vmatpush1.msra.mxu0 0.0
          %2720 = vmatprep.subr.mxu0 0.0
          %2721 = vmatpush1.msra.mxu0 0.0
          %2722 = vmatprep.subr.mxu0 0.0
          %2723 = vmatpush1.msra.mxu0 0.0
          %2724 = vmatprep.subr.mxu0 0.0
          %2725 = vmatpush1.msra.mxu0 0.0
          %2726 = vmatprep.subr.mxu0 0.0
          %2727 = vmatpush1.msra.mxu0 0.0
          %2728 = vmatprep.subr.mxu0 0.0
          %2729 = vmatpush1.msra.mxu0 0.0
          %2730 = vmatprep.subr.mxu0 0.0
          %2731 = vmatpush1.msra.mxu0 0.0
          %2732 = vmatprep.subr.mxu0 0.0
          %2733 = vmatpush1.msra.mxu0 0.0
          %2734 = vmatprep.subr.mxu0 0.0
          %2735 = vmatpush1.msra.mxu0 0.0
          %2736 = vmatprep.subr.mxu0 0.0
          %2737 = vmatpush1.msra.mxu0 0.0
          %2738 = vmatprep.subr.mxu0 0.0
          %2739 = vmatpush1.msra.mxu0 %v2703
          %2740 = vmatprep.subr.mxu0 0.0
          %2741 = vmatpush1.msra.mxu0 %v2702
          %2742 = vmatprep.subr.mxu0 0.0
          %2743 = vmatpush1.msra.mxu0 %v2701
          %2744 = vmatprep.subr.mxu0 0.0
          %2745 = vmatpush1.msra.mxu0 %v2700
          %2746 = vmatprep.subr.mxu0 0.0
          %2747 = vmatpush2.msra.mxu0 0.0
          %2748 = vmatprep.subr.mxu0 0.0
          %2749 = vmatpush2.msra.mxu0 0.0
          %2750 = vmatprep.subr.mxu0 0.0
          %2751 = vmatpush2.msra.mxu0 0.0
          %2752 = vmatprep.subr.mxu0 0.0
          %2753 = vmatpush2.msra.mxu0 0.0
          %2754 = vmatprep.subr.mxu0 0.0
          %2755 = vmatpush2.msra.mxu0 0.0
          %2756 = vmatprep.subr.mxu0 0.0
          %2757 = vmatpush2.msra.mxu0 0.0
          %2758 = vmatprep.subr.mxu0 0.0
          %2759 = vmatpush2.msra.mxu0 0.0
          %2760 = vmatprep.subr.mxu0 0.0
          %2761 = vmatpush2.msra.mxu0 0.0
          %2762 = vmatprep.subr.mxu0 0.0
          %2763 = vmatpush2.msra.mxu0 0.0
          %2764 = vmatprep.subr.mxu0 0.0
          %2765 = vmatpush2.msra.mxu0 0.0
          %2766 = vmatprep.subr.mxu0 0.0
          %2767 = vmatpush2.msra.mxu0 0.0
          %2768 = vmatprep.subr.mxu0 0.0
          %2769 = vmatpush2.msra.mxu0 0.0
          %2770 = vmatprep.subr.mxu0 0.0
          %2771 = vmatpush2.msra.mxu0 0.0
          %2772 = vmatprep.subr.mxu0 0.0
          %2773 = vmatpush2.msra.mxu0 0.0
          %2774 = vmatprep.subr.mxu0 0.0
          %2775 = vmatpush2.msra.mxu0 0.0
          %2776 = vmatprep.subr.mxu0 0.0
          %2777 = vmatpush2.msra.mxu0 0.0
          %2778 = vmatprep.mubr.f32.mxu0 0.0
          %2779 = vmatmul.mubr.f32.gmra.mxu0 %v2712
          %v2780 = vpop.f32.mrf.mxu0
          %v2781 = vadd.f32 %v2709, %v2780
          %v2782 = vpop.f32.mrf.mxu0
          %2783 = vdwg.mxu0
          %v2784 = vmax.f32 %v2781, 0.0
          %v2785 = vld [vmem:[%s55] sm:$0xff]
          %v2786 = vld [vmem:[%s55 + $0x8] sm:$0xff]
          %v2787 = vld [vmem:[%s55 + $0x10] sm:$0xff]
          %v2788 = vld [vmem:[%s55 + $0x18] sm:$0xff]
          %v2789 = vld [vmem:[#allocation21] sm:$0x1]
          %v2791 = vlaneseq
          %v2792 = vshrl.u32 %v2791, 7
          %v2793 = vsub.s32 0, %v2792
          %v2794 = vrot.slane %v2789, %v2793
          %v2797 = vsel %vm1801, %v2784, 0
          %2799 = vmatprep.subr.mxu0 0.0
          %2800 = vmatpush1.msra.mxu0 0.0
          %2801 = vmatprep.subr.mxu0 0.0
          %2802 = vmatpush1.msra.mxu0 0.0
          %2803 = vmatprep.subr.mxu0 0.0
          %2804 = vmatpush1.msra.mxu0 0.0
          %2805 = vmatprep.subr.mxu0 0.0
          %2806 = vmatpush1.msra.mxu0 0.0
          %2807 = vmatprep.subr.mxu0 0.0
          %2808 = vmatpush1.msra.mxu0 0.0
          %2809 = vmatprep.subr.mxu0 0.0
          %2810 = vmatpush1.msra.mxu0 0.0
          %2811 = vmatprep.subr.mxu0 0.0
          %2812 = vmatpush1.msra.mxu0 0.0
          %2813 = vmatprep.subr.mxu0 0.0
          %2814 = vmatpush1.msra.mxu0 0.0
          %2815 = vmatprep.subr.mxu0 0.0
          %2816 = vmatpush1.msra.mxu0 0.0
          %2817 = vmatprep.subr.mxu0 0.0
          %2818 = vmatpush1.msra.mxu0 0.0
          %2819 = vmatprep.subr.mxu0 0.0
          %2820 = vmatpush1.msra.mxu0 0.0
          %2821 = vmatprep.subr.mxu0 0.0
          %2822 = vmatpush1.msra.mxu0 0.0
          %2823 = vmatprep.subr.mxu0 0.0
          %2824 = vmatpush1.msra.mxu0 %v2788
          %2825 = vmatprep.subr.mxu0 0.0
          %2826 = vmatpush1.msra.mxu0 %v2787
          %2827 = vmatprep.subr.mxu0 0.0
          %2828 = vmatpush1.msra.mxu0 %v2786
          %2829 = vmatprep.subr.mxu0 0.0
          %2830 = vmatpush1.msra.mxu0 %v2785
          %2831 = vmatprep.subr.mxu0 0.0
          %2832 = vmatpush2.msra.mxu0 0.0
          %2833 = vmatprep.subr.mxu0 0.0
          %2834 = vmatpush2.msra.mxu0 0.0
          %2835 = vmatprep.subr.mxu0 0.0
          %2836 = vmatpush2.msra.mxu0 0.0
          %2837 = vmatprep.subr.mxu0 0.0
          %2838 = vmatpush2.msra.mxu0 0.0
          %2839 = vmatprep.subr.mxu0 0.0
          %2840 = vmatpush2.msra.mxu0 0.0
          %2841 = vmatprep.subr.mxu0 0.0
          %2842 = vmatpush2.msra.mxu0 0.0
          %2843 = vmatprep.subr.mxu0 0.0
          %2844 = vmatpush2.msra.mxu0 0.0
          %2845 = vmatprep.subr.mxu0 0.0
          %2846 = vmatpush2.msra.mxu0 0.0
          %2847 = vmatprep.subr.mxu0 0.0
          %2848 = vmatpush2.msra.mxu0 0.0
          %2849 = vmatprep.subr.mxu0 0.0
          %2850 = vmatpush2.msra.mxu0 0.0
          %2851 = vmatprep.subr.mxu0 0.0
          %2852 = vmatpush2.msra.mxu0 0.0
          %2853 = vmatprep.subr.mxu0 0.0
          %2854 = vmatpush2.msra.mxu0 0.0
          %2855 = vmatprep.subr.mxu0 0.0
          %2856 = vmatpush2.msra.mxu0 0.0
          %2857 = vmatprep.subr.mxu0 0.0
          %2858 = vmatpush2.msra.mxu0 0.0
          %2859 = vmatprep.subr.mxu0 0.0
          %2860 = vmatpush2.msra.mxu0 0.0
          %2861 = vmatprep.subr.mxu0 0.0
          %2862 = vmatpush2.msra.mxu0 0.0
          %2863 = vmatprep.mubr.f32.mxu0 0.0
          %2864 = vmatmul.mubr.f32.gmra.mxu0 %v2797
          %v2865 = vpop.f32.mrf.mxu0
          %v2866 = vadd.f32 %v2794, %v2865
          %v2867 = vpop.f32.mrf.mxu0
          %2868 = vdwg.mxu0
          %v2869 = vmax.f32 %v2866, 0.0
          %v2870 = vand.u32 2147483647, %v2866
          %v2871 = vsub.f32 0.0, %v2870
          %v2872 = vmul.f32 %v2871, 1.442695
          %v2873 = vpow.pop %v2872
          %v2874 = vadd.f32 %v2873, 1.0
          %v2875 = vlog2.pop %v2874
          %v2876 = vmul.f32 %v2875, 0.6931472
          %v2877 = vmul.f32 -0.5, %v2873
          %v2878 = vadd.f32 %v2877, 1.0
          %v2879 = vmul.f32 %v2878, %v2873
          %v2880 = vand.u32 2147483647, %v2873
          %vm2881 = vcmp.lt.f32.partialorder %v2880, 0.0004427343
          %v2882 = vsel %vm2881, %v2879, %v2876
          %v2883 = vadd.f32 %v2869, %v2882
          %2885 = vrot.lane.b32.xlu0 %v2883, 120
          %v2886 = vpop.permute.xlu0 %2885
          %v2888 = vmul.f32 %v1705, %v2886
          %v2889 = vadd.f32 %v2888, %v2866
          %v2890 = vld [vmem:[#allocation23] sm:$0xff]
          %v2891 = vld [vmem:[#allocation24] sm:$0x1]
          %v2893 = vlaneseq
          %v2894 = vshrl.u32 %v2893, 7
          %v2895 = vsub.s32 0, %v2894
          %v2896 = vrot.slane %v2891, %v2895
          %v2899 = vsel %vm2354, %v2889, 0
          %2901 = vmatprep.subr.mxu0 0.0
          %2902 = vmatpush1.msra.mxu0 0.0
          %2903 = vmatprep.subr.mxu0 0.0
          %2904 = vmatpush1.msra.mxu0 0.0
          %2905 = vmatprep.subr.mxu0 0.0
          %2906 = vmatpush1.msra.mxu0 0.0
          %2907 = vmatprep.subr.mxu0 0.0
          %2908 = vmatpush1.msra.mxu0 0.0
          %2909 = vmatprep.subr.mxu0 0.0
          %2910 = vmatpush1.msra.mxu0 0.0
          %2911 = vmatprep.subr.mxu0 0.0
          %2912 = vmatpush1.msra.mxu0 0.0
          %2913 = vmatprep.subr.mxu0 0.0
          %2914 = vmatpush1.msra.mxu0 0.0
          %2915 = vmatprep.subr.mxu0 0.0
          %2916 = vmatpush1.msra.mxu0 0.0
          %2917 = vmatprep.subr.mxu0 0.0
          %2918 = vmatpush1.msra.mxu0 0.0
          %2919 = vmatprep.subr.mxu0 0.0
          %2920 = vmatpush1.msra.mxu0 0.0
          %2921 = vmatprep.subr.mxu0 0.0
          %2922 = vmatpush1.msra.mxu0 0.0
          %2923 = vmatprep.subr.mxu0 0.0
          %2924 = vmatpush1.msra.mxu0 0.0
          %2925 = vmatprep.subr.mxu0 0.0
          %2926 = vmatpush1.msra.mxu0 0.0
          %2927 = vmatprep.subr.mxu0 0.0
          %2928 = vmatpush1.msra.mxu0 0.0
          %2929 = vmatprep.subr.mxu0 0.0
          %2930 = vmatpush1.msra.mxu0 0.0
          %2931 = vmatprep.subr.mxu0 0.0
          %2932 = vmatpush1.msra.mxu0 %v2890
          %2933 = vmatprep.subr.mxu0 0.0
          %2934 = vmatpush2.msra.mxu0 0.0
          %2935 = vmatprep.subr.mxu0 0.0
          %2936 = vmatpush2.msra.mxu0 0.0
          %2937 = vmatprep.subr.mxu0 0.0
          %2938 = vmatpush2.msra.mxu0 0.0
          %2939 = vmatprep.subr.mxu0 0.0
          %2940 = vmatpush2.msra.mxu0 0.0
          %2941 = vmatprep.subr.mxu0 0.0
          %2942 = vmatpush2.msra.mxu0 0.0
          %2943 = vmatprep.subr.mxu0 0.0
          %2944 = vmatpush2.msra.mxu0 0.0
          %2945 = vmatprep.subr.mxu0 0.0
          %2946 = vmatpush2.msra.mxu0 0.0
          %2947 = vmatprep.subr.mxu0 0.0
          %2948 = vmatpush2.msra.mxu0 0.0
          %2949 = vmatprep.subr.mxu0 0.0
          %2950 = vmatpush2.msra.mxu0 0.0
          %2951 = vmatprep.subr.mxu0 0.0
          %2952 = vmatpush2.msra.mxu0 0.0
          %2953 = vmatprep.subr.mxu0 0.0
          %2954 = vmatpush2.msra.mxu0 0.0
          %2955 = vmatprep.subr.mxu0 0.0
          %2956 = vmatpush2.msra.mxu0 0.0
          %2957 = vmatprep.subr.mxu0 0.0
          %2958 = vmatpush2.msra.mxu0 0.0
          %2959 = vmatprep.subr.mxu0 0.0
          %2960 = vmatpush2.msra.mxu0 0.0
          %2961 = vmatprep.subr.mxu0 0.0
          %2962 = vmatpush2.msra.mxu0 0.0
          %2963 = vmatprep.subr.mxu0 0.0
          %2964 = vmatpush2.msra.mxu0 0.0
          %2965 = vmatprep.mubr.f32.mxu0 0.0
          %2966 = vmatmul.mubr.f32.gmra.mxu0 %v2899
          %v2967 = vpop.f32.mrf.mxu0
          %v2968 = vadd.f32 %v2896, %v2967
          %v2969 = vpop.f32.mrf.mxu0
          %2970 = vdwg.mxu0
          %v2971 = vmax.f32 %v2968, 0.0
          %v2972 = vld [vmem:[%s63] sm:$0xff]
          %v2973 = vld [vmem:[%s63 + $0x8] sm:$0xff]
          %v2974 = vld [vmem:[%s63 + $0x10] sm:$0xff]
          %v2975 = vld [vmem:[%s63 + $0x18] sm:$0xff]
          %2976 = vrot.lane.b32.xlu0 %v1954, 32
          %v2977 = vpop.permute.xlu0 %2976
          %v2980 = vsel %vm1801, %v2971, 0
          %2982 = vmatprep.subr.mxu0 0.0
          %2983 = vmatpush1.msra.mxu0 0.0
          %2984 = vmatprep.subr.mxu0 0.0
          %2985 = vmatpush1.msra.mxu0 0.0
          %2986 = vmatprep.subr.mxu0 0.0
          %2987 = vmatpush1.msra.mxu0 0.0
          %2988 = vmatprep.subr.mxu0 0.0
          %2989 = vmatpush1.msra.mxu0 0.0
          %2990 = vmatprep.subr.mxu0 0.0
          %2991 = vmatpush1.msra.mxu0 0.0
          %2992 = vmatprep.subr.mxu0 0.0
          %2993 = vmatpush1.msra.mxu0 0.0
          %2994 = vmatprep.subr.mxu0 0.0
          %2995 = vmatpush1.msra.mxu0 0.0
          %2996 = vmatprep.subr.mxu0 0.0
          %2997 = vmatpush1.msra.mxu0 0.0
          %2998 = vmatprep.subr.mxu0 0.0
          %2999 = vmatpush1.msra.mxu0 0.0
          %3000 = vmatprep.subr.mxu0 0.0
          %3001 = vmatpush1.msra.mxu0 0.0
          %3002 = vmatprep.subr.mxu0 0.0
          %3003 = vmatpush1.msra.mxu0 0.0
          %3004 = vmatprep.subr.mxu0 0.0
          %3005 = vmatpush1.msra.mxu0 0.0
          %3006 = vmatprep.subr.mxu0 0.0
          %3007 = vmatpush1.msra.mxu0 %v2975
          %3008 = vmatprep.subr.mxu0 0.0
          %3009 = vmatpush1.msra.mxu0 %v2974
          %3010 = vmatprep.subr.mxu0 0.0
          %3011 = vmatpush1.msra.mxu0 %v2973
          %3012 = vmatprep.subr.mxu0 0.0
          %3013 = vmatpush1.msra.mxu0 %v2972
          %3014 = vmatprep.subr.mxu0 0.0
          %3015 = vmatpush2.msra.mxu0 0.0
          %3016 = vmatprep.subr.mxu0 0.0
          %3017 = vmatpush2.msra.mxu0 0.0
          %3018 = vmatprep.subr.mxu0 0.0
          %3019 = vmatpush2.msra.mxu0 0.0
          %3020 = vmatprep.subr.mxu0 0.0
          %3021 = vmatpush2.msra.mxu0 0.0
          %3022 = vmatprep.subr.mxu0 0.0
          %3023 = vmatpush2.msra.mxu0 0.0
          %3024 = vmatprep.subr.mxu0 0.0
          %3025 = vmatpush2.msra.mxu0 0.0
          %3026 = vmatprep.subr.mxu0 0.0
          %3027 = vmatpush2.msra.mxu0 0.0
          %3028 = vmatprep.subr.mxu0 0.0
          %3029 = vmatpush2.msra.mxu0 0.0
          %3030 = vmatprep.subr.mxu0 0.0
          %3031 = vmatpush2.msra.mxu0 0.0
          %3032 = vmatprep.subr.mxu0 0.0
          %3033 = vmatpush2.msra.mxu0 0.0
          %3034 = vmatprep.subr.mxu0 0.0
          %3035 = vmatpush2.msra.mxu0 0.0
          %3036 = vmatprep.subr.mxu0 0.0
          %3037 = vmatpush2.msra.mxu0 0.0
          %3038 = vmatprep.subr.mxu0 0.0
          %3039 = vmatpush2.msra.mxu0 0.0
          %3040 = vmatprep.subr.mxu0 0.0
          %3041 = vmatpush2.msra.mxu0 0.0
          %3042 = vmatprep.subr.mxu0 0.0
          %3043 = vmatpush2.msra.mxu0 0.0
          %3044 = vmatprep.subr.mxu0 0.0
          %3045 = vmatpush2.msra.mxu0 0.0
          %3046 = vmatprep.mubr.f32.mxu0 0.0
          %3047 = vmatmul.mubr.f32.gmra.mxu0 %v2980
          %v3048 = vpop.f32.mrf.mxu0
          %v3049 = vadd.f32 %v2977, %v3048
          %v3050 = vpop.f32.mrf.mxu0
          %3051 = vdwg.mxu0
          %v3052 = vld [vmem:[%s65] sm:$0x1]
          %v3054 = vlaneseq
          %v3055 = vshrl.u32 %v3054, 7
          %v3056 = vsub.s32 0, %v3055
          %v3057 = vrot.slane %v3052, %v3056
          %v3059 = vadd.f32 %v3049, %v3057
          %v3060 = vmax.f32 %v3059, 0.0
          %v3061 = vld [vmem:[%s67] sm:$0xff]
          %v3062 = vld [vmem:[%s67 + $0x8] sm:$0xff]
          %v3063 = vld [vmem:[%s67 + $0x10] sm:$0xff]
          %v3064 = vld [vmem:[%s67 + $0x18] sm:$0xff]
          %v3065 = vld [vmem:[%s69] sm:$0x1]
          %v3067 = vlaneseq
          %v3068 = vshrl.u32 %v3067, 7
          %v3069 = vsub.s32 0, %v3068
          %v3070 = vrot.slane %v3065, %v3069
          %v3073 = vsel %vm1801, %v3060, 0
          %3075 = vmatprep.subr.mxu0 0.0
          %3076 = vmatpush1.msra.mxu0 0.0
          %3077 = vmatprep.subr.mxu0 0.0
          %3078 = vmatpush1.msra.mxu0 0.0
          %3079 = vmatprep.subr.mxu0 0.0
          %3080 = vmatpush1.msra.mxu0 0.0
          %3081 = vmatprep.subr.mxu0 0.0
          %3082 = vmatpush1.msra.mxu0 0.0
          %3083 = vmatprep.subr.mxu0 0.0
          %3084 = vmatpush1.msra.mxu0 0.0
          %3085 = vmatprep.subr.mxu0 0.0
          %3086 = vmatpush1.msra.mxu0 0.0
          %3087 = vmatprep.subr.mxu0 0.0
          %3088 = vmatpush1.msra.mxu0 0.0
          %3089 = vmatprep.subr.mxu0 0.0
          %3090 = vmatpush1.msra.mxu0 0.0
          %3091 = vmatprep.subr.mxu0 0.0
          %3092 = vmatpush1.msra.mxu0 0.0
          %3093 = vmatprep.subr.mxu0 0.0
          %3094 = vmatpush1.msra.mxu0 0.0
          %3095 = vmatprep.subr.mxu0 0.0
          %3096 = vmatpush1.msra.mxu0 0.0
          %3097 = vmatprep.subr.mxu0 0.0
          %3098 = vmatpush1.msra.mxu0 0.0
          %3099 = vmatprep.subr.mxu0 0.0
          %3100 = vmatpush1.msra.mxu0 %v3064
          %3101 = vmatprep.subr.mxu0 0.0
          %3102 = vmatpush1.msra.mxu0 %v3063
          %3103 = vmatprep.subr.mxu0 0.0
          %3104 = vmatpush1.msra.mxu0 %v3062
          %3105 = vmatprep.subr.mxu0 0.0
          %3106 = vmatpush1.msra.mxu0 %v3061
          %3107 = vmatprep.subr.mxu0 0.0
          %3108 = vmatpush2.msra.mxu0 0.0
          %3109 = vmatprep.subr.mxu0 0.0
          %3110 = vmatpush2.msra.mxu0 0.0
          %3111 = vmatprep.subr.mxu0 0.0
          %3112 = vmatpush2.msra.mxu0 0.0
          %3113 = vmatprep.subr.mxu0 0.0
          %3114 = vmatpush2.msra.mxu0 0.0
          %3115 = vmatprep.subr.mxu0 0.0
          %3116 = vmatpush2.msra.mxu0 0.0
          %3117 = vmatprep.subr.mxu0 0.0
          %3118 = vmatpush2.msra.mxu0 0.0
          %3119 = vmatprep.subr.mxu0 0.0
          %3120 = vmatpush2.msra.mxu0 0.0
          %3121 = vmatprep.subr.mxu0 0.0
          %3122 = vmatpush2.msra.mxu0 0.0
          %3123 = vmatprep.subr.mxu0 0.0
          %3124 = vmatpush2.msra.mxu0 0.0
          %3125 = vmatprep.subr.mxu0 0.0
          %3126 = vmatpush2.msra.mxu0 0.0
          %3127 = vmatprep.subr.mxu0 0.0
          %3128 = vmatpush2.msra.mxu0 0.0
          %3129 = vmatprep.subr.mxu0 0.0
          %3130 = vmatpush2.msra.mxu0 0.0
          %3131 = vmatprep.subr.mxu0 0.0
          %3132 = vmatpush2.msra.mxu0 0.0
          %3133 = vmatprep.subr.mxu0 0.0
          %3134 = vmatpush2.msra.mxu0 0.0
          %3135 = vmatprep.subr.mxu0 0.0
          %3136 = vmatpush2.msra.mxu0 0.0
          %3137 = vmatprep.subr.mxu0 0.0
          %3138 = vmatpush2.msra.mxu0 0.0
          %3139 = vmatprep.mubr.f32.mxu0 0.0
          %3140 = vmatmul.mubr.f32.gmra.mxu0 %v3073
          %v3141 = vpop.f32.mrf.mxu0
          %v3142 = vadd.f32 %v3070, %v3141
          %v3143 = vpop.f32.mrf.mxu0
          %3144 = vdwg.mxu0
          %v3145 = vmax.f32 %v3142, 0.0
          %v3146 = vld [vmem:[%s71] sm:$0xff]
          %v3147 = vld [vmem:[%s71 + $0x8] sm:$0xff]
          %v3148 = vld [vmem:[%s71 + $0x10] sm:$0xff]
          %v3149 = vld [vmem:[%s71 + $0x18] sm:$0xff]
          %v3151 = vsel %vm1801, %v3145, 0
          %3153 = vmatprep.subr.mxu0 0.0
          %3154 = vmatpush1.msra.mxu0 0.0
          %3155 = vmatprep.subr.mxu0 0.0
          %3156 = vmatpush1.msra.mxu0 0.0
          %3157 = vmatprep.subr.mxu0 0.0
          %3158 = vmatpush1.msra.mxu0 0.0
          %3159 = vmatprep.subr.mxu0 0.0
          %3160 = vmatpush1.msra.mxu0 0.0
          %3161 = vmatprep.subr.mxu0 0.0
          %3162 = vmatpush1.msra.mxu0 0.0
          %3163 = vmatprep.subr.mxu0 0.0
          %3164 = vmatpush1.msra.mxu0 0.0
          %3165 = vmatprep.subr.mxu0 0.0
          %3166 = vmatpush1.msra.mxu0 0.0
          %3167 = vmatprep.subr.mxu0 0.0
          %3168 = vmatpush1.msra.mxu0 0.0
          %3169 = vmatprep.subr.mxu0 0.0
          %3170 = vmatpush1.msra.mxu0 0.0
          %3171 = vmatprep.subr.mxu0 0.0
          %3172 = vmatpush1.msra.mxu0 0.0
          %3173 = vmatprep.subr.mxu0 0.0
          %3174 = vmatpush1.msra.mxu0 0.0
          %3175 = vmatprep.subr.mxu0 0.0
          %3176 = vmatpush1.msra.mxu0 0.0
          %3177 = vmatprep.subr.mxu0 0.0
          %3178 = vmatpush1.msra.mxu0 %v3149
          %3179 = vmatprep.subr.mxu0 0.0
          %3180 = vmatpush1.msra.mxu0 %v3148
          %3181 = vmatprep.subr.mxu0 0.0
          %3182 = vmatpush1.msra.mxu0 %v3147
          %3183 = vmatprep.subr.mxu0 0.0
          %3184 = vmatpush1.msra.mxu0 %v3146
          %3185 = vmatprep.subr.mxu0 0.0
          %3186 = vmatpush2.msra.mxu0 0.0
          %3187 = vmatprep.subr.mxu0 0.0
          %3188 = vmatpush2.msra.mxu0 0.0
          %3189 = vmatprep.subr.mxu0 0.0
          %3190 = vmatpush2.msra.mxu0 0.0
          %3191 = vmatprep.subr.mxu0 0.0
          %3192 = vmatpush2.msra.mxu0 0.0
          %3193 = vmatprep.subr.mxu0 0.0
          %3194 = vmatpush2.msra.mxu0 0.0
          %3195 = vmatprep.subr.mxu0 0.0
          %3196 = vmatpush2.msra.mxu0 0.0
          %3197 = vmatprep.subr.mxu0 0.0
          %3198 = vmatpush2.msra.mxu0 0.0
          %3199 = vmatprep.subr.mxu0 0.0
          %3200 = vmatpush2.msra.mxu0 0.0
          %3201 = vmatprep.subr.mxu0 0.0
          %3202 = vmatpush2.msra.mxu0 0.0
          %3203 = vmatprep.subr.mxu0 0.0
          %3204 = vmatpush2.msra.mxu0 0.0
          %3205 = vmatprep.subr.mxu0 0.0
          %3206 = vmatpush2.msra.mxu0 0.0
          %3207 = vmatprep.subr.mxu0 0.0
          %3208 = vmatpush2.msra.mxu0 0.0
          %3209 = vmatprep.subr.mxu0 0.0
          %3210 = vmatpush2.msra.mxu0 0.0
          %3211 = vmatprep.subr.mxu0 0.0
          %3212 = vmatpush2.msra.mxu0 0.0
          %3213 = vmatprep.subr.mxu0 0.0
          %3214 = vmatpush2.msra.mxu0 0.0
          %3215 = vmatprep.subr.mxu0 0.0
          %3216 = vmatpush2.msra.mxu0 0.0
          %3217 = vmatprep.mubr.f32.mxu0 0.0
          %3218 = vmatmul.mubr.f32.gmra.mxu0 %v3151
          %v3219 = vpop.f32.mrf.mxu0
          %v3220 = vadd.f32 %v1956, %v3219
          %v3221 = vpop.f32.mrf.mxu0
          %3222 = vdwg.mxu0
          %v3223 = vld [vmem:[%s73] sm:$0x1]
          %v3225 = vlaneseq
          %v3226 = vshrl.u32 %v3225, 7
          %v3227 = vsub.s32 0, %v3226
          %v3228 = vrot.slane %v3223, %v3227
          %v3230 = vadd.f32 %v3220, %v3228
          %v3231 = vmax.f32 %v3230, 0.0
          %v3232 = vld [vmem:[%s75] sm:$0xff]
          %v3233 = vld [vmem:[%s75 + $0x8] sm:$0xff]
          %v3234 = vld [vmem:[%s75 + $0x10] sm:$0xff]
          %v3235 = vld [vmem:[%s75 + $0x18] sm:$0xff]
          %v3236 = vld [vmem:[%s77] sm:$0x1]
          %v3238 = vlaneseq
          %v3239 = vshrl.u32 %v3238, 7
          %v3240 = vsub.s32 0, %v3239
          %v3241 = vrot.slane %v3236, %v3240
          %v3244 = vsel %vm1801, %v3231, 0
          %3246 = vmatprep.subr.mxu0 0.0
          %3247 = vmatpush1.msra.mxu0 0.0
          %3248 = vmatprep.subr.mxu0 0.0
          %3249 = vmatpush1.msra.mxu0 0.0
          %3250 = vmatprep.subr.mxu0 0.0
          %3251 = vmatpush1.msra.mxu0 0.0
          %3252 = vmatprep.subr.mxu0 0.0
          %3253 = vmatpush1.msra.mxu0 0.0
          %3254 = vmatprep.subr.mxu0 0.0
          %3255 = vmatpush1.msra.mxu0 0.0
          %3256 = vmatprep.subr.mxu0 0.0
          %3257 = vmatpush1.msra.mxu0 0.0
          %3258 = vmatprep.subr.mxu0 0.0
          %3259 = vmatpush1.msra.mxu0 0.0
          %3260 = vmatprep.subr.mxu0 0.0
          %3261 = vmatpush1.msra.mxu0 0.0
          %3262 = vmatprep.subr.mxu0 0.0
          %3263 = vmatpush1.msra.mxu0 0.0
          %3264 = vmatprep.subr.mxu0 0.0
          %3265 = vmatpush1.msra.mxu0 0.0
          %3266 = vmatprep.subr.mxu0 0.0
          %3267 = vmatpush1.msra.mxu0 0.0
          %3268 = vmatprep.subr.mxu0 0.0
          %3269 = vmatpush1.msra.mxu0 0.0
          %3270 = vmatprep.subr.mxu0 0.0
          %3271 = vmatpush1.msra.mxu0 %v3235
          %3272 = vmatprep.subr.mxu0 0.0
          %3273 = vmatpush1.msra.mxu0 %v3234
          %3274 = vmatprep.subr.mxu0 0.0
          %3275 = vmatpush1.msra.mxu0 %v3233
          %3276 = vmatprep.subr.mxu0 0.0
          %3277 = vmatpush1.msra.mxu0 %v3232
          %3278 = vmatprep.subr.mxu0 0.0
          %3279 = vmatpush2.msra.mxu0 0.0
          %3280 = vmatprep.subr.mxu0 0.0
          %3281 = vmatpush2.msra.mxu0 0.0
          %3282 = vmatprep.subr.mxu0 0.0
          %3283 = vmatpush2.msra.mxu0 0.0
          %3284 = vmatprep.subr.mxu0 0.0
          %3285 = vmatpush2.msra.mxu0 0.0
          %3286 = vmatprep.subr.mxu0 0.0
          %3287 = vmatpush2.msra.mxu0 0.0
          %3288 = vmatprep.subr.mxu0 0.0
          %3289 = vmatpush2.msra.mxu0 0.0
          %3290 = vmatprep.subr.mxu0 0.0
          %3291 = vmatpush2.msra.mxu0 0.0
          %3292 = vmatprep.subr.mxu0 0.0
          %3293 = vmatpush2.msra.mxu0 0.0
          %3294 = vmatprep.subr.mxu0 0.0
          %3295 = vmatpush2.msra.mxu0 0.0
          %3296 = vmatprep.subr.mxu0 0.0
          %3297 = vmatpush2.msra.mxu0 0.0
          %3298 = vmatprep.subr.mxu0 0.0
          %3299 = vmatpush2.msra.mxu0 0.0
          %3300 = vmatprep.subr.mxu0 0.0
          %3301 = vmatpush2.msra.mxu0 0.0
          %3302 = vmatprep.subr.mxu0 0.0
          %3303 = vmatpush2.msra.mxu0 0.0
          %3304 = vmatprep.subr.mxu0 0.0
          %3305 = vmatpush2.msra.mxu0 0.0
          %3306 = vmatprep.subr.mxu0 0.0
          %3307 = vmatpush2.msra.mxu0 0.0
          %3308 = vmatprep.subr.mxu0 0.0
          %3309 = vmatpush2.msra.mxu0 0.0
          %3310 = vmatprep.mubr.f32.mxu0 0.0
          %3311 = vmatmul.mubr.f32.gmra.mxu0 %v3244
          %v3312 = vpop.f32.mrf.mxu0
          %v3313 = vadd.f32 %v3241, %v3312
          %v3314 = vpop.f32.mrf.mxu0
          %3315 = vdwg.mxu0
          %v3316 = vmax.f32 %v3313, 0.0
          %v3317 = vld [vmem:[%s79] sm:$0xff]
          %v3318 = vld [vmem:[%s79 + $0x8] sm:$0xff]
          %v3319 = vld [vmem:[%s79 + $0x10] sm:$0xff]
          %v3320 = vld [vmem:[%s79 + $0x18] sm:$0xff]
          %v3321 = vld [vmem:[%s81] sm:$0x1]
          %v3323 = vlaneseq
          %v3324 = vshrl.u32 %v3323, 7
          %v3325 = vsub.s32 0, %v3324
          %v3326 = vrot.slane %v3321, %v3325
          %v3329 = vsel %vm1801, %v3316, 0
          %3331 = vmatprep.subr.mxu0 0.0
          %3332 = vmatpush1.msra.mxu0 0.0
          %3333 = vmatprep.subr.mxu0 0.0
          %3334 = vmatpush1.msra.mxu0 0.0
          %3335 = vmatprep.subr.mxu0 0.0
          %3336 = vmatpush1.msra.mxu0 0.0
          %3337 = vmatprep.subr.mxu0 0.0
          %3338 = vmatpush1.msra.mxu0 0.0
          %3339 = vmatprep.subr.mxu0 0.0
          %3340 = vmatpush1.msra.mxu0 0.0
          %3341 = vmatprep.subr.mxu0 0.0
          %3342 = vmatpush1.msra.mxu0 0.0
          %3343 = vmatprep.subr.mxu0 0.0
          %3344 = vmatpush1.msra.mxu0 0.0
          %3345 = vmatprep.subr.mxu0 0.0
          %3346 = vmatpush1.msra.mxu0 0.0
          %3347 = vmatprep.subr.mxu0 0.0
          %3348 = vmatpush1.msra.mxu0 0.0
          %3349 = vmatprep.subr.mxu0 0.0
          %3350 = vmatpush1.msra.mxu0 0.0
          %3351 = vmatprep.subr.mxu0 0.0
          %3352 = vmatpush1.msra.mxu0 0.0
          %3353 = vmatprep.subr.mxu0 0.0
          %3354 = vmatpush1.msra.mxu0 0.0
          %3355 = vmatprep.subr.mxu0 0.0
          %3356 = vmatpush1.msra.mxu0 %v3320
          %3357 = vmatprep.subr.mxu0 0.0
          %3358 = vmatpush1.msra.mxu0 %v3319
          %3359 = vmatprep.subr.mxu0 0.0
          %3360 = vmatpush1.msra.mxu0 %v3318
          %3361 = vmatprep.subr.mxu0 0.0
          %3362 = vmatpush1.msra.mxu0 %v3317
          %3363 = vmatprep.subr.mxu0 0.0
          %3364 = vmatpush2.msra.mxu0 0.0
          %3365 = vmatprep.subr.mxu0 0.0
          %3366 = vmatpush2.msra.mxu0 0.0
          %3367 = vmatprep.subr.mxu0 0.0
          %3368 = vmatpush2.msra.mxu0 0.0
          %3369 = vmatprep.subr.mxu0 0.0
          %3370 = vmatpush2.msra.mxu0 0.0
          %3371 = vmatprep.subr.mxu0 0.0
          %3372 = vmatpush2.msra.mxu0 0.0
          %3373 = vmatprep.subr.mxu0 0.0
          %3374 = vmatpush2.msra.mxu0 0.0
          %3375 = vmatprep.subr.mxu0 0.0
          %3376 = vmatpush2.msra.mxu0 0.0
          %3377 = vmatprep.subr.mxu0 0.0
          %3378 = vmatpush2.msra.mxu0 0.0
          %3379 = vmatprep.subr.mxu0 0.0
          %3380 = vmatpush2.msra.mxu0 0.0
          %3381 = vmatprep.subr.mxu0 0.0
          %3382 = vmatpush2.msra.mxu0 0.0
          %3383 = vmatprep.subr.mxu0 0.0
          %3384 = vmatpush2.msra.mxu0 0.0
          %3385 = vmatprep.subr.mxu0 0.0
          %3386 = vmatpush2.msra.mxu0 0.0
          %3387 = vmatprep.subr.mxu0 0.0
          %3388 = vmatpush2.msra.mxu0 0.0
          %3389 = vmatprep.subr.mxu0 0.0
          %3390 = vmatpush2.msra.mxu0 0.0
          %3391 = vmatprep.subr.mxu0 0.0
          %3392 = vmatpush2.msra.mxu0 0.0
          %3393 = vmatprep.subr.mxu0 0.0
          %3394 = vmatpush2.msra.mxu0 0.0
          %3395 = vmatprep.mubr.f32.mxu0 0.0
          %3396 = vmatmul.mubr.f32.gmra.mxu0 %v3329
          %v3397 = vpop.f32.mrf.mxu0
          %v3398 = vadd.f32 %v3326, %v3397
          %v3399 = vpop.f32.mrf.mxu0
          %3400 = vdwg.mxu0
          %v3401 = vld [vmem:[%s83] sm:$0xff]
          %v3402 = vld [vmem:[%s83 + $0x8] sm:$0xff]
          %v3403 = vld [vmem:[%s83 + $0x10] sm:$0xff]
          %v3404 = vld [vmem:[%s83 + $0x18] sm:$0xff]
          %v3405 = vld [vmem:[%s83 + $0x20] sm:$0xff]
          %v3406 = vld [vmem:[%s83 + $0x28] sm:$0xff]
          %v3407 = vld [vmem:[%s83 + $0x30] sm:$0xff]
          %v3408 = vld [vmem:[%s83 + $0x38] sm:$0xff]
          %3409 = vmatprep.subr.mxu0 0.0
          %3410 = vmatpush1.msra.mxu0 0.0
          %3411 = vmatprep.subr.mxu0 0.0
          %3412 = vmatpush1.msra.mxu0 0.0
          %3413 = vmatprep.subr.mxu0 0.0
          %3414 = vmatpush1.msra.mxu0 0.0
          %3415 = vmatprep.subr.mxu0 0.0
          %3416 = vmatpush1.msra.mxu0 0.0
          %3417 = vmatprep.subr.mxu0 0.0
          %3418 = vmatpush1.msra.mxu0 0.0
          %3419 = vmatprep.subr.mxu0 0.0
          %3420 = vmatpush1.msra.mxu0 0.0
          %3421 = vmatprep.subr.mxu0 0.0
          %3422 = vmatpush1.msra.mxu0 0.0
          %3423 = vmatprep.subr.mxu0 0.0
          %3424 = vmatpush1.msra.mxu0 0.0
          %3425 = vmatprep.subr.mxu0 0.0
          %3426 = vmatpush1.msra.mxu0 0.0
          %3427 = vmatprep.subr.mxu0 0.0
          %3428 = vmatpush1.msra.mxu0 0.0
          %3429 = vmatprep.subr.mxu0 0.0
          %3430 = vmatpush1.msra.mxu0 0.0
          %3431 = vmatprep.subr.mxu0 0.0
          %3432 = vmatpush1.msra.mxu0 0.0
          %3433 = vmatprep.subr.mxu0 0.0
          %3434 = vmatpush1.msra.mxu0 %v3408
          %3435 = vmatprep.subr.mxu0 0.0
          %3436 = vmatpush1.msra.mxu0 %v3407
          %3437 = vmatprep.subr.mxu0 0.0
          %3438 = vmatpush1.msra.mxu0 %v3406
          %3439 = vmatprep.subr.mxu0 0.0
          %3440 = vmatpush1.msra.mxu0 %v3405
          %3441 = vmatprep.subr.mxu0 0.0
          %3442 = vmatpush2.msra.mxu0 0.0
          %3443 = vmatprep.subr.mxu0 0.0
          %3444 = vmatpush2.msra.mxu0 0.0
          %3445 = vmatprep.subr.mxu0 0.0
          %3446 = vmatpush2.msra.mxu0 0.0
          %3447 = vmatprep.subr.mxu0 0.0
          %3448 = vmatpush2.msra.mxu0 0.0
          %3449 = vmatprep.subr.mxu0 0.0
          %3450 = vmatpush2.msra.mxu0 0.0
          %3451 = vmatprep.subr.mxu0 0.0
          %3452 = vmatpush2.msra.mxu0 0.0
          %3453 = vmatprep.subr.mxu0 0.0
          %3454 = vmatpush2.msra.mxu0 0.0
          %3455 = vmatprep.subr.mxu0 0.0
          %3456 = vmatpush2.msra.mxu0 0.0
          %3457 = vmatprep.subr.mxu0 0.0
          %3458 = vmatpush2.msra.mxu0 0.0
          %3459 = vmatprep.subr.mxu0 0.0
          %3460 = vmatpush2.msra.mxu0 0.0
          %3461 = vmatprep.subr.mxu0 0.0
          %3462 = vmatpush2.msra.mxu0 0.0
          %3463 = vmatprep.subr.mxu0 0.0
          %3464 = vmatpush2.msra.mxu0 0.0
          %3465 = vmatprep.subr.mxu0 0.0
          %3466 = vmatpush2.msra.mxu0 0.0
          %3467 = vmatprep.subr.mxu0 0.0
          %3468 = vmatpush2.msra.mxu0 0.0
          %3469 = vmatprep.subr.mxu0 0.0
          %3470 = vmatpush2.msra.mxu0 0.0
          %3471 = vmatprep.subr.mxu0 0.0
          %3472 = vmatpush2.msra.mxu0 0.0
          %3473 = vmatprep.mubr.f32.mxu0 0.0
          %3474 = vmatmul.mubr.f32.gmra.mxu0 %v2980
          %v3475 = vpop.f32.mrf.mxu0
          %v3476 = vadd.f32 0.0, %v3475
          %v3477 = vpop.f32.mrf.mxu0
          %3478 = vdwg.mxu0
          %3479 = vmatprep.subr.mxu0 0.0
          %3480 = vmatpush1.msra.mxu0 0.0
          %3481 = vmatprep.subr.mxu0 0.0
          %3482 = vmatpush1.msra.mxu0 0.0
          %3483 = vmatprep.subr.mxu0 0.0
          %3484 = vmatpush1.msra.mxu0 0.0
          %3485 = vmatprep.subr.mxu0 0.0
          %3486 = vmatpush1.msra.mxu0 0.0
          %3487 = vmatprep.subr.mxu0 0.0
          %3488 = vmatpush1.msra.mxu0 0.0
          %3489 = vmatprep.subr.mxu0 0.0
          %3490 = vmatpush1.msra.mxu0 0.0
          %3491 = vmatprep.subr.mxu0 0.0
          %3492 = vmatpush1.msra.mxu0 0.0
          %3493 = vmatprep.subr.mxu0 0.0
          %3494 = vmatpush1.msra.mxu0 0.0
          %3495 = vmatprep.subr.mxu0 0.0
          %3496 = vmatpush1.msra.mxu0 0.0
          %3497 = vmatprep.subr.mxu0 0.0
          %3498 = vmatpush1.msra.mxu0 0.0
          %3499 = vmatprep.subr.mxu0 0.0
          %3500 = vmatpush1.msra.mxu0 0.0
          %3501 = vmatprep.subr.mxu0 0.0
          %3502 = vmatpush1.msra.mxu0 0.0
          %3503 = vmatprep.subr.mxu0 0.0
          %3504 = vmatpush1.msra.mxu0 %v3404
          %3505 = vmatprep.subr.mxu0 0.0
          %3506 = vmatpush1.msra.mxu0 %v3403
          %3507 = vmatprep.subr.mxu0 0.0
          %3508 = vmatpush1.msra.mxu0 %v3402
          %3509 = vmatprep.subr.mxu0 0.0
          %3510 = vmatpush1.msra.mxu0 %v3401
          %3511 = vmatprep.subr.mxu0 0.0
          %3512 = vmatpush2.msra.mxu0 0.0
          %3513 = vmatprep.subr.mxu0 0.0
          %3514 = vmatpush2.msra.mxu0 0.0
          %3515 = vmatprep.subr.mxu0 0.0
          %3516 = vmatpush2.msra.mxu0 0.0
          %3517 = vmatprep.subr.mxu0 0.0
          %3518 = vmatpush2.msra.mxu0 0.0
          %3519 = vmatprep.subr.mxu0 0.0
          %3520 = vmatpush2.msra.mxu0 0.0
          %3521 = vmatprep.subr.mxu0 0.0
          %3522 = vmatpush2.msra.mxu0 0.0
          %3523 = vmatprep.subr.mxu0 0.0
          %3524 = vmatpush2.msra.mxu0 0.0
          %3525 = vmatprep.subr.mxu0 0.0
          %3526 = vmatpush2.msra.mxu0 0.0
          %3527 = vmatprep.subr.mxu0 0.0
          %3528 = vmatpush2.msra.mxu0 0.0
          %3529 = vmatprep.subr.mxu0 0.0
          %3530 = vmatpush2.msra.mxu0 0.0
          %3531 = vmatprep.subr.mxu0 0.0
          %3532 = vmatpush2.msra.mxu0 0.0
          %3533 = vmatprep.subr.mxu0 0.0
          %3534 = vmatpush2.msra.mxu0 0.0
          %3535 = vmatprep.subr.mxu0 0.0
          %3536 = vmatpush2.msra.mxu0 0.0
          %3537 = vmatprep.subr.mxu0 0.0
          %3538 = vmatpush2.msra.mxu0 0.0
          %3539 = vmatprep.subr.mxu0 0.0
          %3540 = vmatpush2.msra.mxu0 0.0
          %3541 = vmatprep.subr.mxu0 0.0
          %3542 = vmatpush2.msra.mxu0 0.0
          %3543 = vmatprep.mubr.f32.mxu0 0.0
          %3544 = vmatmul.mubr.f32.gmra.mxu0 %v1963
          %v3545 = vpop.f32.mrf.mxu0
          %v3546 = vadd.f32 %v3476, %v3545
          %v3547 = vpop.f32.mrf.mxu0
          %3548 = vdwg.mxu0
          %v3549 = vld [vmem:[%s85] sm:$0xff]
          %v3550 = vld [vmem:[%s85 + $0x8] sm:$0xff]
          %v3551 = vld [vmem:[%s85 + $0x10] sm:$0xff]
          %v3552 = vld [vmem:[%s85 + $0x18] sm:$0xff]
          %3553 = vmatprep.subr.mxu0 0.0
          %3554 = vmatpush1.msra.mxu0 0.0
          %3555 = vmatprep.subr.mxu0 0.0
          %3556 = vmatpush1.msra.mxu0 0.0
          %3557 = vmatprep.subr.mxu0 0.0
          %3558 = vmatpush1.msra.mxu0 0.0
          %3559 = vmatprep.subr.mxu0 0.0
          %3560 = vmatpush1.msra.mxu0 0.0
          %3561 = vmatprep.subr.mxu0 0.0
          %3562 = vmatpush1.msra.mxu0 0.0
          %3563 = vmatprep.subr.mxu0 0.0
          %3564 = vmatpush1.msra.mxu0 0.0
          %3565 = vmatprep.subr.mxu0 0.0
          %3566 = vmatpush1.msra.mxu0 0.0
          %3567 = vmatprep.subr.mxu0 0.0
          %3568 = vmatpush1.msra.mxu0 0.0
          %3569 = vmatprep.subr.mxu0 0.0
          %3570 = vmatpush1.msra.mxu0 0.0
          %3571 = vmatprep.subr.mxu0 0.0
          %3572 = vmatpush1.msra.mxu0 0.0
          %3573 = vmatprep.subr.mxu0 0.0
          %3574 = vmatpush1.msra.mxu0 0.0
          %3575 = vmatprep.subr.mxu0 0.0
          %3576 = vmatpush1.msra.mxu0 0.0
          %3577 = vmatprep.subr.mxu0 0.0
          %3578 = vmatpush1.msra.mxu0 %v3552
          %3579 = vmatprep.subr.mxu0 0.0
          %3580 = vmatpush1.msra.mxu0 %v3551
          %3581 = vmatprep.subr.mxu0 0.0
          %3582 = vmatpush1.msra.mxu0 %v3550
          %3583 = vmatprep.subr.mxu0 0.0
          %3584 = vmatpush1.msra.mxu0 %v3549
          %3585 = vmatprep.subr.mxu0 0.0
          %3586 = vmatpush2.msra.mxu0 0.0
          %3587 = vmatprep.subr.mxu0 0.0
          %3588 = vmatpush2.msra.mxu0 0.0
          %3589 = vmatprep.subr.mxu0 0.0
          %3590 = vmatpush2.msra.mxu0 0.0
          %3591 = vmatprep.subr.mxu0 0.0
          %3592 = vmatpush2.msra.mxu0 0.0
          %3593 = vmatprep.subr.mxu0 0.0
          %3594 = vmatpush2.msra.mxu0 0.0
          %3595 = vmatprep.subr.mxu0 0.0
          %3596 = vmatpush2.msra.mxu0 0.0
          %3597 = vmatprep.subr.mxu0 0.0
          %3598 = vmatpush2.msra.mxu0 0.0
          %3599 = vmatprep.subr.mxu0 0.0
          %3600 = vmatpush2.msra.mxu0 0.0
          %3601 = vmatprep.subr.mxu0 0.0
          %3602 = vmatpush2.msra.mxu0 0.0
          %3603 = vmatprep.subr.mxu0 0.0
          %3604 = vmatpush2.msra.mxu0 0.0
          %3605 = vmatprep.subr.mxu0 0.0
          %3606 = vmatpush2.msra.mxu0 0.0
          %3607 = vmatprep.subr.mxu0 0.0
          %3608 = vmatpush2.msra.mxu0 0.0
          %3609 = vmatprep.subr.mxu0 0.0
          %3610 = vmatpush2.msra.mxu0 0.0
          %3611 = vmatprep.subr.mxu0 0.0
          %3612 = vmatpush2.msra.mxu0 0.0
          %3613 = vmatprep.subr.mxu0 0.0
          %3614 = vmatpush2.msra.mxu0 0.0
          %3615 = vmatprep.subr.mxu0 0.0
          %3616 = vmatpush2.msra.mxu0 0.0
          %3617 = vmatprep.mubr.f32.mxu0 0.0
          %3618 = vmatmul.mubr.f32.gmra.mxu0 %v1885
          %v3619 = vpop.f32.mrf.mxu0
          %v3620 = vadd.f32 0.0, %v3619
          %v3621 = vpop.f32.mrf.mxu0
          %3622 = vdwg.mxu0
          %v3623 = vadd.f32 %v3546, %v3620
          %v3624 = vsub.f32 0.0, %v3623
          %v3625 = vmul.f32 %v3624, 1.442695
          %v3626 = vpow.pop %v3625
          %v3627 = vadd.f32 %v3626, 1.0
          %v3628 = vrcp.pop %v3627
          %v3629 = vmul.f32 1.0, %v3628
          %v3630 = vld [vmem:[%s87] sm:$0xff]
          %v3631 = vld [vmem:[%s87 + $0x8] sm:$0xff]
          %v3632 = vld [vmem:[%s87 + $0x10] sm:$0xff]
          %v3633 = vld [vmem:[%s87 + $0x18] sm:$0xff]
          %v3634 = vld [vmem:[%s87 + $0x20] sm:$0xff]
          %v3635 = vld [vmem:[%s87 + $0x28] sm:$0xff]
          %v3636 = vld [vmem:[%s87 + $0x30] sm:$0xff]
          %v3637 = vld [vmem:[%s87 + $0x38] sm:$0xff]
          %3638 = vmatprep.subr.mxu0 0.0
          %3639 = vmatpush1.msra.mxu0 0.0
          %3640 = vmatprep.subr.mxu0 0.0
          %3641 = vmatpush1.msra.mxu0 0.0
          %3642 = vmatprep.subr.mxu0 0.0
          %3643 = vmatpush1.msra.mxu0 0.0
          %3644 = vmatprep.subr.mxu0 0.0
          %3645 = vmatpush1.msra.mxu0 0.0
          %3646 = vmatprep.subr.mxu0 0.0
          %3647 = vmatpush1.msra.mxu0 0.0
          %3648 = vmatprep.subr.mxu0 0.0
          %3649 = vmatpush1.msra.mxu0 0.0
          %3650 = vmatprep.subr.mxu0 0.0
          %3651 = vmatpush1.msra.mxu0 0.0
          %3652 = vmatprep.subr.mxu0 0.0
          %3653 = vmatpush1.msra.mxu0 0.0
          %3654 = vmatprep.subr.mxu0 0.0
          %3655 = vmatpush1.msra.mxu0 0.0
          %3656 = vmatprep.subr.mxu0 0.0
          %3657 = vmatpush1.msra.mxu0 0.0
          %3658 = vmatprep.subr.mxu0 0.0
          %3659 = vmatpush1.msra.mxu0 0.0
          %3660 = vmatprep.subr.mxu0 0.0
          %3661 = vmatpush1.msra.mxu0 0.0
          %3662 = vmatprep.subr.mxu0 0.0
          %3663 = vmatpush1.msra.mxu0 %v3637
          %3664 = vmatprep.subr.mxu0 0.0
          %3665 = vmatpush1.msra.mxu0 %v3636
          %3666 = vmatprep.subr.mxu0 0.0
          %3667 = vmatpush1.msra.mxu0 %v3635
          %3668 = vmatprep.subr.mxu0 0.0
          %3669 = vmatpush1.msra.mxu0 %v3634
          %3670 = vmatprep.subr.mxu0 0.0
          %3671 = vmatpush2.msra.mxu0 0.0
          %3672 = vmatprep.subr.mxu0 0.0
          %3673 = vmatpush2.msra.mxu0 0.0
          %3674 = vmatprep.subr.mxu0 0.0
          %3675 = vmatpush2.msra.mxu0 0.0
          %3676 = vmatprep.subr.mxu0 0.0
          %3677 = vmatpush2.msra.mxu0 0.0
          %3678 = vmatprep.subr.mxu0 0.0
          %3679 = vmatpush2.msra.mxu0 0.0
          %3680 = vmatprep.subr.mxu0 0.0
          %3681 = vmatpush2.msra.mxu0 0.0
          %3682 = vmatprep.subr.mxu0 0.0
          %3683 = vmatpush2.msra.mxu0 0.0
          %3684 = vmatprep.subr.mxu0 0.0
          %3685 = vmatpush2.msra.mxu0 0.0
          %3686 = vmatprep.subr.mxu0 0.0
          %3687 = vmatpush2.msra.mxu0 0.0
          %3688 = vmatprep.subr.mxu0 0.0
          %3689 = vmatpush2.msra.mxu0 0.0
          %3690 = vmatprep.subr.mxu0 0.0
          %3691 = vmatpush2.msra.mxu0 0.0
          %3692 = vmatprep.subr.mxu0 0.0
          %3693 = vmatpush2.msra.mxu0 0.0
          %3694 = vmatprep.subr.mxu0 0.0
          %3695 = vmatpush2.msra.mxu0 0.0
          %3696 = vmatprep.subr.mxu0 0.0
          %3697 = vmatpush2.msra.mxu0 0.0
          %3698 = vmatprep.subr.mxu0 0.0
          %3699 = vmatpush2.msra.mxu0 0.0
          %3700 = vmatprep.subr.mxu0 0.0
          %3701 = vmatpush2.msra.mxu0 0.0
          %3702 = vmatprep.mubr.f32.mxu0 0.0
          %3703 = vmatmul.mubr.f32.gmra.mxu0 %v2980
          %v3704 = vpop.f32.mrf.mxu0
          %v3705 = vadd.f32 0.0, %v3704
          %v3706 = vpop.f32.mrf.mxu0
          %3707 = vdwg.mxu0
          %3708 = vmatprep.subr.mxu0 0.0
          %3709 = vmatpush1.msra.mxu0 0.0
          %3710 = vmatprep.subr.mxu0 0.0
          %3711 = vmatpush1.msra.mxu0 0.0
          %3712 = vmatprep.subr.mxu0 0.0
          %3713 = vmatpush1.msra.mxu0 0.0
          %3714 = vmatprep.subr.mxu0 0.0
          %3715 = vmatpush1.msra.mxu0 0.0
          %3716 = vmatprep.subr.mxu0 0.0
          %3717 = vmatpush1.msra.mxu0 0.0
          %3718 = vmatprep.subr.mxu0 0.0
          %3719 = vmatpush1.msra.mxu0 0.0
          %3720 = vmatprep.subr.mxu0 0.0
          %3721 = vmatpush1.msra.mxu0 0.0
          %3722 = vmatprep.subr.mxu0 0.0
          %3723 = vmatpush1.msra.mxu0 0.0
          %3724 = vmatprep.subr.mxu0 0.0
          %3725 = vmatpush1.msra.mxu0 0.0
          %3726 = vmatprep.subr.mxu0 0.0
          %3727 = vmatpush1.msra.mxu0 0.0
          %3728 = vmatprep.subr.mxu0 0.0
          %3729 = vmatpush1.msra.mxu0 0.0
          %3730 = vmatprep.subr.mxu0 0.0
          %3731 = vmatpush1.msra.mxu0 0.0
          %3732 = vmatprep.subr.mxu0 0.0
          %3733 = vmatpush1.msra.mxu0 %v3633
          %3734 = vmatprep.subr.mxu0 0.0
          %3735 = vmatpush1.msra.mxu0 %v3632
          %3736 = vmatprep.subr.mxu0 0.0
          %3737 = vmatpush1.msra.mxu0 %v3631
          %3738 = vmatprep.subr.mxu0 0.0
          %3739 = vmatpush1.msra.mxu0 %v3630
          %3740 = vmatprep.subr.mxu0 0.0
          %3741 = vmatpush2.msra.mxu0 0.0
          %3742 = vmatprep.subr.mxu0 0.0
          %3743 = vmatpush2.msra.mxu0 0.0
          %3744 = vmatprep.subr.mxu0 0.0
          %3745 = vmatpush2.msra.mxu0 0.0
          %3746 = vmatprep.subr.mxu0 0.0
          %3747 = vmatpush2.msra.mxu0 0.0
          %3748 = vmatprep.subr.mxu0 0.0
          %3749 = vmatpush2.msra.mxu0 0.0
          %3750 = vmatprep.subr.mxu0 0.0
          %3751 = vmatpush2.msra.mxu0 0.0
          %3752 = vmatprep.subr.mxu0 0.0
          %3753 = vmatpush2.msra.mxu0 0.0
          %3754 = vmatprep.subr.mxu0 0.0
          %3755 = vmatpush2.msra.mxu0 0.0
          %3756 = vmatprep.subr.mxu0 0.0
          %3757 = vmatpush2.msra.mxu0 0.0
          %3758 = vmatprep.subr.mxu0 0.0
          %3759 = vmatpush2.msra.mxu0 0.0
          %3760 = vmatprep.subr.mxu0 0.0
          %3761 = vmatpush2.msra.mxu0 0.0
          %3762 = vmatprep.subr.mxu0 0.0
          %3763 = vmatpush2.msra.mxu0 0.0
          %3764 = vmatprep.subr.mxu0 0.0
          %3765 = vmatpush2.msra.mxu0 0.0
          %3766 = vmatprep.subr.mxu0 0.0
          %3767 = vmatpush2.msra.mxu0 0.0
          %3768 = vmatprep.subr.mxu0 0.0
          %3769 = vmatpush2.msra.mxu0 0.0
          %3770 = vmatprep.subr.mxu0 0.0
          %3771 = vmatpush2.msra.mxu0 0.0
          %3772 = vmatprep.mubr.f32.mxu0 0.0
          %3773 = vmatmul.mubr.f32.gmra.mxu0 %v1963
          %v3774 = vpop.f32.mrf.mxu0
          %v3775 = vadd.f32 %v3705, %v3774
          %v3776 = vpop.f32.mrf.mxu0
          %3777 = vdwg.mxu0
          %v3778 = vld [vmem:[%s89] sm:$0xff]
          %v3779 = vld [vmem:[%s89 + $0x8] sm:$0xff]
          %v3780 = vld [vmem:[%s89 + $0x10] sm:$0xff]
          %v3781 = vld [vmem:[%s89 + $0x18] sm:$0xff]
          %3782 = vmatprep.subr.mxu0 0.0
          %3783 = vmatpush1.msra.mxu0 0.0
          %3784 = vmatprep.subr.mxu0 0.0
          %3785 = vmatpush1.msra.mxu0 0.0
          %3786 = vmatprep.subr.mxu0 0.0
          %3787 = vmatpush1.msra.mxu0 0.0
          %3788 = vmatprep.subr.mxu0 0.0
          %3789 = vmatpush1.msra.mxu0 0.0
          %3790 = vmatprep.subr.mxu0 0.0
          %3791 = vmatpush1.msra.mxu0 0.0
          %3792 = vmatprep.subr.mxu0 0.0
          %3793 = vmatpush1.msra.mxu0 0.0
          %3794 = vmatprep.subr.mxu0 0.0
          %3795 = vmatpush1.msra.mxu0 0.0
          %3796 = vmatprep.subr.mxu0 0.0
          %3797 = vmatpush1.msra.mxu0 0.0
          %3798 = vmatprep.subr.mxu0 0.0
          %3799 = vmatpush1.msra.mxu0 0.0
          %3800 = vmatprep.subr.mxu0 0.0
          %3801 = vmatpush1.msra.mxu0 0.0
          %3802 = vmatprep.subr.mxu0 0.0
          %3803 = vmatpush1.msra.mxu0 0.0
          %3804 = vmatprep.subr.mxu0 0.0
          %3805 = vmatpush1.msra.mxu0 0.0
          %3806 = vmatprep.subr.mxu0 0.0
          %3807 = vmatpush1.msra.mxu0 %v3781
          %3808 = vmatprep.subr.mxu0 0.0
          %3809 = vmatpush1.msra.mxu0 %v3780
          %3810 = vmatprep.subr.mxu0 0.0
          %3811 = vmatpush1.msra.mxu0 %v3779
          %3812 = vmatprep.subr.mxu0 0.0
          %3813 = vmatpush1.msra.mxu0 %v3778
          %3814 = vmatprep.subr.mxu0 0.0
          %3815 = vmatpush2.msra.mxu0 0.0
          %3816 = vmatprep.subr.mxu0 0.0
          %3817 = vmatpush2.msra.mxu0 0.0
          %3818 = vmatprep.subr.mxu0 0.0
          %3819 = vmatpush2.msra.mxu0 0.0
          %3820 = vmatprep.subr.mxu0 0.0
          %3821 = vmatpush2.msra.mxu0 0.0
          %3822 = vmatprep.subr.mxu0 0.0
          %3823 = vmatpush2.msra.mxu0 0.0
          %3824 = vmatprep.subr.mxu0 0.0
          %3825 = vmatpush2.msra.mxu0 0.0
          %3826 = vmatprep.subr.mxu0 0.0
          %3827 = vmatpush2.msra.mxu0 0.0
          %3828 = vmatprep.subr.mxu0 0.0
          %3829 = vmatpush2.msra.mxu0 0.0
          %3830 = vmatprep.subr.mxu0 0.0
          %3831 = vmatpush2.msra.mxu0 0.0
          %3832 = vmatprep.subr.mxu0 0.0
          %3833 = vmatpush2.msra.mxu0 0.0
          %3834 = vmatprep.subr.mxu0 0.0
          %3835 = vmatpush2.msra.mxu0 0.0
          %3836 = vmatprep.subr.mxu0 0.0
          %3837 = vmatpush2.msra.mxu0 0.0
          %3838 = vmatprep.subr.mxu0 0.0
          %3839 = vmatpush2.msra.mxu0 0.0
          %3840 = vmatprep.subr.mxu0 0.0
          %3841 = vmatpush2.msra.mxu0 0.0
          %3842 = vmatprep.subr.mxu0 0.0
          %3843 = vmatpush2.msra.mxu0 0.0
          %3844 = vmatprep.subr.mxu0 0.0
          %3845 = vmatpush2.msra.mxu0 0.0
          %3846 = vmatprep.mubr.f32.mxu0 0.0
          %3847 = vmatmul.mubr.f32.gmra.mxu0 %v1885
          %v3848 = vpop.f32.mrf.mxu0
          %v3849 = vadd.f32 0.0, %v3848
          %v3850 = vpop.f32.mrf.mxu0
          %3851 = vdwg.mxu0
          %v3852 = vadd.f32 %v3775, %v3849
          %v3853 = vsub.f32 0.0, %v3852
          %v3854 = vmul.f32 %v3853, 1.442695
          %v3855 = vpow.pop %v3854
          %v3856 = vadd.f32 %v3855, 1.0
          %v3857 = vrcp.pop %v3856
          %v3858 = vmul.f32 1.0, %v3857
          %v3859 = vld [vmem:[%s91] sm:$0xff]
          %v3860 = vld [vmem:[%s91 + $0x8] sm:$0xff]
          %v3861 = vld [vmem:[%s91 + $0x10] sm:$0xff]
          %v3862 = vld [vmem:[%s91 + $0x18] sm:$0xff]
          %v3863 = vld [vmem:[%s91 + $0x20] sm:$0xff]
          %v3864 = vld [vmem:[%s91 + $0x28] sm:$0xff]
          %v3865 = vld [vmem:[%s91 + $0x30] sm:$0xff]
          %v3866 = vld [vmem:[%s91 + $0x38] sm:$0xff]
          %3867 = vmatprep.subr.mxu0 0.0
          %3868 = vmatpush1.msra.mxu0 0.0
          %3869 = vmatprep.subr.mxu0 0.0
          %3870 = vmatpush1.msra.mxu0 0.0
          %3871 = vmatprep.subr.mxu0 0.0
          %3872 = vmatpush1.msra.mxu0 0.0
          %3873 = vmatprep.subr.mxu0 0.0
          %3874 = vmatpush1.msra.mxu0 0.0
          %3875 = vmatprep.subr.mxu0 0.0
          %3876 = vmatpush1.msra.mxu0 0.0
          %3877 = vmatprep.subr.mxu0 0.0
          %3878 = vmatpush1.msra.mxu0 0.0
          %3879 = vmatprep.subr.mxu0 0.0
          %3880 = vmatpush1.msra.mxu0 0.0
          %3881 = vmatprep.subr.mxu0 0.0
          %3882 = vmatpush1.msra.mxu0 0.0
          %3883 = vmatprep.subr.mxu0 0.0
          %3884 = vmatpush1.msra.mxu0 0.0
          %3885 = vmatprep.subr.mxu0 0.0
          %3886 = vmatpush1.msra.mxu0 0.0
          %3887 = vmatprep.subr.mxu0 0.0
          %3888 = vmatpush1.msra.mxu0 0.0
          %3889 = vmatprep.subr.mxu0 0.0
          %3890 = vmatpush1.msra.mxu0 0.0
          %3891 = vmatprep.subr.mxu0 0.0
          %3892 = vmatpush1.msra.mxu0 %v3866
          %3893 = vmatprep.subr.mxu0 0.0
          %3894 = vmatpush1.msra.mxu0 %v3865
          %3895 = vmatprep.subr.mxu0 0.0
          %3896 = vmatpush1.msra.mxu0 %v3864
          %3897 = vmatprep.subr.mxu0 0.0
          %3898 = vmatpush1.msra.mxu0 %v3863
          %3899 = vmatprep.subr.mxu0 0.0
          %3900 = vmatpush2.msra.mxu0 0.0
          %3901 = vmatprep.subr.mxu0 0.0
          %3902 = vmatpush2.msra.mxu0 0.0
          %3903 = vmatprep.subr.mxu0 0.0
          %3904 = vmatpush2.msra.mxu0 0.0
          %3905 = vmatprep.subr.mxu0 0.0
          %3906 = vmatpush2.msra.mxu0 0.0
          %3907 = vmatprep.subr.mxu0 0.0
          %3908 = vmatpush2.msra.mxu0 0.0
          %3909 = vmatprep.subr.mxu0 0.0
          %3910 = vmatpush2.msra.mxu0 0.0
          %3911 = vmatprep.subr.mxu0 0.0
          %3912 = vmatpush2.msra.mxu0 0.0
          %3913 = vmatprep.subr.mxu0 0.0
          %3914 = vmatpush2.msra.mxu0 0.0
          %3915 = vmatprep.subr.mxu0 0.0
          %3916 = vmatpush2.msra.mxu0 0.0
          %3917 = vmatprep.subr.mxu0 0.0
          %3918 = vmatpush2.msra.mxu0 0.0
          %3919 = vmatprep.subr.mxu0 0.0
          %3920 = vmatpush2.msra.mxu0 0.0
          %3921 = vmatprep.subr.mxu0 0.0
          %3922 = vmatpush2.msra.mxu0 0.0
          %3923 = vmatprep.subr.mxu0 0.0
          %3924 = vmatpush2.msra.mxu0 0.0
          %3925 = vmatprep.subr.mxu0 0.0
          %3926 = vmatpush2.msra.mxu0 0.0
          %3927 = vmatprep.subr.mxu0 0.0
          %3928 = vmatpush2.msra.mxu0 0.0
          %3929 = vmatprep.subr.mxu0 0.0
          %3930 = vmatpush2.msra.mxu0 0.0
          %3931 = vmatprep.mubr.f32.mxu0 0.0
          %3932 = vmatmul.mubr.f32.gmra.mxu0 %v2980
          %v3933 = vpop.f32.mrf.mxu0
          %v3934 = vadd.f32 0.0, %v3933
          %v3935 = vpop.f32.mrf.mxu0
          %3936 = vdwg.mxu0
          %3937 = vmatprep.subr.mxu0 0.0
          %3938 = vmatpush1.msra.mxu0 0.0
          %3939 = vmatprep.subr.mxu0 0.0
          %3940 = vmatpush1.msra.mxu0 0.0
          %3941 = vmatprep.subr.mxu0 0.0
          %3942 = vmatpush1.msra.mxu0 0.0
          %3943 = vmatprep.subr.mxu0 0.0
          %3944 = vmatpush1.msra.mxu0 0.0
          %3945 = vmatprep.subr.mxu0 0.0
          %3946 = vmatpush1.msra.mxu0 0.0
          %3947 = vmatprep.subr.mxu0 0.0
          %3948 = vmatpush1.msra.mxu0 0.0
          %3949 = vmatprep.subr.mxu0 0.0
          %3950 = vmatpush1.msra.mxu0 0.0
          %3951 = vmatprep.subr.mxu0 0.0
          %3952 = vmatpush1.msra.mxu0 0.0
          %3953 = vmatprep.subr.mxu0 0.0
          %3954 = vmatpush1.msra.mxu0 0.0
          %3955 = vmatprep.subr.mxu0 0.0
          %3956 = vmatpush1.msra.mxu0 0.0
          %3957 = vmatprep.subr.mxu0 0.0
          %3958 = vmatpush1.msra.mxu0 0.0
          %3959 = vmatprep.subr.mxu0 0.0
          %3960 = vmatpush1.msra.mxu0 0.0
          %3961 = vmatprep.subr.mxu0 0.0
          %3962 = vmatpush1.msra.mxu0 %v3862
          %3963 = vmatprep.subr.mxu0 0.0
          %3964 = vmatpush1.msra.mxu0 %v3861
          %3965 = vmatprep.subr.mxu0 0.0
          %3966 = vmatpush1.msra.mxu0 %v3860
          %3967 = vmatprep.subr.mxu0 0.0
          %3968 = vmatpush1.msra.mxu0 %v3859
          %3969 = vmatprep.subr.mxu0 0.0
          %3970 = vmatpush2.msra.mxu0 0.0
          %3971 = vmatprep.subr.mxu0 0.0
          %3972 = vmatpush2.msra.mxu0 0.0
          %3973 = vmatprep.subr.mxu0 0.0
          %3974 = vmatpush2.msra.mxu0 0.0
          %3975 = vmatprep.subr.mxu0 0.0
          %3976 = vmatpush2.msra.mxu0 0.0
          %3977 = vmatprep.subr.mxu0 0.0
          %3978 = vmatpush2.msra.mxu0 0.0
          %3979 = vmatprep.subr.mxu0 0.0
          %3980 = vmatpush2.msra.mxu0 0.0
          %3981 = vmatprep.subr.mxu0 0.0
          %3982 = vmatpush2.msra.mxu0 0.0
          %3983 = vmatprep.subr.mxu0 0.0
          %3984 = vmatpush2.msra.mxu0 0.0
          %3985 = vmatprep.subr.mxu0 0.0
          %3986 = vmatpush2.msra.mxu0 0.0
          %3987 = vmatprep.subr.mxu0 0.0
          %3988 = vmatpush2.msra.mxu0 0.0
          %3989 = vmatprep.subr.mxu0 0.0
          %3990 = vmatpush2.msra.mxu0 0.0
          %3991 = vmatprep.subr.mxu0 0.0
          %3992 = vmatpush2.msra.mxu0 0.0
          %3993 = vmatprep.subr.mxu0 0.0
          %3994 = vmatpush2.msra.mxu0 0.0
          %3995 = vmatprep.subr.mxu0 0.0
          %3996 = vmatpush2.msra.mxu0 0.0
          %3997 = vmatprep.subr.mxu0 0.0
          %3998 = vmatpush2.msra.mxu0 0.0
          %3999 = vmatprep.subr.mxu0 0.0
          %4000 = vmatpush2.msra.mxu0 0.0
          %4001 = vmatprep.mubr.f32.mxu0 0.0
          %4002 = vmatmul.mubr.f32.gmra.mxu0 %v1963
          %v4003 = vpop.f32.mrf.mxu0
          %v4004 = vadd.f32 %v3934, %v4003
          %v4005 = vpop.f32.mrf.mxu0
          %4006 = vdwg.mxu0
          %v4007 = vld [vmem:[%s93] sm:$0xff]
          %v4008 = vld [vmem:[%s93 + $0x8] sm:$0xff]
          %v4009 = vld [vmem:[%s93 + $0x10] sm:$0xff]
          %v4010 = vld [vmem:[%s93 + $0x18] sm:$0xff]
          %4011 = vmatprep.subr.mxu0 0.0
          %4012 = vmatpush1.msra.mxu0 0.0
          %4013 = vmatprep.subr.mxu0 0.0
          %4014 = vmatpush1.msra.mxu0 0.0
          %4015 = vmatprep.subr.mxu0 0.0
          %4016 = vmatpush1.msra.mxu0 0.0
          %4017 = vmatprep.subr.mxu0 0.0
          %4018 = vmatpush1.msra.mxu0 0.0
          %4019 = vmatprep.subr.mxu0 0.0
          %4020 = vmatpush1.msra.mxu0 0.0
          %4021 = vmatprep.subr.mxu0 0.0
          %4022 = vmatpush1.msra.mxu0 0.0
          %4023 = vmatprep.subr.mxu0 0.0
          %4024 = vmatpush1.msra.mxu0 0.0
          %4025 = vmatprep.subr.mxu0 0.0
          %4026 = vmatpush1.msra.mxu0 0.0
          %4027 = vmatprep.subr.mxu0 0.0
          %4028 = vmatpush1.msra.mxu0 0.0
          %4029 = vmatprep.subr.mxu0 0.0
          %4030 = vmatpush1.msra.mxu0 0.0
          %4031 = vmatprep.subr.mxu0 0.0
          %4032 = vmatpush1.msra.mxu0 0.0
          %4033 = vmatprep.subr.mxu0 0.0
          %4034 = vmatpush1.msra.mxu0 0.0
          %4035 = vmatprep.subr.mxu0 0.0
          %4036 = vmatpush1.msra.mxu0 %v4010
          %4037 = vmatprep.subr.mxu0 0.0
          %4038 = vmatpush1.msra.mxu0 %v4009
          %4039 = vmatprep.subr.mxu0 0.0
          %4040 = vmatpush1.msra.mxu0 %v4008
          %4041 = vmatprep.subr.mxu0 0.0
          %4042 = vmatpush1.msra.mxu0 %v4007
          %4043 = vmatprep.subr.mxu0 0.0
          %4044 = vmatpush2.msra.mxu0 0.0
          %4045 = vmatprep.subr.mxu0 0.0
          %4046 = vmatpush2.msra.mxu0 0.0
          %4047 = vmatprep.subr.mxu0 0.0
          %4048 = vmatpush2.msra.mxu0 0.0
          %4049 = vmatprep.subr.mxu0 0.0
          %4050 = vmatpush2.msra.mxu0 0.0
          %4051 = vmatprep.subr.mxu0 0.0
          %4052 = vmatpush2.msra.mxu0 0.0
          %4053 = vmatprep.subr.mxu0 0.0
          %4054 = vmatpush2.msra.mxu0 0.0
          %4055 = vmatprep.subr.mxu0 0.0
          %4056 = vmatpush2.msra.mxu0 0.0
          %4057 = vmatprep.subr.mxu0 0.0
          %4058 = vmatpush2.msra.mxu0 0.0
          %4059 = vmatprep.subr.mxu0 0.0
          %4060 = vmatpush2.msra.mxu0 0.0
          %4061 = vmatprep.subr.mxu0 0.0
          %4062 = vmatpush2.msra.mxu0 0.0
          %4063 = vmatprep.subr.mxu0 0.0
          %4064 = vmatpush2.msra.mxu0 0.0
          %4065 = vmatprep.subr.mxu0 0.0
          %4066 = vmatpush2.msra.mxu0 0.0
          %4067 = vmatprep.subr.mxu0 0.0
          %4068 = vmatpush2.msra.mxu0 0.0
          %4069 = vmatprep.subr.mxu0 0.0
          %4070 = vmatpush2.msra.mxu0 0.0
          %4071 = vmatprep.subr.mxu0 0.0
          %4072 = vmatpush2.msra.mxu0 0.0
          %4073 = vmatprep.subr.mxu0 0.0
          %4074 = vmatpush2.msra.mxu0 0.0
          %4075 = vmatprep.mubr.f32.mxu0 0.0
          %4076 = vmatmul.mubr.f32.gmra.mxu0 %v1885
          %v4077 = vpop.f32.mrf.mxu0
          %v4078 = vadd.f32 0.0, %v4077
          %v4079 = vpop.f32.mrf.mxu0
          %4080 = vdwg.mxu0
          %v4081 = vmul.f32 %v3629, %v4078
          %v4082 = vadd.f32 %v4004, %v4081
          %v4083 = vtanh.pop %v4082
          %v4084 = vsub.f32 1.0, %v3858
          %v4085 = vmul.f32 %v4084, %v4083
          %v4086 = vmul.f32 %v3858, %v1698
          %v4087 = vadd.f32 %v4085, %v4086
          %v4088 = vmul.f32 %v2883, %v2883
          %v4089 = vmul.f32 %v2612, %v2612
          %v4090 = vrcp.pop %v4088
          %v4091 = vmul.f32 %v4089, %v4090
          %v4092 = vlog2.pop %v4091
          %v4093 = vmul.f32 %v4092, 0.6931472
          %v4094 = vsub.f32 %v2866, %v2595
          %v4095 = vmul.f32 %v4094, %v4094
          %4097 = vrot.lane.b32.xlu0 %v4095, 8
          %v4098 = vpop.permute.xlu0 %4097
          %v4100 = vadd.f32 %v4088, %v4098
          %v4101 = vrcp.pop %v4089
          %v4102 = vmul.f32 %v4100, %v4101
          %v4103 = vadd.f32 %v4093, %v4102
          %v4104 = vsub.f32 %v4103, 1.0
          %4106 = vrot.lane.b32.xlu0 %v4104, 120
          %v4107 = vpop.permute.xlu0 %4106
          %vm4109 = vcmask 58368
          %v4110 = vsel %vm4109, %v4107, 0.0
          %4111 = vadd.xlane.f32.xlu0 %v4110
          %v4112 = vpop.xlane.xlu0 %4111
          %v4113 = vrot.slane %v4112, 4
          %v4114 = vadd.f32 %v4112, %v4113
          %v4115 = vrot.slane %v4114, 2
          %v4116 = vadd.f32 %v4114, %v4115
          %v4117 = vrot.slane %v4116, 1
          %v4118 = vadd.f32 %v4116, %v4117
          %s4119 = vtos %v4118
          %s4120 = smul.f32 %s4119, 0.5
          %v4121 = vmul.f32 %v2227, %v2227
          %v4122 = vmul.f32 %v2339, %v2339
          %v4123 = vrcp.pop %v4121
          %v4124 = vmul.f32 %v4122, %v4123
          %v4125 = vlog2.pop %v4124
          %v4126 = vmul.f32 %v4125, 0.6931472
          %v4127 = vsub.f32 %v2210, %v2322
          %v4128 = vmul.f32 %v4127, %v4127
          %4130 = vrot.lane.b32.xlu0 %v4128, 8
          %v4131 = vpop.permute.xlu0 %4130
          %v4133 = vadd.f32 %v4121, %v4131
          %v4134 = vrcp.pop %v4122
          %v4135 = vmul.f32 %v4133, %v4134
          %v4136 = vadd.f32 %v4126, %v4135
          %v4137 = vsub.f32 %v4136, 1.0
          %4139 = vrot.lane.b32.xlu0 %v4137, 120
          %v4140 = vpop.permute.xlu0 %4139
          %v4142 = vsel %vm4109, %v4140, 0.0
          %4143 = vadd.xlane.f32.xlu0 %v4142
          %v4144 = vpop.xlane.xlu0 %4143
          %v4145 = vrot.slane %v4144, 4
          %v4146 = vadd.f32 %v4144, %v4145
          %v4147 = vrot.slane %v4146, 2
          %v4148 = vadd.f32 %v4146, %v4147
          %v4149 = vrot.slane %v4148, 1
          %v4150 = vadd.f32 %v4148, %v4149
          %s4151 = vtos %v4150
          %s4152 = smul.f32 %s4151, 0.5
          %s4153 = sadd.f32 %s4120, %s4152
          %v4154 = vmax.f32 %v3398, 0.0
          %v4155 = vand.u32 2147483647, %v3398
          %v4156 = vsub.f32 0.0, %v4155
          %v4157 = vmul.f32 %v4156, 1.442695
          %v4158 = vpow.pop %v4157
          %v4159 = vadd.f32 %v4158, 1.0
          %v4160 = vlog2.pop %v4159
          %v4161 = vmul.f32 %v4160, 0.6931472
          %v4162 = vmul.f32 -0.5, %v4158
          %v4163 = vadd.f32 %v4162, 1.0
          %v4164 = vmul.f32 %v4163, %v4158
          %v4165 = vand.u32 2147483647, %v4158
          %vm4166 = vcmp.lt.f32.partialorder %v4165, 0.0004427343
          %v4167 = vsel %vm4166, %v4164, %v4161
          %v4168 = vadd.f32 %v4154, %v4167
          %v4169 = vmul.f32 %v1701, %v3398
          %v4170 = vsub.f32 %v4168, %v4169
          %vm4171 = vcmask 123904
          %v4172 = vsel %vm4171, %v4170, 0.0
          %4173 = vadd.xlane.f32.xlu0 %v4172
          %v4174 = vpop.xlane.xlu0 %4173
          %v4175 = vrot.slane %v4174, 4
          %v4176 = vadd.f32 %v4174, %v4175
          %v4177 = vrot.slane %v4176, 2
          %v4178 = vadd.f32 %v4176, %v4177
          %v4179 = vrot.slane %v4178, 1
          %v4180 = vadd.f32 %v4178, %v4179
          %s4181 = vtos %v4180
          %v4182 = vsub.f32 0.0, %v3398
          %v4183 = vmul.f32 %v4182, 1.442695
          %v4184 = vpow.pop %v4183
          %v4185 = vadd.f32 %v4184, 1.0
          %v4186 = vrcp.pop %v4185
          %v4187 = vmul.f32 1.0, %v4186
          %v4188 = vlaneseq
          %v4189 = vshrl.u32 %v4188, 7
          %v4190 = vstv %s1690
          %vm4191 = vcmp.eq.s32.totalorder %v4189, %v4190
          %v4192 = vsel %vm4191, 1, 0
          %vm4193 = vcmp.eq.s32.totalorder %v4192, 1
          %v4194 = vlaneseq
          %v4195 = vshrl.u32 %v4194, 7
          %v4196 = vsub.s32 1, %v4195
          %v4197 = vrot.slane %v4187, %v4196
          %v4198 = vsel %vm4193, %v4197, 0.0
          %v4199 = vadd.f32 %v1697, %v4198
          %v4200 = vstv %s4153
          %v4201 = vadd.f32 %v1695, %v4200
          %v4202 = vstv %s4181
          %v4203 = vadd.f32 %v1696, %v4202
        $region273: #{tpu_custom_call.1} parent=207 // loop_footer
          %s1694 = sadd.s32 1, %s1690
        $region274: #{tpu_custom_call.1} parent=207 // loop_footer_branch
          %1689 = sbr.rel target = $region270
        $region275: #{tpu_custom_call.1} parent=207 // loop_exit
          _
        %vm4204 = vcmask 254976
        %4205 = vst.msk [vmem:[#allocation2] sm:$0x3] %vm4204, %v1698
        %v4206 = vld [vmem:[#allocation26] sm:$0x1]
        %v4207 = vadd.f32 %v4206, %v1695
        %vm4208 = vcmask 0
        %4209 = vst.msk [vmem:[#allocation26] sm:$0x1] %vm4208, %v4207
        %v4210 = vld [vmem:[#allocation27] sm:$0x1]
        %v4211 = vadd.f32 %v4210, %v1696
        %4212 = vst.msk [vmem:[#allocation27] sm:$0x1] %vm4208, %v4211
        %vm4213 = vcmask 130048
        %4214 = vst.msk [vmem:[%s1660] sm:$0xff] %vm4213, %v1697
        %s4215 = sand.u32 %s121, 1
        %s4216 = scalar_lea.sflag [#allocation5], %s4215
        %s4217 = sand.u32 %s1173, 1
        %s4218 = smul.addr %s4217, 8
        %s4219 = scalar_lea.vmem [#allocation29], %s4218
        // Predicated region
        $region276: #{tpu_custom_call.1} parent=207 // pred_check
          %p4220 = pneg %p1136
        $region277: #{tpu_custom_call.1} parent=207 // pred_check_branch
          %4222 = sbr.rel (%p4220) target = $region279
        $region278: #{tpu_custom_call.1} parent=207 // pred_region
          %s4224 = ssub.s32 16, 16
          %4225 = vsyncadd [#allocation5], %s4224
          %s4227 = sshll.u32 [#allocation26], 4
          %s4228 = int_to_ptr.vmem [resolvable:$true] %s4227
          %4230 = dma.vmem_to_hbm [thread:$0]  %s4228, 16, %s95, [#allocation5]
        $region279: #{tpu_custom_call.1} parent=207 // pred_fallthru
          _
        // Predicated region
        $region280: #{tpu_custom_call.1} parent=207 // pred_check
          %p4231 = pneg %p1157
        $region281: #{tpu_custom_call.1} parent=207 // pred_check_branch
          %4233 = sbr.rel (%p4231) target = $region283
        $region282: #{tpu_custom_call.1} parent=207 // pred_region
          %s4235 = ssub.s32 16, 16
          %4236 = vsyncadd [#allocation28], %s4235
          %s4238 = sshll.u32 [#allocation27], 4
          %s4239 = int_to_ptr.vmem [resolvable:$true] %s4238
          %4241 = dma.vmem_to_hbm [thread:$0]  %s4239, 16, %s97, [#allocation28]
        $region283: #{tpu_custom_call.1} parent=207 // pred_fallthru
          _
        // Predicated region
        $region284: #{tpu_custom_call.1} parent=207 // pred_check
          %p4242 = pneg %p1183
        $region285: #{tpu_custom_call.1} parent=207 // pred_check_branch
          %4244 = sbr.rel (%p4242) target = $region287
        $region286: #{tpu_custom_call.1} parent=207 // pred_region
          %s4246 = ssub.s32 128, 128
          %4247 = vsyncadd %s4216, %s4246
          %s4248 = smul.addr %s121, 128
          %s4249 = scalar_lea.hbm %s99, %s4248
          %s4251 = sshll.u32 %s4219, 4
          %s4252 = int_to_ptr.vmem [resolvable:$true] %s4251
          %4254 = dma.vmem_to_hbm [thread:$0]  %s4252, 128, %s4249, %s4216
        $region287: #{tpu_custom_call.1} parent=207 // pred_fallthru
          _
        // Predicated region
        $region288: #{tpu_custom_call.1} parent=207 // pred_check
          %p4255 = pneg %p1136
        $region289: #{tpu_custom_call.1} parent=207 // pred_check_branch
          %4257 = sbr.rel (%p4255) target = $region291
        $region290: #{tpu_custom_call.1} parent=207 // pred_region
          %4258 = dma.done [#allocation5], 16
        $region291: #{tpu_custom_call.1} parent=207 // pred_fallthru
          _
        // Predicated region
        $region292: #{tpu_custom_call.1} parent=207 // pred_check
          %p4259 = pneg %p1157
        $region293: #{tpu_custom_call.1} parent=207 // pred_check_branch
          %4261 = sbr.rel (%p4259) target = $region295
        $region294: #{tpu_custom_call.1} parent=207 // pred_region
          %4262 = dma.done [#allocation28], 16
        $region295: #{tpu_custom_call.1} parent=207 // pred_fallthru
          _
      $region208: #{tpu_custom_call.1} parent=5 // pred_fallthru
        _
      %p4263 = scmp.le.s32.totalorder 2, %s116
      // Predicated region
      $region296: #{tpu_custom_call.1} parent=5 // pred_check
        %p4264 = pneg %p4263
      $region297: #{tpu_custom_call.1} parent=5 // pred_check_branch
        %4266 = sbr.rel (%p4264) target = $region299
      $region298: #{tpu_custom_call.1} parent=5 // pred_region
        %s4267 = ssub.s32 %s116, 2
        // Predicated region
        $region300: #{tpu_custom_call.1} parent=298 // pred_check
          %p4268 = pneg %p1189
        $region301: #{tpu_custom_call.1} parent=298 // pred_check_branch
          %4270 = sbr.rel (%p4268) target = $region303
        $region302: #{tpu_custom_call.1} parent=298 // pred_region
          %s4271 = sand.u32 %s122, 1
          %s4272 = scalar_lea.sflag [#allocation5], %s4271
          %s4273 = sand.u32 %s1174, 1
          %s4274 = smul.addr %s4273, 8
          %s4275 = scalar_lea.vmem [#allocation29], %s4274
          %4276 = dma.done %s4272, 128
        $region303: #{tpu_custom_call.1} parent=298 // pred_fallthru
          _
      $region299: #{tpu_custom_call.1} parent=5 // pred_fallthru
        _
    $region6: #{tpu_custom_call.1} parent=1 // loop_footer
      %s120 = sadd.s32 1, %s116
    $region7: #{tpu_custom_call.1} parent=1 // loop_footer_branch
      %115 = sbr.rel target = $region3
    $region8: #{tpu_custom_call.1} parent=1 // loop_exit
      _
    %4277 = vsyncpa [#allocation4], 1
    %s4278 = scalar_lea.sflag [#allocation4], 1
    %4279 = vsyncpa %s4278, 1
    %4280 = vsyncpa [#allocation7], 1
    %4281 = vsyncpa [#allocation10], 1
    %4282 = vsyncpa [#allocation13], 1
    %4283 = vsyncpa [#allocation16], 1
    %4284 = vsyncpa [#allocation19], 1
    %4285 = vsyncpa [#allocation22], 1
    %4286 = vsyncpa [#allocation25], 1
    %4287 = vsyncpa [#allocation5], 1
    %s4288 = scalar_lea.sflag [#allocation5], 1
    %4289 = vsyncpa %s4288, 1
    %4290 = vsyncpa [#allocation28], 1

</llo_original>
